<compile_context>
chip_gen: v7x
topology: tpu7x:2x2x1
jax: 0.10.0
libtpu: 0.0.40
codegen_flags: <defaults>
</compile_context>

<pallas_src>
import functools

import numpy as np
import jax
import jax.numpy as jnp
from jax.experimental import pallas as pl
from jax.experimental.pallas import tpu as pltpu

BL = 128   # lane width (batch fast axis)
SUB = 8    # sublane sub-tile (one vreg worth of rows)


# ----------------------------- host-side topology helpers ---------------------------
def get_parent_idx(joint_names, joint_parents):
    """Parent joint index for every joint (root's parent is itself)."""
    return [joint_names.index(p) for p in joint_parents]


def _check_topology(parent_idx):
    """The unrolled chain requires root at 0 and parents before children."""
    assert int(parent_idx[0]) == 0, "Only skeletons with root at joint 0 are supported"
    for j, p in enumerate(parent_idx[1:], start=1):
        assert 0 <= int(p) < j, (
            f"joints must be topologically ordered (joint {j} has parent {p})")


def _cdiv(a, b):
    return -(-a // b)


# ----------------------------------- Pallas kernel ----------------------------------
def _kinematic_chain_kernel(theta_ref, ltrans_ref, *rest_refs,
                            parent_ids, apply_bf, n_sub):
    """Per grid step (one batch tile):

      theta_ref : (N_J*3, BS_T, BL)  VMEM  axis-angle components, batch on (sublane, lane)
      ltrans_ref: (N_J*3,)           SMEM  batch-invariant local translations
                                          (row 3*j+c = root position for j==0, bone vector else)
      bf_ref    : (N_J-1, BS_T, BL)  VMEM  processed bone factor (only when apply_bf)
      l2ws_ref  : (N_J*12, BS_T, BL) VMEM  output: row-major top 3x4 per joint
    """
    if apply_bf:
        bf_ref, l2ws_ref = rest_refs
    else:
        (l2ws_ref,) = rest_refs

    bl = theta_ref.shape[2]

    def process(rows):
        """Process one aligned (SUB, BL) sub-plane of the batch tile."""

        def rod(j):
            """Rodrigues: axis-angle of joint j -> 9 (SUB, BL) planes (1 vreg each)."""
            x = theta_ref[3 * j + 0, rows, :]
            y = theta_ref[3 * j + 1, rows, :]
            z = theta_ref[3 * j + 2, rows, :]
            sq = x * x + y * y + z * z + 1e-12
            inv = jax.lax.rsqrt(sq)          # EUP slot; avoids true f32 divide
            ang = sq * inv                   # == sqrt(sq)
            s = jnp.sin(ang)
            c = jnp.cos(ang)
            oc = 1.0 - c
            kx = x * inv
            ky = y * inv
            kz = z * inv
            return [
                [c + kx * kx * oc,      kx * ky * oc - kz * s, kx * kz * oc + ky * s],
                [ky * kx * oc + kz * s, c + ky * ky * oc,      ky * kz * oc - kx * s],
                [kz * kx * oc - ky * s, kz * ky * oc + kx * s, c + kz * kz * oc],
            ]

        # ---- root joint (joint 0): l2w top-3x4 = [R0 | rest_pose[0]] --------------
        R0 = rod(0)
        for i in range(3):
            for m in range(3):
                l2ws_ref[4 * i + m, rows, :] = R0[i][m]
            l2ws_ref[4 * i + 3, rows, :] = jnp.broadcast_to(ltrans_ref[i], (SUB, bl))

        # ---- children, unrolled over the static skeleton ---------------------------
        for cidx, par in enumerate(parent_ids):
            j = cidx + 1
            Rl = rod(j)

            if apply_bf:
                bsc = bf_ref[cidx, rows, :]                               # (SUB, BL)
                bv = [ltrans_ref[3 * j + c] * bsc for c in range(3)]
            else:
                bv = [ltrans_ref[3 * j + c] for c in range(3)]            # SMEM scalars

            # Parent world transform is read back from the output block (acts as
            # VMEM scratch) -> live ranges stay tiny; results are stored as soon
            # as each entry is computed.
            pbase, base = 12 * par, 12 * j
            for i in range(3):
                p0 = l2ws_ref[pbase + 4 * i + 0, rows, :]
                p1 = l2ws_ref[pbase + 4 * i + 1, rows, :]
                p2 = l2ws_ref[pbase + 4 * i + 2, rows, :]
                tp = l2ws_ref[pbase + 4 * i + 3, rows, :]
                for m in range(3):
                    l2ws_ref[base + 4 * i + m, rows, :] = (
                        p0 * Rl[0][m] + p1 * Rl[1][m] + p2 * Rl[2][m])
                l2ws_ref[base + 4 * i + 3, rows, :] = (
                    p0 * bv[0] + p1 * bv[1] + p2 * bv[2] + tp)

    if n_sub == 1:
        process(pl.ds(0, SUB))
    else:
        def body(r, carry):
            process(pl.ds(pl.multiple_of(r * SUB, SUB), SUB))
            return carry
        jax.lax.fori_loop(0, n_sub, body, 0)


# ------------------------------------- wrapper --------------------------------------
def kinematic_chain_forward(theta, rest_pose, parent_idx, bone_factor=None):
    """Pallas equivalent of KinematicChain.forward (axis-angle path, root_id == 0)."""
    theta = jnp.asarray(theta, jnp.float32)
    B, N_J, C = theta.shape
    assert C == 3, "only axis-angle (B, N_J, 3) theta is supported"
    parent_idx = [int(v) for v in parent_idx]
    _check_topology(parent_idx)
    parent_ids = tuple(parent_idx[1:])
    rest = jnp.asarray(rest_pose, jnp.float32).reshape(N_J, 3)
    apply_bf = bone_factor is not None

    # ---- batch tiling: batch -> (sublane rows, 128 lanes) --------------------------
    rows = _cdiv(B, BL)
    rows8 = _cdiv(rows, SUB) * SUB
    # VMEM budget: keep double-buffered blocks under ~24 MiB on every generation.
    row_bytes = (N_J * 3 + N_J * 12 + (N_J - 1 if apply_bf else 0)) * BL * 4
    vmem_cap_rows = max(SUB, ((24 * 2 ** 20) // (2 * row_bytes)) // SUB * SUB)
    BS_T = min(64, vmem_cap_rows, rows8)
    # v7x megacore: prefer >= 2 grid steps when there is enough real work.
    if rows8 > SUB and _cdiv(rows8, BS_T) < 2:
        BS_T = max(SUB, (rows8 // 2) // SUB * SUB)
    rows_p = _cdiv(rows8, BS_T) * BS_T
    B_pad = rows_p * BL
    grid = (rows_p // BS_T,)
    n_sub = BS_T // SUB

    # theta -> lane-dense slab (N_J*3, rows_p, BL)
    theta_p = jnp.pad(theta, ((0, B_pad - B), (0, 0), (0, 0)))
    theta_k = theta_p.transpose(1, 2, 0).reshape(N_J * 3, rows_p, BL)

    # batch-invariant local translations: root position + bone vectors (child - parent)
    parents_np = np.asarray(parent_idx[1:], dtype=np.int32)
    ltrans = jnp.concatenate([rest[:1], rest[1:] - rest[parents_np]],
                             axis=0).reshape(N_J * 3)                  # SMEM scalars

    inputs = [theta_k, ltrans]
    in_specs = [
        pl.BlockSpec((N_J * 3, BS_T, BL), lambda b: (0, b, 0)),
        pl.BlockSpec(memory_space=pltpu.MemorySpace.SMEM),
    ]

    bf_proc = None
    if apply_bf:
        bone_factor = jnp.asarray(bone_factor, jnp.float32)
        bf_proc = jnp.sqrt(bone_factor * bone_factor + 1e-36)   # returned (module semantics)
        bf_pad = jnp.pad(bf_proc.reshape(B, N_J - 1), ((0, B_pad - B), (0, 0)))
        bf_k = bf_pad.transpose(1, 0).reshape(N_J - 1, rows_p, BL)
        inputs.append(bf_k)
        in_specs.append(pl.BlockSpec((N_J - 1, BS_T, BL), lambda b: (0, b, 0)))

    kernel = functools.partial(_kinematic_chain_kernel, parent_ids=parent_ids,
                               apply_bf=apply_bf, n_sub=n_sub)

    l2ws_k = pl.pallas_call(
        kernel,
        out_shape=jax.ShapeDtypeStruct((N_J * 12, rows_p, BL), jnp.float32),
        grid=grid,
        in_specs=in_specs,
        out_specs=pl.BlockSpec((N_J * 12, BS_T, BL), lambda b: (0, b, 0)),
        compiler_params=pltpu.CompilerParams(
            dimension_semantics=("parallel",),
            vmem_limit_bytes=32 * 2 ** 20),
    )(*inputs)

    # ---- layout plumbing back to module shapes (slice the slab first) --------------
    slab = l2ws_k.reshape(N_J, 3, 4, B_pad)                       # top 3x4 per joint
    kp3d = slab[:, :, 3, :B].transpose(2, 0, 1)                   # (B, N_J, 3)
    orient = slab[:, :, :3, :B].transpose(3, 0, 1, 2)             # (B, N_J, 3, 3)
    bottom = jnp.broadcast_to(
        jnp.array([0.0, 0.0, 0.0, 1.0], jnp.float32).reshape(1, 1, 4, 1),
        (N_J, 1, 4, B_pad))
    l2ws = jnp.concatenate([slab, bottom], axis=1)[..., :B].transpose(3, 0, 1, 2)
    return kp3d, orient, l2ws, bf_proc


# ------------------------------ numpy reference (check) -----------------------------
def reference_forward_np(theta, rest_pose, parent_idx, bone_factor=None):
    theta = np.asarray(theta, np.float64)
    rest = np.asarray(rest_pose, np.float64)
    B, N_J, _ = theta.shape
    rest = np.broadcast_to(rest[None], (B, N_J, 3))
    x, y, z = theta[..., 0], theta[..., 1], theta[..., 2]
    angle = np.sqrt(x * x + y * y + z * z + 1e-12)
    s, c = np.sin(angle), np.cos(angle)
    oc = 1.0 - c
    kx, ky, kz = x / angle, y / angle, z / angle
    R = np.empty((B, N_J, 3, 3))
    R[..., 0, 0] = c + kx * kx * oc
    R[..., 0, 1] = kx * ky * oc - kz * s
    R[..., 0, 2] = kx * kz * oc + ky * s
    R[..., 1, 0] = ky * kx * oc + kz * s
    R[..., 1, 1] = c + ky * ky * oc
    R[..., 1, 2] = ky * kz * oc - kx * s
    R[..., 2, 0] = kz * kx * oc - ky * s
    R[..., 2, 1] = kz * ky * oc + kx * s
    R[..., 2, 2] = c + kz * kz * oc

    bf = None
    if bone_factor is not None:
        bf = np.sqrt(np.asarray(bone_factor, np.float64) ** 2 + 1e-36)

    l2ws = np.zeros((B, N_J, 4, 4))
    l2ws[:, 0, :3, :3] = R[:, 0]
    l2ws[:, 0, :3, 3] = rest[:, 0]
    l2ws[:, 0, 3, 3] = 1.0
    for j in range(1, N_J):
        par = parent_idx[j]
        bv = rest[:, j] - rest[:, par]
        if bf is not None:
            bv = bv * bf[:, j - 1, :]
        rel = np.zeros((B, 4, 4))
        rel[:, :3, :3] = R[:, j]
        rel[:, :3, 3] = bv
        rel[:, 3, 3] = 1.0
        l2ws[:, j] = l2ws[:, par] @ rel
    return l2ws[..., :3, 3], l2ws[..., :3, :3], l2ws, bf


# --------------------------------------- main ---------------------------------------
if __name__ == "__main__":
    B, N_J = 2, 8
    joint_names = [f"j{i}" for i in range(N_J)]
    joint_parents = ["j0", "j0", "j1", "j2", "j0", "j4", "j5", "j0"]
    parent_idx = get_parent_idx(joint_names, joint_parents)   # [0, 0, 1, 2, 0, 4, 5, 0]

    key = jax.random.PRNGKey(0)
    k1, k2, k3 = jax.random.split(key, 3)
    theta = 0.5 * jax.random.normal(k1, (B, N_J, 3), jnp.float32)
    rest_pose = jax.random.normal(k2, (N_J, 3), jnp.float32)
    bone_factor = 1.0 + 0.1 * jax.random.normal(k3, (B, N_J - 1, 1), jnp.float32)

    # with bone_factor
    kp3d, orient, l2ws, bf_out = kinematic_chain_forward(
        theta, rest_pose, parent_idx, bone_factor=bone_factor)
    jax.block_until_ready((kp3d, orient, l2ws, bf_out))

    kp3d_r, orient_r, l2ws_r, bf_r = reference_forward_np(
        np.asarray(theta), np.asarray(rest_pose), parent_idx,
        bone_factor=np.asarray(bone_factor))
    # tolerance slightly relaxed vs f64: f32 + hardware rsqrt along a 4-deep chain
    assert np.allclose(np.asarray(l2ws), l2ws_r, atol=2e-3, rtol=2e-3)
    assert np.allclose(np.asarray(kp3d), kp3d_r, atol=2e-3, rtol=2e-3)
    assert np.allclose(np.asarray(orient), orient_r, atol=2e-3, rtol=2e-3)
    assert np.allclose(np.asarray(bf_out), bf_r, atol=1e-6, rtol=1e-5)

    # without bone_factor
    kp3d2, orient2, l2ws2, bf_none = kinematic_chain_forward(theta, rest_pose, parent_idx)
    jax.block_until_ready((kp3d2, orient2, l2ws2))
    kp3d_r2, orient_r2, l2ws_r2, _ = reference_forward_np(
        np.asarray(theta), np.asarray(rest_pose), parent_idx)
    assert bf_none is None
    assert np.allclose(np.asarray(l2ws2), l2ws_r2, atol=2e-3, rtol=2e-3)
    assert np.allclose(np.asarray(kp3d2), kp3d_r2, atol=2e-3, rtol=2e-3)
    assert np.allclose(np.asarray(orient2), orient_r2, atol=2e-3, rtol=2e-3)

    print("KERNEL_OK")
</pallas_src>

<mosaic_0001>
module attributes {stable_mosaic.version = 11 : i64} {
  func.func @_kinematic_chain_kernel(%arg0: i32, %arg1: memref<24x8x128xf32, #tpu.memory_space<vmem>>, %arg2: memref<24xf32, #tpu.memory_space<smem>>, %arg3: memref<7x8x128xf32, #tpu.memory_space<vmem>>, %arg4: memref<96x8x128xf32, #tpu.memory_space<vmem>>) attributes {dimension_semantics = [#tpu.dimension_semantics<parallel>], iteration_bounds = array<i64: 1>, scalar_prefetch = 0 : i64, scratch_operands = 0 : i64, tpu.core_type = #tpu.core_type<tc>, window_params = [{transform_indices = @transform_0, window_bounds = array<i64: 24, 8, 128>}, {transform_indices = @transform_1, window_bounds = array<i64: 24>}, {transform_indices = @transform_2, window_bounds = array<i64: 7, 8, 128>}, {transform_indices = @transform_3, window_bounds = array<i64: 96, 8, 128>}]} {
    %c0 = arith.constant 0 : index
    %c0_0 = arith.constant 0 : index
    %c0_1 = arith.constant 0 : index
    %0 = vector.load %arg1[%c0, %c0_0, %c0_1] : memref<24x8x128xf32, #tpu.memory_space<vmem>>, vector<1x8x128xf32>
    %1 = vector.shape_cast %0 : vector<1x8x128xf32> to vector<8x128xf32>
    %c1 = arith.constant 1 : index
    %c0_2 = arith.constant 0 : index
    %c0_3 = arith.constant 0 : index
    %2 = vector.load %arg1[%c1, %c0_2, %c0_3] : memref<24x8x128xf32, #tpu.memory_space<vmem>>, vector<1x8x128xf32>
    %3 = vector.shape_cast %2 : vector<1x8x128xf32> to vector<8x128xf32>
    %c2 = arith.constant 2 : index
    %c0_4 = arith.constant 0 : index
    %c0_5 = arith.constant 0 : index
    %4 = vector.load %arg1[%c2, %c0_4, %c0_5] : memref<24x8x128xf32, #tpu.memory_space<vmem>>, vector<1x8x128xf32>
    %5 = vector.shape_cast %4 : vector<1x8x128xf32> to vector<8x128xf32>
    %6 = arith.mulf %1, %1 : vector<8x128xf32>
    %7 = arith.mulf %3, %3 : vector<8x128xf32>
    %8 = arith.addf %6, %7 : vector<8x128xf32>
    %9 = arith.mulf %5, %5 : vector<8x128xf32>
    %10 = arith.addf %8, %9 : vector<8x128xf32>
    %cst = arith.constant 9.99999996E-13 : f32
    %11 = vector.broadcast %cst : f32 to vector<8x128xf32>
    %12 = arith.addf %10, %11 : vector<8x128xf32>
    %13 = math.rsqrt %12 : vector<8x128xf32>
    %14 = arith.mulf %12, %13 : vector<8x128xf32>
    %15 = math.sin %14 : vector<8x128xf32>
    %16 = math.cos %14 : vector<8x128xf32>
    %cst_6 = arith.constant 1.000000e+00 : f32
    %17 = vector.broadcast %cst_6 : f32 to vector<8x128xf32>
    %18 = arith.subf %17, %16 : vector<8x128xf32>
    %19 = arith.mulf %1, %13 : vector<8x128xf32>
    %20 = arith.mulf %3, %13 : vector<8x128xf32>
    %21 = arith.mulf %5, %13 : vector<8x128xf32>
    %22 = arith.mulf %19, %19 : vector<8x128xf32>
    %23 = arith.mulf %22, %18 : vector<8x128xf32>
    %24 = arith.addf %16, %23 : vector<8x128xf32>
    %25 = arith.mulf %19, %20 : vector<8x128xf32>
    %26 = arith.mulf %25, %18 : vector<8x128xf32>
    %27 = arith.mulf %21, %15 : vector<8x128xf32>
    %28 = arith.subf %26, %27 : vector<8x128xf32>
    %29 = arith.mulf %19, %21 : vector<8x128xf32>
    %30 = arith.mulf %29, %18 : vector<8x128xf32>
    %31 = arith.mulf %20, %15 : vector<8x128xf32>
    %32 = arith.addf %30, %31 : vector<8x128xf32>
    %33 = arith.mulf %20, %19 : vector<8x128xf32>
    %34 = arith.mulf %33, %18 : vector<8x128xf32>
    %35 = arith.mulf %21, %15 : vector<8x128xf32>
    %36 = arith.addf %34, %35 : vector<8x128xf32>
    %37 = arith.mulf %20, %20 : vector<8x128xf32>
    %38 = arith.mulf %37, %18 : vector<8x128xf32>
    %39 = arith.addf %16, %38 : vector<8x128xf32>
    %40 = arith.mulf %20, %21 : vector<8x128xf32>
    %41 = arith.mulf %40, %18 : vector<8x128xf32>
    %42 = arith.mulf %19, %15 : vector<8x128xf32>
    %43 = arith.subf %41, %42 : vector<8x128xf32>
    %44 = arith.mulf %21, %19 : vector<8x128xf32>
    %45 = arith.mulf %44, %18 : vector<8x128xf32>
    %46 = arith.mulf %20, %15 : vector<8x128xf32>
    %47 = arith.subf %45, %46 : vector<8x128xf32>
    %48 = arith.mulf %21, %20 : vector<8x128xf32>
    %49 = arith.mulf %48, %18 : vector<8x128xf32>
    %50 = arith.mulf %19, %15 : vector<8x128xf32>
    %51 = arith.addf %49, %50 : vector<8x128xf32>
    %52 = arith.mulf %21, %21 : vector<8x128xf32>
    %53 = arith.mulf %52, %18 : vector<8x128xf32>
    %54 = arith.addf %16, %53 : vector<8x128xf32>
    %c0_7 = arith.constant 0 : index
    %c0_8 = arith.constant 0 : index
    %c0_9 = arith.constant 0 : index
    %55 = vector.load %arg4[%c0_7, %c0_8, %c0_9] : memref<96x8x128xf32, #tpu.memory_space<vmem>>, vector<1x8x128xf32>
    %56 = vector.shape_cast %55 : vector<1x8x128xf32> to vector<8x128xf32>
    %57 = vector.shape_cast %24 : vector<8x128xf32> to vector<1x8x128xf32>
    tpu.vector_store %arg4[%c0_7, %c0_8, %c0_9], %57 {strides = array<i32>} : memref<96x8x128xf32, #tpu.memory_space<vmem>>, vector<1x8x128xf32>,
    %c1_10 = arith.constant 1 : index
    %c0_11 = arith.constant 0 : index
    %c0_12 = arith.constant 0 : index
    %58 = vector.load %arg4[%c1_10, %c0_11, %c0_12] : memref<96x8x128xf32, #tpu.memory_space<vmem>>, vector<1x8x128xf32>
    %59 = vector.shape_cast %58 : vector<1x8x128xf32> to vector<8x128xf32>
    %60 = vector.shape_cast %28 : vector<8x128xf32> to vector<1x8x128xf32>
    tpu.vector_store %arg4[%c1_10, %c0_11, %c0_12], %60 {strides = array<i32>} : memref<96x8x128xf32, #tpu.memory_space<vmem>>, vector<1x8x128xf32>,
    %c2_13 = arith.constant 2 : index
    %c0_14 = arith.constant 0 : index
    %c0_15 = arith.constant 0 : index
    %61 = vector.load %arg4[%c2_13, %c0_14, %c0_15] : memref<96x8x128xf32, #tpu.memory_space<vmem>>, vector<1x8x128xf32>
    %62 = vector.shape_cast %61 : vector<1x8x128xf32> to vector<8x128xf32>
    %63 = vector.shape_cast %32 : vector<8x128xf32> to vector<1x8x128xf32>
    tpu.vector_store %arg4[%c2_13, %c0_14, %c0_15], %63 {strides = array<i32>} : memref<96x8x128xf32, #tpu.memory_space<vmem>>, vector<1x8x128xf32>,
    %c0_16 = arith.constant 0 : index
    %64 = memref.load %arg2[%c0_16] : memref<24xf32, #tpu.memory_space<smem>>
    %65 = vector.broadcast %64 : f32 to vector<8x128xf32>
    %c3 = arith.constant 3 : index
    %c0_17 = arith.constant 0 : index
    %c0_18 = arith.constant 0 : index
    %66 = vector.load %arg4[%c3, %c0_17, %c0_18] : memref<96x8x128xf32, #tpu.memory_space<vmem>>, vector<1x8x128xf32>
    %67 = vector.shape_cast %66 : vector<1x8x128xf32> to vector<8x128xf32>
    %68 = vector.shape_cast %65 : vector<8x128xf32> to vector<1x8x128xf32>
    tpu.vector_store %arg4[%c3, %c0_17, %c0_18], %68 {strides = array<i32>} : memref<96x8x128xf32, #tpu.memory_space<vmem>>, vector<1x8x128xf32>,
    %c4 = arith.constant 4 : index
    %c0_19 = arith.constant 0 : index
    %c0_20 = arith.constant 0 : index
    %69 = vector.load %arg4[%c4, %c0_19, %c0_20] : memref<96x8x128xf32, #tpu.memory_space<vmem>>, vector<1x8x128xf32>
    %70 = vector.shape_cast %69 : vector<1x8x128xf32> to vector<8x128xf32>
    %71 = vector.shape_cast %36 : vector<8x128xf32> to vector<1x8x128xf32>
    tpu.vector_store %arg4[%c4, %c0_19, %c0_20], %71 {strides = array<i32>} : memref<96x8x128xf32, #tpu.memory_space<vmem>>, vector<1x8x128xf32>,
    %c5 = arith.constant 5 : index
    %c0_21 = arith.constant 0 : index
    %c0_22 = arith.constant 0 : index
    %72 = vector.load %arg4[%c5, %c0_21, %c0_22] : memref<96x8x128xf32, #tpu.memory_space<vmem>>, vector<1x8x128xf32>
    %73 = vector.shape_cast %72 : vector<1x8x128xf32> to vector<8x128xf32>
    %74 = vector.shape_cast %39 : vector<8x128xf32> to vector<1x8x128xf32>
    tpu.vector_store %arg4[%c5, %c0_21, %c0_22], %74 {strides = array<i32>} : memref<96x8x128xf32, #tpu.memory_space<vmem>>, vector<1x8x128xf32>,
    %c6 = arith.constant 6 : index
    %c0_23 = arith.constant 0 : index
    %c0_24 = arith.constant 0 : index
    %75 = vector.load %arg4[%c6, %c0_23, %c0_24] : memref<96x8x128xf32, #tpu.memory_space<vmem>>, vector<1x8x128xf32>
    %76 = vector.shape_cast %75 : vector<1x8x128xf32> to vector<8x128xf32>
    %77 = vector.shape_cast %43 : vector<8x128xf32> to vector<1x8x128xf32>
    tpu.vector_store %arg4[%c6, %c0_23, %c0_24], %77 {strides = array<i32>} : memref<96x8x128xf32, #tpu.memory_space<vmem>>, vector<1x8x128xf32>,
    %c1_25 = arith.constant 1 : index
    %78 = memref.load %arg2[%c1_25] : memref<24xf32, #tpu.memory_space<smem>>
    %79 = vector.broadcast %78 : f32 to vector<8x128xf32>
    %c7 = arith.constant 7 : index
    %c0_26 = arith.constant 0 : index
    %c0_27 = arith.constant 0 : index
    %80 = vector.load %arg4[%c7, %c0_26, %c0_27] : memref<96x8x128xf32, #tpu.memory_space<vmem>>, vector<1x8x128xf32>
    %81 = vector.shape_cast %80 : vector<1x8x128xf32> to vector<8x128xf32>
    %82 = vector.shape_cast %79 : vector<8x128xf32> to vector<1x8x128xf32>
    tpu.vector_store %arg4[%c7, %c0_26, %c0_27], %82 {strides = array<i32>} : memref<96x8x128xf32, #tpu.memory_space<vmem>>, vector<1x8x128xf32>,
    %c8 = arith.constant 8 : index
    %c0_28 = arith.constant 0 : index
    %c0_29 = arith.constant 0 : index
    %83 = vector.load %arg4[%c8, %c0_28, %c0_29] : memref<96x8x128xf32, #tpu.memory_space<vmem>>, vector<1x8x128xf32>
    %84 = vector.shape_cast %83 : vector<1x8x128xf32> to vector<8x128xf32>
    %85 = vector.shape_cast %47 : vector<8x128xf32> to vector<1x8x128xf32>
    tpu.vector_store %arg4[%c8, %c0_28, %c0_29], %85 {strides = array<i32>} : memref<96x8x128xf32, #tpu.memory_space<vmem>>, vector<1x8x128xf32>,
    %c9 = arith.constant 9 : index
    %c0_30 = arith.constant 0 : index
    %c0_31 = arith.constant 0 : index
    %86 = vector.load %arg4[%c9, %c0_30, %c0_31] : memref<96x8x128xf32, #tpu.memory_space<vmem>>, vector<1x8x128xf32>
    %87 = vector.shape_cast %86 : vector<1x8x128xf32> to vector<8x128xf32>
    %88 = vector.shape_cast %51 : vector<8x128xf32> to vector<1x8x128xf32>
    tpu.vector_store %arg4[%c9, %c0_30, %c0_31], %88 {strides = array<i32>} : memref<96x8x128xf32, #tpu.memory_space<vmem>>, vector<1x8x128xf32>,
    %c10 = arith.constant 10 : index
    %c0_32 = arith.constant 0 : index
    %c0_33 = arith.constant 0 : index
    %89 = vector.load %arg4[%c10, %c0_32, %c0_33] : memref<96x8x128xf32, #tpu.memory_space<vmem>>, vector<1x8x128xf32>
    %90 = vector.shape_cast %89 : vector<1x8x128xf32> to vector<8x128xf32>
    %91 = vector.shape_cast %54 : vector<8x128xf32> to vector<1x8x128xf32>
    tpu.vector_store %arg4[%c10, %c0_32, %c0_33], %91 {strides = array<i32>} : memref<96x8x128xf32, #tpu.memory_space<vmem>>, vector<1x8x128xf32>,
    %c2_34 = arith.constant 2 : index
    %92 = memref.load %arg2[%c2_34] : memref<24xf32, #tpu.memory_space<smem>>
    %93 = vector.broadcast %92 : f32 to vector<8x128xf32>
    %c11 = arith.constant 11 : index
    %c0_35 = arith.constant 0 : index
    %c0_36 = arith.constant 0 : index
    %94 = vector.load %arg4[%c11, %c0_35, %c0_36] : memref<96x8x128xf32, #tpu.memory_space<vmem>>, vector<1x8x128xf32>
    %95 = vector.shape_cast %94 : vector<1x8x128xf32> to vector<8x128xf32>
    %96 = vector.shape_cast %93 : vector<8x128xf32> to vector<1x8x128xf32>
    tpu.vector_store %arg4[%c11, %c0_35, %c0_36], %96 {strides = array<i32>} : memref<96x8x128xf32, #tpu.memory_space<vmem>>, vector<1x8x128xf32>,
    %c3_37 = arith.constant 3 : index
    %c0_38 = arith.constant 0 : index
    %c0_39 = arith.constant 0 : index
    %97 = vector.load %arg1[%c3_37, %c0_38, %c0_39] : memref<24x8x128xf32, #tpu.memory_space<vmem>>, vector<1x8x128xf32>
    %98 = vector.shape_cast %97 : vector<1x8x128xf32> to vector<8x128xf32>
    %c4_40 = arith.constant 4 : index
    %c0_41 = arith.constant 0 : index
    %c0_42 = arith.constant 0 : index
    %99 = vector.load %arg1[%c4_40, %c0_41, %c0_42] : memref<24x8x128xf32, #tpu.memory_space<vmem>>, vector<1x8x128xf32>
    %100 = vector.shape_cast %99 : vector<1x8x128xf32> to vector<8x128xf32>
    %c5_43 = arith.constant 5 : index
    %c0_44 = arith.constant 0 : index
    %c0_45 = arith.constant 0 : index
    %101 = vector.load %arg1[%c5_43, %c0_44, %c0_45] : memref<24x8x128xf32, #tpu.memory_space<vmem>>, vector<1x8x128xf32>
    %102 = vector.shape_cast %101 : vector<1x8x128xf32> to vector<8x128xf32>
    %103 = arith.mulf %98, %98 : vector<8x128xf32>
    %104 = arith.mulf %100, %100 : vector<8x128xf32>
    %105 = arith.addf %103, %104 : vector<8x128xf32>
    %106 = arith.mulf %102, %102 : vector<8x128xf32>
    %107 = arith.addf %105, %106 : vector<8x128xf32>
    %cst_46 = arith.constant 9.99999996E-13 : f32
    %108 = vector.broadcast %cst_46 : f32 to vector<8x128xf32>
    %109 = arith.addf %107, %108 : vector<8x128xf32>
    %110 = math.rsqrt %109 : vector<8x128xf32>
    %111 = arith.mulf %109, %110 : vector<8x128xf32>
    %112 = math.sin %111 : vector<8x128xf32>
    %113 = math.cos %111 : vector<8x128xf32>
    %cst_47 = arith.constant 1.000000e+00 : f32
    %114 = vector.broadcast %cst_47 : f32 to vector<8x128xf32>
    %115 = arith.subf %114, %113 : vector<8x128xf32>
    %116 = arith.mulf %98, %110 : vector<8x128xf32>
    %117 = arith.mulf %100, %110 : vector<8x128xf32>
    %118 = arith.mulf %102, %110 : vector<8x128xf32>
    %119 = arith.mulf %116, %116 : vector<8x128xf32>
    %120 = arith.mulf %119, %115 : vector<8x128xf32>
    %121 = arith.addf %113, %120 : vector<8x128xf32>
    %122 = arith.mulf %116, %117 : vector<8x128xf32>
    %123 = arith.mulf %122, %115 : vector<8x128xf32>
    %124 = arith.mulf %118, %112 : vector<8x128xf32>
    %125 = arith.subf %123, %124 : vector<8x128xf32>
    %126 = arith.mulf %116, %118 : vector<8x128xf32>
    %127 = arith.mulf %126, %115 : vector<8x128xf32>
    %128 = arith.mulf %117, %112 : vector<8x128xf32>
    %129 = arith.addf %127, %128 : vector<8x128xf32>
    %130 = arith.mulf %117, %116 : vector<8x128xf32>
    %131 = arith.mulf %130, %115 : vector<8x128xf32>
    %132 = arith.mulf %118, %112 : vector<8x128xf32>
    %133 = arith.addf %131, %132 : vector<8x128xf32>
    %134 = arith.mulf %117, %117 : vector<8x128xf32>
    %135 = arith.mulf %134, %115 : vector<8x128xf32>
    %136 = arith.addf %113, %135 : vector<8x128xf32>
    %137 = arith.mulf %117, %118 : vector<8x128xf32>
    %138 = arith.mulf %137, %115 : vector<8x128xf32>
    %139 = arith.mulf %116, %112 : vector<8x128xf32>
    %140 = arith.subf %138, %139 : vector<8x128xf32>
    %141 = arith.mulf %118, %116 : vector<8x128xf32>
    %142 = arith.mulf %141, %115 : vector<8x128xf32>
    %143 = arith.mulf %117, %112 : vector<8x128xf32>
    %144 = arith.subf %142, %143 : vector<8x128xf32>
    %145 = arith.mulf %118, %117 : vector<8x128xf32>
    %146 = arith.mulf %145, %115 : vector<8x128xf32>
    %147 = arith.mulf %116, %112 : vector<8x128xf32>
    %148 = arith.addf %146, %147 : vector<8x128xf32>
    %149 = arith.mulf %118, %118 : vector<8x128xf32>
    %150 = arith.mulf %149, %115 : vector<8x128xf32>
    %151 = arith.addf %113, %150 : vector<8x128xf32>
    %c0_48 = arith.constant 0 : index
    %c0_49 = arith.constant 0 : index
    %c0_50 = arith.constant 0 : index
    %152 = vector.load %arg3[%c0_48, %c0_49, %c0_50] : memref<7x8x128xf32, #tpu.memory_space<vmem>>, vector<1x8x128xf32>
    %153 = vector.shape_cast %152 : vector<1x8x128xf32> to vector<8x128xf32>
    %c3_51 = arith.constant 3 : index
    %154 = memref.load %arg2[%c3_51] : memref<24xf32, #tpu.memory_space<smem>>
    %155 = vector.broadcast %154 : f32 to vector<8x128xf32>
    %156 = arith.mulf %155, %153 : vector<8x128xf32>
    %c4_52 = arith.constant 4 : index
    %157 = memref.load %arg2[%c4_52] : memref<24xf32, #tpu.memory_space<smem>>
    %158 = vector.broadcast %157 : f32 to vector<8x128xf32>
    %159 = arith.mulf %158, %153 : vector<8x128xf32>
    %c5_53 = arith.constant 5 : index
    %160 = memref.load %arg2[%c5_53] : memref<24xf32, #tpu.memory_space<smem>>
    %161 = vector.broadcast %160 : f32 to vector<8x128xf32>
    %162 = arith.mulf %161, %153 : vector<8x128xf32>
    %c0_54 = arith.constant 0 : index
    %c0_55 = arith.constant 0 : index
    %c0_56 = arith.constant 0 : index
    %163 = vector.load %arg4[%c0_54, %c0_55, %c0_56] : memref<96x8x128xf32, #tpu.memory_space<vmem>>, vector<1x8x128xf32>
    %164 = vector.shape_cast %163 : vector<1x8x128xf32> to vector<8x128xf32>
    %c1_57 = arith.constant 1 : index
    %c0_58 = arith.constant 0 : index
    %c0_59 = arith.constant 0 : index
    %165 = vector.load %arg4[%c1_57, %c0_58, %c0_59] : memref<96x8x128xf32, #tpu.memory_space<vmem>>, vector<1x8x128xf32>
    %166 = vector.shape_cast %165 : vector<1x8x128xf32> to vector<8x128xf32>
    %c2_60 = arith.constant 2 : index
    %c0_61 = arith.constant 0 : index
    %c0_62 = arith.constant 0 : index
    %167 = vector.load %arg4[%c2_60, %c0_61, %c0_62] : memref<96x8x128xf32, #tpu.memory_space<vmem>>, vector<1x8x128xf32>
    %168 = vector.shape_cast %167 : vector<1x8x128xf32> to vector<8x128xf32>
    %c3_63 = arith.constant 3 : index
    %c0_64 = arith.constant 0 : index
    %c0_65 = arith.constant 0 : index
    %169 = vector.load %arg4[%c3_63, %c0_64, %c0_65] : memref<96x8x128xf32, #tpu.memory_space<vmem>>, vector<1x8x128xf32>
    %170 = vector.shape_cast %169 : vector<1x8x128xf32> to vector<8x128xf32>
    %171 = arith.mulf %164, %121 : vector<8x128xf32>
    %172 = arith.mulf %166, %133 : vector<8x128xf32>
    %173 = arith.addf %171, %172 : vector<8x128xf32>
    %174 = arith.mulf %168, %144 : vector<8x128xf32>
    %175 = arith.addf %173, %174 : vector<8x128xf32>
    %c12 = arith.constant 12 : index
    %c0_66 = arith.constant 0 : index
    %c0_67 = arith.constant 0 : index
    %176 = vector.load %arg4[%c12, %c0_66, %c0_67] : memref<96x8x128xf32, #tpu.memory_space<vmem>>, vector<1x8x128xf32>
    %177 = vector.shape_cast %176 : vector<1x8x128xf32> to vector<8x128xf32>
    %178 = vector.shape_cast %175 : vector<8x128xf32> to vector<1x8x128xf32>
    tpu.vector_store %arg4[%c12, %c0_66, %c0_67], %178 {strides = array<i32>} : memref<96x8x128xf32, #tpu.memory_space<vmem>>, vector<1x8x128xf32>,
    %179 = arith.mulf %164, %125 : vector<8x128xf32>
    %180 = arith.mulf %166, %136 : vector<8x128xf32>
    %181 = arith.addf %179, %180 : vector<8x128xf32>
    %182 = arith.mulf %168, %148 : vector<8x128xf32>
    %183 = arith.addf %181, %182 : vector<8x128xf32>
    %c13 = arith.constant 13 : index
    %c0_68 = arith.constant 0 : index
    %c0_69 = arith.constant 0 : index
    %184 = vector.load %arg4[%c13, %c0_68, %c0_69] : memref<96x8x128xf32, #tpu.memory_space<vmem>>, vector<1x8x128xf32>
    %185 = vector.shape_cast %184 : vector<1x8x128xf32> to vector<8x128xf32>
    %186 = vector.shape_cast %183 : vector<8x128xf32> to vector<1x8x128xf32>
    tpu.vector_store %arg4[%c13, %c0_68, %c0_69], %186 {strides = array<i32>} : memref<96x8x128xf32, #tpu.memory_space<vmem>>, vector<1x8x128xf32>,
    %187 = arith.mulf %164, %129 : vector<8x128xf32>
    %188 = arith.mulf %166, %140 : vector<8x128xf32>
    %189 = arith.addf %187, %188 : vector<8x128xf32>
    %190 = arith.mulf %168, %151 : vector<8x128xf32>
    %191 = arith.addf %189, %190 : vector<8x128xf32>
    %c14 = arith.constant 14 : index
    %c0_70 = arith.constant 0 : index
    %c0_71 = arith.constant 0 : index
    %192 = vector.load %arg4[%c14, %c0_70, %c0_71] : memref<96x8x128xf32, #tpu.memory_space<vmem>>, vector<1x8x128xf32>
    %193 = vector.shape_cast %192 : vector<1x8x128xf32> to vector<8x128xf32>
    %194 = vector.shape_cast %191 : vector<8x128xf32> to vector<1x8x128xf32>
    tpu.vector_store %arg4[%c14, %c0_70, %c0_71], %194 {strides = array<i32>} : memref<96x8x128xf32, #tpu.memory_space<vmem>>, vector<1x8x128xf32>,
    %195 = arith.mulf %164, %156 : vector<8x128xf32>
    %196 = arith.mulf %166, %159 : vector<8x128xf32>
    %197 = arith.addf %195, %196 : vector<8x128xf32>
    %198 = arith.mulf %168, %162 : vector<8x128xf32>
    %199 = arith.addf %197, %198 : vector<8x128xf32>
    %200 = arith.addf %199, %170 : vector<8x128xf32>
    %c15 = arith.constant 15 : index
    %c0_72 = arith.constant 0 : index
    %c0_73 = arith.constant 0 : index
    %201 = vector.load %arg4[%c15, %c0_72, %c0_73] : memref<96x8x128xf32, #tpu.memory_space<vmem>>, vector<1x8x128xf32>
    %202 = vector.shape_cast %201 : vector<1x8x128xf32> to vector<8x128xf32>
    %203 = vector.shape_cast %200 : vector<8x128xf32> to vector<1x8x128xf32>
    tpu.vector_store %arg4[%c15, %c0_72, %c0_73], %203 {strides = array<i32>} : memref<96x8x128xf32, #tpu.memory_space<vmem>>, vector<1x8x128xf32>,
    %c4_74 = arith.constant 4 : index
    %c0_75 = arith.constant 0 : index
    %c0_76 = arith.constant 0 : index
    %204 = vector.load %arg4[%c4_74, %c0_75, %c0_76] : memref<96x8x128xf32, #tpu.memory_space<vmem>>, vector<1x8x128xf32>
    %205 = vector.shape_cast %204 : vector<1x8x128xf32> to vector<8x128xf32>
    %c5_77 = arith.constant 5 : index
    %c0_78 = arith.constant 0 : index
    %c0_79 = arith.constant 0 : index
    %206 = vector.load %arg4[%c5_77, %c0_78, %c0_79] : memref<96x8x128xf32, #tpu.memory_space<vmem>>, vector<1x8x128xf32>
    %207 = vector.shape_cast %206 : vector<1x8x128xf32> to vector<8x128xf32>
    %c6_80 = arith.constant 6 : index
    %c0_81 = arith.constant 0 : index
    %c0_82 = arith.constant 0 : index
    %208 = vector.load %arg4[%c6_80, %c0_81, %c0_82] : memref<96x8x128xf32, #tpu.memory_space<vmem>>, vector<1x8x128xf32>
    %209 = vector.shape_cast %208 : vector<1x8x128xf32> to vector<8x128xf32>
    %c7_83 = arith.constant 7 : index
    %c0_84 = arith.constant 0 : index
    %c0_85 = arith.constant 0 : index
    %210 = vector.load %arg4[%c7_83, %c0_84, %c0_85] : memref<96x8x128xf32, #tpu.memory_space<vmem>>, vector<1x8x128xf32>
    %211 = vector.shape_cast %210 : vector<1x8x128xf32> to vector<8x128xf32>
    %212 = arith.mulf %205, %121 : vector<8x128xf32>
    %213 = arith.mulf %207, %133 : vector<8x128xf32>
    %214 = arith.addf %212, %213 : vector<8x128xf32>
    %215 = arith.mulf %209, %144 : vector<8x128xf32>
    %216 = arith.addf %214, %215 : vector<8x128xf32>
    %c16 = arith.constant 16 : index
    %c0_86 = arith.constant 0 : index
    %c0_87 = arith.constant 0 : index
    %217 = vector.load %arg4[%c16, %c0_86, %c0_87] : memref<96x8x128xf32, #tpu.memory_space<vmem>>, vector<1x8x128xf32>
    %218 = vector.shape_cast %217 : vector<1x8x128xf32> to vector<8x128xf32>
    %219 = vector.shape_cast %216 : vector<8x128xf32> to vector<1x8x128xf32>
    tpu.vector_store %arg4[%c16, %c0_86, %c0_87], %219 {strides = array<i32>} : memref<96x8x128xf32, #tpu.memory_space<vmem>>, vector<1x8x128xf32>,
    %220 = arith.mulf %205, %125 : vector<8x128xf32>
    %221 = arith.mulf %207, %136 : vector<8x128xf32>
    %222 = arith.addf %220, %221 : vector<8x128xf32>
    %223 = arith.mulf %209, %148 : vector<8x128xf32>
    %224 = arith.addf %222, %223 : vector<8x128xf32>
    %c17 = arith.constant 17 : index
    %c0_88 = arith.constant 0 : index
    %c0_89 = arith.constant 0 : index
    %225 = vector.load %arg4[%c17, %c0_88, %c0_89] : memref<96x8x128xf32, #tpu.memory_space<vmem>>, vector<1x8x128xf32>
    %226 = vector.shape_cast %225 : vector<1x8x128xf32> to vector<8x128xf32>
    %227 = vector.shape_cast %224 : vector<8x128xf32> to vector<1x8x128xf32>
    tpu.vector_store %arg4[%c17, %c0_88, %c0_89], %227 {strides = array<i32>} : memref<96x8x128xf32, #tpu.memory_space<vmem>>, vector<1x8x128xf32>,
    %228 = arith.mulf %205, %129 : vector<8x128xf32>
    %229 = arith.mulf %207, %140 : vector<8x128xf32>
    %230 = arith.addf %228, %229 : vector<8x128xf32>
    %231 = arith.mulf %209, %151 : vector<8x128xf32>
    %232 = arith.addf %230, %231 : vector<8x128xf32>
    %c18 = arith.constant 18 : index
    %c0_90 = arith.constant 0 : index
    %c0_91 = arith.constant 0 : index
    %233 = vector.load %arg4[%c18, %c0_90, %c0_91] : memref<96x8x128xf32, #tpu.memory_space<vmem>>, vector<1x8x128xf32>
    %234 = vector.shape_cast %233 : vector<1x8x128xf32> to vector<8x128xf32>
    %235 = vector.shape_cast %232 : vector<8x128xf32> to vector<1x8x128xf32>
    tpu.vector_store %arg4[%c18, %c0_90, %c0_91], %235 {strides = array<i32>} : memref<96x8x128xf32, #tpu.memory_space<vmem>>, vector<1x8x128xf32>,
    %236 = arith.mulf %205, %156 : vector<8x128xf32>
    %237 = arith.mulf %207, %159 : vector<8x128xf32>
    %238 = arith.addf %236, %237 : vector<8x128xf32>
    %239 = arith.mulf %209, %162 : vector<8x128xf32>
    %240 = arith.addf %238, %239 : vector<8x128xf32>
    %241 = arith.addf %240, %211 : vector<8x128xf32>
    %c19 = arith.constant 19 : index
    %c0_92 = arith.constant 0 : index
    %c0_93 = arith.constant 0 : index
    %242 = vector.load %arg4[%c19, %c0_92, %c0_93] : memref<96x8x128xf32, #tpu.memory_space<vmem>>, vector<1x8x128xf32>
    %243 = vector.shape_cast %242 : vector<1x8x128xf32> to vector<8x128xf32>
    %244 = vector.shape_cast %241 : vector<8x128xf32> to vector<1x8x128xf32>
    tpu.vector_store %arg4[%c19, %c0_92, %c0_93], %244 {strides = array<i32>} : memref<96x8x128xf32, #tpu.memory_space<vmem>>, vector<1x8x128xf32>,
    %c8_94 = arith.constant 8 : index
    %c0_95 = arith.constant 0 : index
    %c0_96 = arith.constant 0 : index
    %245 = vector.load %arg4[%c8_94, %c0_95, %c0_96] : memref<96x8x128xf32, #tpu.memory_space<vmem>>, vector<1x8x128xf32>
    %246 = vector.shape_cast %245 : vector<1x8x128xf32> to vector<8x128xf32>
    %c9_97 = arith.constant 9 : index
    %c0_98 = arith.constant 0 : index
    %c0_99 = arith.constant 0 : index
    %247 = vector.load %arg4[%c9_97, %c0_98, %c0_99] : memref<96x8x128xf32, #tpu.memory_space<vmem>>, vector<1x8x128xf32>
    %248 = vector.shape_cast %247 : vector<1x8x128xf32> to vector<8x128xf32>
    %c10_100 = arith.constant 10 : index
    %c0_101 = arith.constant 0 : index
    %c0_102 = arith.constant 0 : index
    %249 = vector.load %arg4[%c10_100, %c0_101, %c0_102] : memref<96x8x128xf32, #tpu.memory_space<vmem>>, vector<1x8x128xf32>
    %250 = vector.shape_cast %249 : vector<1x8x128xf32> to vector<8x128xf32>
    %c11_103 = arith.constant 11 : index
    %c0_104 = arith.constant 0 : index
    %c0_105 = arith.constant 0 : index
    %251 = vector.load %arg4[%c11_103, %c0_104, %c0_105] : memref<96x8x128xf32, #tpu.memory_space<vmem>>, vector<1x8x128xf32>
    %252 = vector.shape_cast %251 : vector<1x8x128xf32> to vector<8x128xf32>
    %253 = arith.mulf %246, %121 : vector<8x128xf32>
    %254 = arith.mulf %248, %133 : vector<8x128xf32>
    %255 = arith.addf %253, %254 : vector<8x128xf32>
    %256 = arith.mulf %250, %144 : vector<8x128xf32>
    %257 = arith.addf %255, %256 : vector<8x128xf32>
    %c20 = arith.constant 20 : index
    %c0_106 = arith.constant 0 : index
    %c0_107 = arith.constant 0 : index
    %258 = vector.load %arg4[%c20, %c0_106, %c0_107] : memref<96x8x128xf32, #tpu.memory_space<vmem>>, vector<1x8x128xf32>
    %259 = vector.shape_cast %258 : vector<1x8x128xf32> to vector<8x128xf32>
    %260 = vector.shape_cast %257 : vector<8x128xf32> to vector<1x8x128xf32>
    tpu.vector_store %arg4[%c20, %c0_106, %c0_107], %260 {strides = array<i32>} : memref<96x8x128xf32, #tpu.memory_space<vmem>>, vector<1x8x128xf32>,
    %261 = arith.mulf %246, %125 : vector<8x128xf32>
    %262 = arith.mulf %248, %136 : vector<8x128xf32>
    %263 = arith.addf %261, %262 : vector<8x128xf32>
    %264 = arith.mulf %250, %148 : vector<8x128xf32>
    %265 = arith.addf %263, %264 : vector<8x128xf32>
    %c21 = arith.constant 21 : index
    %c0_108 = arith.constant 0 : index
    %c0_109 = arith.constant 0 : index
    %266 = vector.load %arg4[%c21, %c0_108, %c0_109] : memref<96x8x128xf32, #tpu.memory_space<vmem>>, vector<1x8x128xf32>
    %267 = vector.shape_cast %266 : vector<1x8x128xf32> to vector<8x128xf32>
    %268 = vector.shape_cast %265 : vector<8x128xf32> to vector<1x8x128xf32>
    tpu.vector_store %arg4[%c21, %c0_108, %c0_109], %268 {strides = array<i32>} : memref<96x8x128xf32, #tpu.memory_space<vmem>>, vector<1x8x128xf32>,
    %269 = arith.mulf %246, %129 : vector<8x128xf32>
    %270 = arith.mulf %248, %140 : vector<8x128xf32>
    %271 = arith.addf %269, %270 : vector<8x128xf32>
    %272 = arith.mulf %250, %151 : vector<8x128xf32>
    %273 = arith.addf %271, %272 : vector<8x128xf32>
    %c22 = arith.constant 22 : index
    %c0_110 = arith.constant 0 : index
    %c0_111 = arith.constant 0 : index
    %274 = vector.load %arg4[%c22, %c0_110, %c0_111] : memref<96x8x128xf32, #tpu.memory_space<vmem>>, vector<1x8x128xf32>
    %275 = vector.shape_cast %274 : vector<1x8x128xf32> to vector<8x128xf32>
    %276 = vector.shape_cast %273 : vector<8x128xf32> to vector<1x8x128xf32>
    tpu.vector_store %arg4[%c22, %c0_110, %c0_111], %276 {strides = array<i32>} : memref<96x8x128xf32, #tpu.memory_space<vmem>>, vector<1x8x128xf32>,
    %277 = arith.mulf %246, %156 : vector<8x128xf32>
    %278 = arith.mulf %248, %159 : vector<8x128xf32>
    %279 = arith.addf %277, %278 : vector<8x128xf32>
    %280 = arith.mulf %250, %162 : vector<8x128xf32>
    %281 = arith.addf %279, %280 : vector<8x128xf32>
    %282 = arith.addf %281, %252 : vector<8x128xf32>
    %c23 = arith.constant 23 : index
    %c0_112 = arith.constant 0 : index
    %c0_113 = arith.constant 0 : index
    %283 = vector.load %arg4[%c23, %c0_112, %c0_113] : memref<96x8x128xf32, #tpu.memory_space<vmem>>, vector<1x8x128xf32>
    %284 = vector.shape_cast %283 : vector<1x8x128xf32> to vector<8x128xf32>
    %285 = vector.shape_cast %282 : vector<8x128xf32> to vector<1x8x128xf32>
    tpu.vector_store %arg4[%c23, %c0_112, %c0_113], %285 {strides = array<i32>} : memref<96x8x128xf32, #tpu.memory_space<vmem>>, vector<1x8x128xf32>,
    %c6_114 = arith.constant 6 : index
    %c0_115 = arith.constant 0 : index
    %c0_116 = arith.constant 0 : index
    %286 = vector.load %arg1[%c6_114, %c0_115, %c0_116] : memref<24x8x128xf32, #tpu.memory_space<vmem>>, vector<1x8x128xf32>
    %287 = vector.shape_cast %286 : vector<1x8x128xf32> to vector<8x128xf32>
    %c7_117 = arith.constant 7 : index
    %c0_118 = arith.constant 0 : index
    %c0_119 = arith.constant 0 : index
    %288 = vector.load %arg1[%c7_117, %c0_118, %c0_119] : memref<24x8x128xf32, #tpu.memory_space<vmem>>, vector<1x8x128xf32>
    %289 = vector.shape_cast %288 : vector<1x8x128xf32> to vector<8x128xf32>
    %c8_120 = arith.constant 8 : index
    %c0_121 = arith.constant 0 : index
    %c0_122 = arith.constant 0 : index
    %290 = vector.load %arg1[%c8_120, %c0_121, %c0_122] : memref<24x8x128xf32, #tpu.memory_space<vmem>>, vector<1x8x128xf32>
    %291 = vector.shape_cast %290 : vector<1x8x128xf32> to vector<8x128xf32>
    %292 = arith.mulf %287, %287 : vector<8x128xf32>
    %293 = arith.mulf %289, %289 : vector<8x128xf32>
    %294 = arith.addf %292, %293 : vector<8x128xf32>
    %295 = arith.mulf %291, %291 : vector<8x128xf32>
    %296 = arith.addf %294, %295 : vector<8x128xf32>
    %cst_123 = arith.constant 9.99999996E-13 : f32
    %297 = vector.broadcast %cst_123 : f32 to vector<8x128xf32>
    %298 = arith.addf %296, %297 : vector<8x128xf32>
    %299 = math.rsqrt %298 : vector<8x128xf32>
    %300 = arith.mulf %298, %299 : vector<8x128xf32>
    %301 = math.sin %300 : vector<8x128xf32>
    %302 = math.cos %300 : vector<8x128xf32>
    %cst_124 = arith.constant 1.000000e+00 : f32
    %303 = vector.broadcast %cst_124 : f32 to vector<8x128xf32>
    %304 = arith.subf %303, %302 : vector<8x128xf32>
    %305 = arith.mulf %287, %299 : vector<8x128xf32>
    %306 = arith.mulf %289, %299 : vector<8x128xf32>
    %307 = arith.mulf %291, %299 : vector<8x128xf32>
    %308 = arith.mulf %305, %305 : vector<8x128xf32>
    %309 = arith.mulf %308, %304 : vector<8x128xf32>
    %310 = arith.addf %302, %309 : vector<8x128xf32>
    %311 = arith.mulf %305, %306 : vector<8x128xf32>
    %312 = arith.mulf %311, %304 : vector<8x128xf32>
    %313 = arith.mulf %307, %301 : vector<8x128xf32>
    %314 = arith.subf %312, %313 : vector<8x128xf32>
    %315 = arith.mulf %305, %307 : vector<8x128xf32>
    %316 = arith.mulf %315, %304 : vector<8x128xf32>
    %317 = arith.mulf %306, %301 : vector<8x128xf32>
    %318 = arith.addf %316, %317 : vector<8x128xf32>
    %319 = arith.mulf %306, %305 : vector<8x128xf32>
    %320 = arith.mulf %319, %304 : vector<8x128xf32>
    %321 = arith.mulf %307, %301 : vector<8x128xf32>
    %322 = arith.addf %320, %321 : vector<8x128xf32>
    %323 = arith.mulf %306, %306 : vector<8x128xf32>
    %324 = arith.mulf %323, %304 : vector<8x128xf32>
    %325 = arith.addf %302, %324 : vector<8x128xf32>
    %326 = arith.mulf %306, %307 : vector<8x128xf32>
    %327 = arith.mulf %326, %304 : vector<8x128xf32>
    %328 = arith.mulf %305, %301 : vector<8x128xf32>
    %329 = arith.subf %327, %328 : vector<8x128xf32>
    %330 = arith.mulf %307, %305 : vector<8x128xf32>
    %331 = arith.mulf %330, %304 : vector<8x128xf32>
    %332 = arith.mulf %306, %301 : vector<8x128xf32>
    %333 = arith.subf %331, %332 : vector<8x128xf32>
    %334 = arith.mulf %307, %306 : vector<8x128xf32>
    %335 = arith.mulf %334, %304 : vector<8x128xf32>
    %336 = arith.mulf %305, %301 : vector<8x128xf32>
    %337 = arith.addf %335, %336 : vector<8x128xf32>
    %338 = arith.mulf %307, %307 : vector<8x128xf32>
    %339 = arith.mulf %338, %304 : vector<8x128xf32>
    %340 = arith.addf %302, %339 : vector<8x128xf32>
    %c1_125 = arith.constant 1 : index
    %c0_126 = arith.constant 0 : index
    %c0_127 = arith.constant 0 : index
    %341 = vector.load %arg3[%c1_125, %c0_126, %c0_127] : memref<7x8x128xf32, #tpu.memory_space<vmem>>, vector<1x8x128xf32>
    %342 = vector.shape_cast %341 : vector<1x8x128xf32> to vector<8x128xf32>
    %c6_128 = arith.constant 6 : index
    %343 = memref.load %arg2[%c6_128] : memref<24xf32, #tpu.memory_space<smem>>
    %344 = vector.broadcast %343 : f32 to vector<8x128xf32>
    %345 = arith.mulf %344, %342 : vector<8x128xf32>
    %c7_129 = arith.constant 7 : index
    %346 = memref.load %arg2[%c7_129] : memref<24xf32, #tpu.memory_space<smem>>
    %347 = vector.broadcast %346 : f32 to vector<8x128xf32>
    %348 = arith.mulf %347, %342 : vector<8x128xf32>
    %c8_130 = arith.constant 8 : index
    %349 = memref.load %arg2[%c8_130] : memref<24xf32, #tpu.memory_space<smem>>
    %350 = vector.broadcast %349 : f32 to vector<8x128xf32>
    %351 = arith.mulf %350, %342 : vector<8x128xf32>
    %c12_131 = arith.constant 12 : index
    %c0_132 = arith.constant 0 : index
    %c0_133 = arith.constant 0 : index
    %352 = vector.load %arg4[%c12_131, %c0_132, %c0_133] : memref<96x8x128xf32, #tpu.memory_space<vmem>>, vector<1x8x128xf32>
    %353 = vector.shape_cast %352 : vector<1x8x128xf32> to vector<8x128xf32>
    %c13_134 = arith.constant 13 : index
    %c0_135 = arith.constant 0 : index
    %c0_136 = arith.constant 0 : index
    %354 = vector.load %arg4[%c13_134, %c0_135, %c0_136] : memref<96x8x128xf32, #tpu.memory_space<vmem>>, vector<1x8x128xf32>
    %355 = vector.shape_cast %354 : vector<1x8x128xf32> to vector<8x128xf32>
    %c14_137 = arith.constant 14 : index
    %c0_138 = arith.constant 0 : index
    %c0_139 = arith.constant 0 : index
    %356 = vector.load %arg4[%c14_137, %c0_138, %c0_139] : memref<96x8x128xf32, #tpu.memory_space<vmem>>, vector<1x8x128xf32>
    %357 = vector.shape_cast %356 : vector<1x8x128xf32> to vector<8x128xf32>
    %c15_140 = arith.constant 15 : index
    %c0_141 = arith.constant 0 : index
    %c0_142 = arith.constant 0 : index
    %358 = vector.load %arg4[%c15_140, %c0_141, %c0_142] : memref<96x8x128xf32, #tpu.memory_space<vmem>>, vector<1x8x128xf32>
    %359 = vector.shape_cast %358 : vector<1x8x128xf32> to vector<8x128xf32>
    %360 = arith.mulf %353, %310 : vector<8x128xf32>
    %361 = arith.mulf %355, %322 : vector<8x128xf32>
    %362 = arith.addf %360, %361 : vector<8x128xf32>
    %363 = arith.mulf %357, %333 : vector<8x128xf32>
    %364 = arith.addf %362, %363 : vector<8x128xf32>
    %c24 = arith.constant 24 : index
    %c0_143 = arith.constant 0 : index
    %c0_144 = arith.constant 0 : index
    %365 = vector.load %arg4[%c24, %c0_143, %c0_144] : memref<96x8x128xf32, #tpu.memory_space<vmem>>, vector<1x8x128xf32>
    %366 = vector.shape_cast %365 : vector<1x8x128xf32> to vector<8x128xf32>
    %367 = vector.shape_cast %364 : vector<8x128xf32> to vector<1x8x128xf32>
    tpu.vector_store %arg4[%c24, %c0_143, %c0_144], %367 {strides = array<i32>} : memref<96x8x128xf32, #tpu.memory_space<vmem>>, vector<1x8x128xf32>,
    %368 = arith.mulf %353, %314 : vector<8x128xf32>
    %369 = arith.mulf %355, %325 : vector<8x128xf32>
    %370 = arith.addf %368, %369 : vector<8x128xf32>
    %371 = arith.mulf %357, %337 : vector<8x128xf32>
    %372 = arith.addf %370, %371 : vector<8x128xf32>
    %c25 = arith.constant 25 : index
    %c0_145 = arith.constant 0 : index
    %c0_146 = arith.constant 0 : index
    %373 = vector.load %arg4[%c25, %c0_145, %c0_146] : memref<96x8x128xf32, #tpu.memory_space<vmem>>, vector<1x8x128xf32>
    %374 = vector.shape_cast %373 : vector<1x8x128xf32> to vector<8x128xf32>
    %375 = vector.shape_cast %372 : vector<8x128xf32> to vector<1x8x128xf32>
    tpu.vector_store %arg4[%c25, %c0_145, %c0_146], %375 {strides = array<i32>} : memref<96x8x128xf32, #tpu.memory_space<vmem>>, vector<1x8x128xf32>,
    %376 = arith.mulf %353, %318 : vector<8x128xf32>
    %377 = arith.mulf %355, %329 : vector<8x128xf32>
    %378 = arith.addf %376, %377 : vector<8x128xf32>
    %379 = arith.mulf %357, %340 : vector<8x128xf32>
    %380 = arith.addf %378, %379 : vector<8x128xf32>
    %c26 = arith.constant 26 : index
    %c0_147 = arith.constant 0 : index
    %c0_148 = arith.constant 0 : index
    %381 = vector.load %arg4[%c26, %c0_147, %c0_148] : memref<96x8x128xf32, #tpu.memory_space<vmem>>, vector<1x8x128xf32>
    %382 = vector.shape_cast %381 : vector<1x8x128xf32> to vector<8x128xf32>
    %383 = vector.shape_cast %380 : vector<8x128xf32> to vector<1x8x128xf32>
    tpu.vector_store %arg4[%c26, %c0_147, %c0_148], %383 {strides = array<i32>} : memref<96x8x128xf32, #tpu.memory_space<vmem>>, vector<1x8x128xf32>,
    %384 = arith.mulf %353, %345 : vector<8x128xf32>
    %385 = arith.mulf %355, %348 : vector<8x128xf32>
    %386 = arith.addf %384, %385 : vector<8x128xf32>
    %387 = arith.mulf %357, %351 : vector<8x128xf32>
    %388 = arith.addf %386, %387 : vector<8x128xf32>
    %389 = arith.addf %388, %359 : vector<8x128xf32>
    %c27 = arith.constant 27 : index
    %c0_149 = arith.constant 0 : index
    %c0_150 = arith.constant 0 : index
    %390 = vector.load %arg4[%c27, %c0_149, %c0_150] : memref<96x8x128xf32, #tpu.memory_space<vmem>>, vector<1x8x128xf32>
    %391 = vector.shape_cast %390 : vector<1x8x128xf32> to vector<8x128xf32>
    %392 = vector.shape_cast %389 : vector<8x128xf32> to vector<1x8x128xf32>
    tpu.vector_store %arg4[%c27, %c0_149, %c0_150], %392 {strides = array<i32>} : memref<96x8x128xf32, #tpu.memory_space<vmem>>, vector<1x8x128xf32>,
    %c16_151 = arith.constant 16 : index
    %c0_152 = arith.constant 0 : index
    %c0_153 = arith.constant 0 : index
    %393 = vector.load %arg4[%c16_151, %c0_152, %c0_153] : memref<96x8x128xf32, #tpu.memory_space<vmem>>, vector<1x8x128xf32>
    %394 = vector.shape_cast %393 : vector<1x8x128xf32> to vector<8x128xf32>
    %c17_154 = arith.constant 17 : index
    %c0_155 = arith.constant 0 : index
    %c0_156 = arith.constant 0 : index
    %395 = vector.load %arg4[%c17_154, %c0_155, %c0_156] : memref<96x8x128xf32, #tpu.memory_space<vmem>>, vector<1x8x128xf32>
    %396 = vector.shape_cast %395 : vector<1x8x128xf32> to vector<8x128xf32>
    %c18_157 = arith.constant 18 : index
    %c0_158 = arith.constant 0 : index
    %c0_159 = arith.constant 0 : index
    %397 = vector.load %arg4[%c18_157, %c0_158, %c0_159] : memref<96x8x128xf32, #tpu.memory_space<vmem>>, vector<1x8x128xf32>
    %398 = vector.shape_cast %397 : vector<1x8x128xf32> to vector<8x128xf32>
    %c19_160 = arith.constant 19 : index
    %c0_161 = arith.constant 0 : index
    %c0_162 = arith.constant 0 : index
    %399 = vector.load %arg4[%c19_160, %c0_161, %c0_162] : memref<96x8x128xf32, #tpu.memory_space<vmem>>, vector<1x8x128xf32>
    %400 = vector.shape_cast %399 : vector<1x8x128xf32> to vector<8x128xf32>
    %401 = arith.mulf %394, %310 : vector<8x128xf32>
    %402 = arith.mulf %396, %322 : vector<8x128xf32>
    %403 = arith.addf %401, %402 : vector<8x128xf32>
    %404 = arith.mulf %398, %333 : vector<8x128xf32>
    %405 = arith.addf %403, %404 : vector<8x128xf32>
    %c28 = arith.constant 28 : index
    %c0_163 = arith.constant 0 : index
    %c0_164 = arith.constant 0 : index
    %406 = vector.load %arg4[%c28, %c0_163, %c0_164] : memref<96x8x128xf32, #tpu.memory_space<vmem>>, vector<1x8x128xf32>
    %407 = vector.shape_cast %406 : vector<1x8x128xf32> to vector<8x128xf32>
    %408 = vector.shape_cast %405 : vector<8x128xf32> to vector<1x8x128xf32>
    tpu.vector_store %arg4[%c28, %c0_163, %c0_164], %408 {strides = array<i32>} : memref<96x8x128xf32, #tpu.memory_space<vmem>>, vector<1x8x128xf32>,
    %409 = arith.mulf %394, %314 : vector<8x128xf32>
    %410 = arith.mulf %396, %325 : vector<8x128xf32>
    %411 = arith.addf %409, %410 : vector<8x128xf32>
    %412 = arith.mulf %398, %337 : vector<8x128xf32>
    %413 = arith.addf %411, %412 : vector<8x128xf32>
    %c29 = arith.constant 29 : index
    %c0_165 = arith.constant 0 : index
    %c0_166 = arith.constant 0 : index
    %414 = vector.load %arg4[%c29, %c0_165, %c0_166] : memref<96x8x128xf32, #tpu.memory_space<vmem>>, vector<1x8x128xf32>
    %415 = vector.shape_cast %414 : vector<1x8x128xf32> to vector<8x128xf32>
    %416 = vector.shape_cast %413 : vector<8x128xf32> to vector<1x8x128xf32>
    tpu.vector_store %arg4[%c29, %c0_165, %c0_166], %416 {strides = array<i32>} : memref<96x8x128xf32, #tpu.memory_space<vmem>>, vector<1x8x128xf32>,
    %417 = arith.mulf %394, %318 : vector<8x128xf32>
    %418 = arith.mulf %396, %329 : vector<8x128xf32>
    %419 = arith.addf %417, %418 : vector<8x128xf32>
    %420 = arith.mulf %398, %340 : vector<8x128xf32>
    %421 = arith.addf %419, %420 : vector<8x128xf32>
    %c30 = arith.constant 30 : index
    %c0_167 = arith.constant 0 : index
    %c0_168 = arith.constant 0 : index
    %422 = vector.load %arg4[%c30, %c0_167, %c0_168] : memref<96x8x128xf32, #tpu.memory_space<vmem>>, vector<1x8x128xf32>
    %423 = vector.shape_cast %422 : vector<1x8x128xf32> to vector<8x128xf32>
    %424 = vector.shape_cast %421 : vector<8x128xf32> to vector<1x8x128xf32>
    tpu.vector_store %arg4[%c30, %c0_167, %c0_168], %424 {strides = array<i32>} : memref<96x8x128xf32, #tpu.memory_space<vmem>>, vector<1x8x128xf32>,
    %425 = arith.mulf %394, %345 : vector<8x128xf32>
    %426 = arith.mulf %396, %348 : vector<8x128xf32>
    %427 = arith.addf %425, %426 : vector<8x128xf32>
    %428 = arith.mulf %398, %351 : vector<8x128xf32>
    %429 = arith.addf %427, %428 : vector<8x128xf32>
    %430 = arith.addf %429, %400 : vector<8x128xf32>
    %c31 = arith.constant 31 : index
    %c0_169 = arith.constant 0 : index
    %c0_170 = arith.constant 0 : index
    %431 = vector.load %arg4[%c31, %c0_169, %c0_170] : memref<96x8x128xf32, #tpu.memory_space<vmem>>, vector<1x8x128xf32>
    %432 = vector.shape_cast %431 : vector<1x8x128xf32> to vector<8x128xf32>
    %433 = vector.shape_cast %430 : vector<8x128xf32> to vector<1x8x128xf32>
    tpu.vector_store %arg4[%c31, %c0_169, %c0_170], %433 {strides = array<i32>} : memref<96x8x128xf32, #tpu.memory_space<vmem>>, vector<1x8x128xf32>,
    %c20_171 = arith.constant 20 : index
    %c0_172 = arith.constant 0 : index
    %c0_173 = arith.constant 0 : index
    %434 = vector.load %arg4[%c20_171, %c0_172, %c0_173] : memref<96x8x128xf32, #tpu.memory_space<vmem>>, vector<1x8x128xf32>
    %435 = vector.shape_cast %434 : vector<1x8x128xf32> to vector<8x128xf32>
    %c21_174 = arith.constant 21 : index
    %c0_175 = arith.constant 0 : index
    %c0_176 = arith.constant 0 : index
    %436 = vector.load %arg4[%c21_174, %c0_175, %c0_176] : memref<96x8x128xf32, #tpu.memory_space<vmem>>, vector<1x8x128xf32>
    %437 = vector.shape_cast %436 : vector<1x8x128xf32> to vector<8x128xf32>
    %c22_177 = arith.constant 22 : index
    %c0_178 = arith.constant 0 : index
    %c0_179 = arith.constant 0 : index
    %438 = vector.load %arg4[%c22_177, %c0_178, %c0_179] : memref<96x8x128xf32, #tpu.memory_space<vmem>>, vector<1x8x128xf32>
    %439 = vector.shape_cast %438 : vector<1x8x128xf32> to vector<8x128xf32>
    %c23_180 = arith.constant 23 : index
    %c0_181 = arith.constant 0 : index
    %c0_182 = arith.constant 0 : index
    %440 = vector.load %arg4[%c23_180, %c0_181, %c0_182] : memref<96x8x128xf32, #tpu.memory_space<vmem>>, vector<1x8x128xf32>
    %441 = vector.shape_cast %440 : vector<1x8x128xf32> to vector<8x128xf32>
    %442 = arith.mulf %435, %310 : vector<8x128xf32>
    %443 = arith.mulf %437, %322 : vector<8x128xf32>
    %444 = arith.addf %442, %443 : vector<8x128xf32>
    %445 = arith.mulf %439, %333 : vector<8x128xf32>
    %446 = arith.addf %444, %445 : vector<8x128xf32>
    %c32 = arith.constant 32 : index
    %c0_183 = arith.constant 0 : index
    %c0_184 = arith.constant 0 : index
    %447 = vector.load %arg4[%c32, %c0_183, %c0_184] : memref<96x8x128xf32, #tpu.memory_space<vmem>>, vector<1x8x128xf32>
    %448 = vector.shape_cast %447 : vector<1x8x128xf32> to vector<8x128xf32>
    %449 = vector.shape_cast %446 : vector<8x128xf32> to vector<1x8x128xf32>
    tpu.vector_store %arg4[%c32, %c0_183, %c0_184], %449 {strides = array<i32>} : memref<96x8x128xf32, #tpu.memory_space<vmem>>, vector<1x8x128xf32>,
    %450 = arith.mulf %435, %314 : vector<8x128xf32>
    %451 = arith.mulf %437, %325 : vector<8x128xf32>
    %452 = arith.addf %450, %451 : vector<8x128xf32>
    %453 = arith.mulf %439, %337 : vector<8x128xf32>
    %454 = arith.addf %452, %453 : vector<8x128xf32>
    %c33 = arith.constant 33 : index
    %c0_185 = arith.constant 0 : index
    %c0_186 = arith.constant 0 : index
    %455 = vector.load %arg4[%c33, %c0_185, %c0_186] : memref<96x8x128xf32, #tpu.memory_space<vmem>>, vector<1x8x128xf32>
    %456 = vector.shape_cast %455 : vector<1x8x128xf32> to vector<8x128xf32>
    %457 = vector.shape_cast %454 : vector<8x128xf32> to vector<1x8x128xf32>
    tpu.vector_store %arg4[%c33, %c0_185, %c0_186], %457 {strides = array<i32>} : memref<96x8x128xf32, #tpu.memory_space<vmem>>, vector<1x8x128xf32>,
    %458 = arith.mulf %435, %318 : vector<8x128xf32>
    %459 = arith.mulf %437, %329 : vector<8x128xf32>
    %460 = arith.addf %458, %459 : vector<8x128xf32>
    %461 = arith.mulf %439, %340 : vector<8x128xf32>
    %462 = arith.addf %460, %461 : vector<8x128xf32>
    %c34 = arith.constant 34 : index
    %c0_187 = arith.constant 0 : index
    %c0_188 = arith.constant 0 : index
    %463 = vector.load %arg4[%c34, %c0_187, %c0_188] : memref<96x8x128xf32, #tpu.memory_space<vmem>>, vector<1x8x128xf32>
    %464 = vector.shape_cast %463 : vector<1x8x128xf32> to vector<8x128xf32>
    %465 = vector.shape_cast %462 : vector<8x128xf32> to vector<1x8x128xf32>
    tpu.vector_store %arg4[%c34, %c0_187, %c0_188], %465 {strides = array<i32>} : memref<96x8x128xf32, #tpu.memory_space<vmem>>, vector<1x8x128xf32>,
    %466 = arith.mulf %435, %345 : vector<8x128xf32>
    %467 = arith.mulf %437, %348 : vector<8x128xf32>
    %468 = arith.addf %466, %467 : vector<8x128xf32>
    %469 = arith.mulf %439, %351 : vector<8x128xf32>
    %470 = arith.addf %468, %469 : vector<8x128xf32>
    %471 = arith.addf %470, %441 : vector<8x128xf32>
    %c35 = arith.constant 35 : index
    %c0_189 = arith.constant 0 : index
    %c0_190 = arith.constant 0 : index
    %472 = vector.load %arg4[%c35, %c0_189, %c0_190] : memref<96x8x128xf32, #tpu.memory_space<vmem>>, vector<1x8x128xf32>
    %473 = vector.shape_cast %472 : vector<1x8x128xf32> to vector<8x128xf32>
    %474 = vector.shape_cast %471 : vector<8x128xf32> to vector<1x8x128xf32>
    tpu.vector_store %arg4[%c35, %c0_189, %c0_190], %474 {strides = array<i32>} : memref<96x8x128xf32, #tpu.memory_space<vmem>>, vector<1x8x128xf32>,
    %c9_191 = arith.constant 9 : index
    %c0_192 = arith.constant 0 : index
    %c0_193 = arith.constant 0 : index
    %475 = vector.load %arg1[%c9_191, %c0_192, %c0_193] : memref<24x8x128xf32, #tpu.memory_space<vmem>>, vector<1x8x128xf32>
    %476 = vector.shape_cast %475 : vector<1x8x128xf32> to vector<8x128xf32>
    %c10_194 = arith.constant 10 : index
    %c0_195 = arith.constant 0 : index
    %c0_196 = arith.constant 0 : index
    %477 = vector.load %arg1[%c10_194, %c0_195, %c0_196] : memref<24x8x128xf32, #tpu.memory_space<vmem>>, vector<1x8x128xf32>
    %478 = vector.shape_cast %477 : vector<1x8x128xf32> to vector<8x128xf32>
    %c11_197 = arith.constant 11 : index
    %c0_198 = arith.constant 0 : index
    %c0_199 = arith.constant 0 : index
    %479 = vector.load %arg1[%c11_197, %c0_198, %c0_199] : memref<24x8x128xf32, #tpu.memory_space<vmem>>, vector<1x8x128xf32>
    %480 = vector.shape_cast %479 : vector<1x8x128xf32> to vector<8x128xf32>
    %481 = arith.mulf %476, %476 : vector<8x128xf32>
    %482 = arith.mulf %478, %478 : vector<8x128xf32>
    %483 = arith.addf %481, %482 : vector<8x128xf32>
    %484 = arith.mulf %480, %480 : vector<8x128xf32>
    %485 = arith.addf %483, %484 : vector<8x128xf32>
    %cst_200 = arith.constant 9.99999996E-13 : f32
    %486 = vector.broadcast %cst_200 : f32 to vector<8x128xf32>
    %487 = arith.addf %485, %486 : vector<8x128xf32>
    %488 = math.rsqrt %487 : vector<8x128xf32>
    %489 = arith.mulf %487, %488 : vector<8x128xf32>
    %490 = math.sin %489 : vector<8x128xf32>
    %491 = math.cos %489 : vector<8x128xf32>
    %cst_201 = arith.constant 1.000000e+00 : f32
    %492 = vector.broadcast %cst_201 : f32 to vector<8x128xf32>
    %493 = arith.subf %492, %491 : vector<8x128xf32>
    %494 = arith.mulf %476, %488 : vector<8x128xf32>
    %495 = arith.mulf %478, %488 : vector<8x128xf32>
    %496 = arith.mulf %480, %488 : vector<8x128xf32>
    %497 = arith.mulf %494, %494 : vector<8x128xf32>
    %498 = arith.mulf %497, %493 : vector<8x128xf32>
    %499 = arith.addf %491, %498 : vector<8x128xf32>
    %500 = arith.mulf %494, %495 : vector<8x128xf32>
    %501 = arith.mulf %500, %493 : vector<8x128xf32>
    %502 = arith.mulf %496, %490 : vector<8x128xf32>
    %503 = arith.subf %501, %502 : vector<8x128xf32>
    %504 = arith.mulf %494, %496 : vector<8x128xf32>
    %505 = arith.mulf %504, %493 : vector<8x128xf32>
    %506 = arith.mulf %495, %490 : vector<8x128xf32>
    %507 = arith.addf %505, %506 : vector<8x128xf32>
    %508 = arith.mulf %495, %494 : vector<8x128xf32>
    %509 = arith.mulf %508, %493 : vector<8x128xf32>
    %510 = arith.mulf %496, %490 : vector<8x128xf32>
    %511 = arith.addf %509, %510 : vector<8x128xf32>
    %512 = arith.mulf %495, %495 : vector<8x128xf32>
    %513 = arith.mulf %512, %493 : vector<8x128xf32>
    %514 = arith.addf %491, %513 : vector<8x128xf32>
    %515 = arith.mulf %495, %496 : vector<8x128xf32>
    %516 = arith.mulf %515, %493 : vector<8x128xf32>
    %517 = arith.mulf %494, %490 : vector<8x128xf32>
    %518 = arith.subf %516, %517 : vector<8x128xf32>
    %519 = arith.mulf %496, %494 : vector<8x128xf32>
    %520 = arith.mulf %519, %493 : vector<8x128xf32>
    %521 = arith.mulf %495, %490 : vector<8x128xf32>
    %522 = arith.subf %520, %521 : vector<8x128xf32>
    %523 = arith.mulf %496, %495 : vector<8x128xf32>
    %524 = arith.mulf %523, %493 : vector<8x128xf32>
    %525 = arith.mulf %494, %490 : vector<8x128xf32>
    %526 = arith.addf %524, %525 : vector<8x128xf32>
    %527 = arith.mulf %496, %496 : vector<8x128xf32>
    %528 = arith.mulf %527, %493 : vector<8x128xf32>
    %529 = arith.addf %491, %528 : vector<8x128xf32>
    %c2_202 = arith.constant 2 : index
    %c0_203 = arith.constant 0 : index
    %c0_204 = arith.constant 0 : index
    %530 = vector.load %arg3[%c2_202, %c0_203, %c0_204] : memref<7x8x128xf32, #tpu.memory_space<vmem>>, vector<1x8x128xf32>
    %531 = vector.shape_cast %530 : vector<1x8x128xf32> to vector<8x128xf32>
    %c9_205 = arith.constant 9 : index
    %532 = memref.load %arg2[%c9_205] : memref<24xf32, #tpu.memory_space<smem>>
    %533 = vector.broadcast %532 : f32 to vector<8x128xf32>
    %534 = arith.mulf %533, %531 : vector<8x128xf32>
    %c10_206 = arith.constant 10 : index
    %535 = memref.load %arg2[%c10_206] : memref<24xf32, #tpu.memory_space<smem>>
    %536 = vector.broadcast %535 : f32 to vector<8x128xf32>
    %537 = arith.mulf %536, %531 : vector<8x128xf32>
    %c11_207 = arith.constant 11 : index
    %538 = memref.load %arg2[%c11_207] : memref<24xf32, #tpu.memory_space<smem>>
    %539 = vector.broadcast %538 : f32 to vector<8x128xf32>
    %540 = arith.mulf %539, %531 : vector<8x128xf32>
    %c24_208 = arith.constant 24 : index
    %c0_209 = arith.constant 0 : index
    %c0_210 = arith.constant 0 : index
    %541 = vector.load %arg4[%c24_208, %c0_209, %c0_210] : memref<96x8x128xf32, #tpu.memory_space<vmem>>, vector<1x8x128xf32>
    %542 = vector.shape_cast %541 : vector<1x8x128xf32> to vector<8x128xf32>
    %c25_211 = arith.constant 25 : index
    %c0_212 = arith.constant 0 : index
    %c0_213 = arith.constant 0 : index
    %543 = vector.load %arg4[%c25_211, %c0_212, %c0_213] : memref<96x8x128xf32, #tpu.memory_space<vmem>>, vector<1x8x128xf32>
    %544 = vector.shape_cast %543 : vector<1x8x128xf32> to vector<8x128xf32>
    %c26_214 = arith.constant 26 : index
    %c0_215 = arith.constant 0 : index
    %c0_216 = arith.constant 0 : index
    %545 = vector.load %arg4[%c26_214, %c0_215, %c0_216] : memref<96x8x128xf32, #tpu.memory_space<vmem>>, vector<1x8x128xf32>
    %546 = vector.shape_cast %545 : vector<1x8x128xf32> to vector<8x128xf32>
    %c27_217 = arith.constant 27 : index
    %c0_218 = arith.constant 0 : index
    %c0_219 = arith.constant 0 : index
    %547 = vector.load %arg4[%c27_217, %c0_218, %c0_219] : memref<96x8x128xf32, #tpu.memory_space<vmem>>, vector<1x8x128xf32>
    %548 = vector.shape_cast %547 : vector<1x8x128xf32> to vector<8x128xf32>
    %549 = arith.mulf %542, %499 : vector<8x128xf32>
    %550 = arith.mulf %544, %511 : vector<8x128xf32>
    %551 = arith.addf %549, %550 : vector<8x128xf32>
    %552 = arith.mulf %546, %522 : vector<8x128xf32>
    %553 = arith.addf %551, %552 : vector<8x128xf32>
    %c36 = arith.constant 36 : index
    %c0_220 = arith.constant 0 : index
    %c0_221 = arith.constant 0 : index
    %554 = vector.load %arg4[%c36, %c0_220, %c0_221] : memref<96x8x128xf32, #tpu.memory_space<vmem>>, vector<1x8x128xf32>
    %555 = vector.shape_cast %554 : vector<1x8x128xf32> to vector<8x128xf32>
    %556 = vector.shape_cast %553 : vector<8x128xf32> to vector<1x8x128xf32>
    tpu.vector_store %arg4[%c36, %c0_220, %c0_221], %556 {strides = array<i32>} : memref<96x8x128xf32, #tpu.memory_space<vmem>>, vector<1x8x128xf32>,
    %557 = arith.mulf %542, %503 : vector<8x128xf32>
    %558 = arith.mulf %544, %514 : vector<8x128xf32>
    %559 = arith.addf %557, %558 : vector<8x128xf32>
    %560 = arith.mulf %546, %526 : vector<8x128xf32>
    %561 = arith.addf %559, %560 : vector<8x128xf32>
    %c37 = arith.constant 37 : index
    %c0_222 = arith.constant 0 : index
    %c0_223 = arith.constant 0 : index
    %562 = vector.load %arg4[%c37, %c0_222, %c0_223] : memref<96x8x128xf32, #tpu.memory_space<vmem>>, vector<1x8x128xf32>
    %563 = vector.shape_cast %562 : vector<1x8x128xf32> to vector<8x128xf32>
    %564 = vector.shape_cast %561 : vector<8x128xf32> to vector<1x8x128xf32>
    tpu.vector_store %arg4[%c37, %c0_222, %c0_223], %564 {strides = array<i32>} : memref<96x8x128xf32, #tpu.memory_space<vmem>>, vector<1x8x128xf32>,
    %565 = arith.mulf %542, %507 : vector<8x128xf32>
    %566 = arith.mulf %544, %518 : vector<8x128xf32>
    %567 = arith.addf %565, %566 : vector<8x128xf32>
    %568 = arith.mulf %546, %529 : vector<8x128xf32>
    %569 = arith.addf %567, %568 : vector<8x128xf32>
    %c38 = arith.constant 38 : index
    %c0_224 = arith.constant 0 : index
    %c0_225 = arith.constant 0 : index
    %570 = vector.load %arg4[%c38, %c0_224, %c0_225] : memref<96x8x128xf32, #tpu.memory_space<vmem>>, vector<1x8x128xf32>
    %571 = vector.shape_cast %570 : vector<1x8x128xf32> to vector<8x128xf32>
    %572 = vector.shape_cast %569 : vector<8x128xf32> to vector<1x8x128xf32>
    tpu.vector_store %arg4[%c38, %c0_224, %c0_225], %572 {strides = array<i32>} : memref<96x8x128xf32, #tpu.memory_space<vmem>>, vector<1x8x128xf32>,
    %573 = arith.mulf %542, %534 : vector<8x128xf32>
    %574 = arith.mulf %544, %537 : vector<8x128xf32>
    %575 = arith.addf %573, %574 : vector<8x128xf32>
    %576 = arith.mulf %546, %540 : vector<8x128xf32>
    %577 = arith.addf %575, %576 : vector<8x128xf32>
    %578 = arith.addf %577, %548 : vector<8x128xf32>
    %c39 = arith.constant 39 : index
    %c0_226 = arith.constant 0 : index
    %c0_227 = arith.constant 0 : index
    %579 = vector.load %arg4[%c39, %c0_226, %c0_227] : memref<96x8x128xf32, #tpu.memory_space<vmem>>, vector<1x8x128xf32>
    %580 = vector.shape_cast %579 : vector<1x8x128xf32> to vector<8x128xf32>
    %581 = vector.shape_cast %578 : vector<8x128xf32> to vector<1x8x128xf32>
    tpu.vector_store %arg4[%c39, %c0_226, %c0_227], %581 {strides = array<i32>} : memref<96x8x128xf32, #tpu.memory_space<vmem>>, vector<1x8x128xf32>,
    %c28_228 = arith.constant 28 : index
    %c0_229 = arith.constant 0 : index
    %c0_230 = arith.constant 0 : index
    %582 = vector.load %arg4[%c28_228, %c0_229, %c0_230] : memref<96x8x128xf32, #tpu.memory_space<vmem>>, vector<1x8x128xf32>
    %583 = vector.shape_cast %582 : vector<1x8x128xf32> to vector<8x128xf32>
    %c29_231 = arith.constant 29 : index
    %c0_232 = arith.constant 0 : index
    %c0_233 = arith.constant 0 : index
    %584 = vector.load %arg4[%c29_231, %c0_232, %c0_233] : memref<96x8x128xf32, #tpu.memory_space<vmem>>, vector<1x8x128xf32>
    %585 = vector.shape_cast %584 : vector<1x8x128xf32> to vector<8x128xf32>
    %c30_234 = arith.constant 30 : index
    %c0_235 = arith.constant 0 : index
    %c0_236 = arith.constant 0 : index
    %586 = vector.load %arg4[%c30_234, %c0_235, %c0_236] : memref<96x8x128xf32, #tpu.memory_space<vmem>>, vector<1x8x128xf32>
    %587 = vector.shape_cast %586 : vector<1x8x128xf32> to vector<8x128xf32>
    %c31_237 = arith.constant 31 : index
    %c0_238 = arith.constant 0 : index
    %c0_239 = arith.constant 0 : index
    %588 = vector.load %arg4[%c31_237, %c0_238, %c0_239] : memref<96x8x128xf32, #tpu.memory_space<vmem>>, vector<1x8x128xf32>
    %589 = vector.shape_cast %588 : vector<1x8x128xf32> to vector<8x128xf32>
    %590 = arith.mulf %583, %499 : vector<8x128xf32>
    %591 = arith.mulf %585, %511 : vector<8x128xf32>
    %592 = arith.addf %590, %591 : vector<8x128xf32>
    %593 = arith.mulf %587, %522 : vector<8x128xf32>
    %594 = arith.addf %592, %593 : vector<8x128xf32>
    %c40 = arith.constant 40 : index
    %c0_240 = arith.constant 0 : index
    %c0_241 = arith.constant 0 : index
    %595 = vector.load %arg4[%c40, %c0_240, %c0_241] : memref<96x8x128xf32, #tpu.memory_space<vmem>>, vector<1x8x128xf32>
    %596 = vector.shape_cast %595 : vector<1x8x128xf32> to vector<8x128xf32>
    %597 = vector.shape_cast %594 : vector<8x128xf32> to vector<1x8x128xf32>
    tpu.vector_store %arg4[%c40, %c0_240, %c0_241], %597 {strides = array<i32>} : memref<96x8x128xf32, #tpu.memory_space<vmem>>, vector<1x8x128xf32>,
    %598 = arith.mulf %583, %503 : vector<8x128xf32>
    %599 = arith.mulf %585, %514 : vector<8x128xf32>
    %600 = arith.addf %598, %599 : vector<8x128xf32>
    %601 = arith.mulf %587, %526 : vector<8x128xf32>
    %602 = arith.addf %600, %601 : vector<8x128xf32>
    %c41 = arith.constant 41 : index
    %c0_242 = arith.constant 0 : index
    %c0_243 = arith.constant 0 : index
    %603 = vector.load %arg4[%c41, %c0_242, %c0_243] : memref<96x8x128xf32, #tpu.memory_space<vmem>>, vector<1x8x128xf32>
    %604 = vector.shape_cast %603 : vector<1x8x128xf32> to vector<8x128xf32>
    %605 = vector.shape_cast %602 : vector<8x128xf32> to vector<1x8x128xf32>
    tpu.vector_store %arg4[%c41, %c0_242, %c0_243], %605 {strides = array<i32>} : memref<96x8x128xf32, #tpu.memory_space<vmem>>, vector<1x8x128xf32>,
    %606 = arith.mulf %583, %507 : vector<8x128xf32>
    %607 = arith.mulf %585, %518 : vector<8x128xf32>
    %608 = arith.addf %606, %607 : vector<8x128xf32>
    %609 = arith.mulf %587, %529 : vector<8x128xf32>
    %610 = arith.addf %608, %609 : vector<8x128xf32>
    %c42 = arith.constant 42 : index
    %c0_244 = arith.constant 0 : index
    %c0_245 = arith.constant 0 : index
    %611 = vector.load %arg4[%c42, %c0_244, %c0_245] : memref<96x8x128xf32, #tpu.memory_space<vmem>>, vector<1x8x128xf32>
    %612 = vector.shape_cast %611 : vector<1x8x128xf32> to vector<8x128xf32>
    %613 = vector.shape_cast %610 : vector<8x128xf32> to vector<1x8x128xf32>
    tpu.vector_store %arg4[%c42, %c0_244, %c0_245], %613 {strides = array<i32>} : memref<96x8x128xf32, #tpu.memory_space<vmem>>, vector<1x8x128xf32>,
    %614 = arith.mulf %583, %534 : vector<8x128xf32>
    %615 = arith.mulf %585, %537 : vector<8x128xf32>
    %616 = arith.addf %614, %615 : vector<8x128xf32>
    %617 = arith.mulf %587, %540 : vector<8x128xf32>
    %618 = arith.addf %616, %617 : vector<8x128xf32>
    %619 = arith.addf %618, %589 : vector<8x128xf32>
    %c43 = arith.constant 43 : index
    %c0_246 = arith.constant 0 : index
    %c0_247 = arith.constant 0 : index
    %620 = vector.load %arg4[%c43, %c0_246, %c0_247] : memref<96x8x128xf32, #tpu.memory_space<vmem>>, vector<1x8x128xf32>
    %621 = vector.shape_cast %620 : vector<1x8x128xf32> to vector<8x128xf32>
    %622 = vector.shape_cast %619 : vector<8x128xf32> to vector<1x8x128xf32>
    tpu.vector_store %arg4[%c43, %c0_246, %c0_247], %622 {strides = array<i32>} : memref<96x8x128xf32, #tpu.memory_space<vmem>>, vector<1x8x128xf32>,
    %c32_248 = arith.constant 32 : index
    %c0_249 = arith.constant 0 : index
    %c0_250 = arith.constant 0 : index
    %623 = vector.load %arg4[%c32_248, %c0_249, %c0_250] : memref<96x8x128xf32, #tpu.memory_space<vmem>>, vector<1x8x128xf32>
    %624 = vector.shape_cast %623 : vector<1x8x128xf32> to vector<8x128xf32>
    %c33_251 = arith.constant 33 : index
    %c0_252 = arith.constant 0 : index
    %c0_253 = arith.constant 0 : index
    %625 = vector.load %arg4[%c33_251, %c0_252, %c0_253] : memref<96x8x128xf32, #tpu.memory_space<vmem>>, vector<1x8x128xf32>
    %626 = vector.shape_cast %625 : vector<1x8x128xf32> to vector<8x128xf32>
    %c34_254 = arith.constant 34 : index
    %c0_255 = arith.constant 0 : index
    %c0_256 = arith.constant 0 : index
    %627 = vector.load %arg4[%c34_254, %c0_255, %c0_256] : memref<96x8x128xf32, #tpu.memory_space<vmem>>, vector<1x8x128xf32>
    %628 = vector.shape_cast %627 : vector<1x8x128xf32> to vector<8x128xf32>
    %c35_257 = arith.constant 35 : index
    %c0_258 = arith.constant 0 : index
    %c0_259 = arith.constant 0 : index
    %629 = vector.load %arg4[%c35_257, %c0_258, %c0_259] : memref<96x8x128xf32, #tpu.memory_space<vmem>>, vector<1x8x128xf32>
    %630 = vector.shape_cast %629 : vector<1x8x128xf32> to vector<8x128xf32>
    %631 = arith.mulf %624, %499 : vector<8x128xf32>
    %632 = arith.mulf %626, %511 : vector<8x128xf32>
    %633 = arith.addf %631, %632 : vector<8x128xf32>
    %634 = arith.mulf %628, %522 : vector<8x128xf32>
    %635 = arith.addf %633, %634 : vector<8x128xf32>
    %c44 = arith.constant 44 : index
    %c0_260 = arith.constant 0 : index
    %c0_261 = arith.constant 0 : index
    %636 = vector.load %arg4[%c44, %c0_260, %c0_261] : memref<96x8x128xf32, #tpu.memory_space<vmem>>, vector<1x8x128xf32>
    %637 = vector.shape_cast %636 : vector<1x8x128xf32> to vector<8x128xf32>
    %638 = vector.shape_cast %635 : vector<8x128xf32> to vector<1x8x128xf32>
    tpu.vector_store %arg4[%c44, %c0_260, %c0_261], %638 {strides = array<i32>} : memref<96x8x128xf32, #tpu.memory_space<vmem>>, vector<1x8x128xf32>,
    %639 = arith.mulf %624, %503 : vector<8x128xf32>
    %640 = arith.mulf %626, %514 : vector<8x128xf32>
    %641 = arith.addf %639, %640 : vector<8x128xf32>
    %642 = arith.mulf %628, %526 : vector<8x128xf32>
    %643 = arith.addf %641, %642 : vector<8x128xf32>
    %c45 = arith.constant 45 : index
    %c0_262 = arith.constant 0 : index
    %c0_263 = arith.constant 0 : index
    %644 = vector.load %arg4[%c45, %c0_262, %c0_263] : memref<96x8x128xf32, #tpu.memory_space<vmem>>, vector<1x8x128xf32>
    %645 = vector.shape_cast %644 : vector<1x8x128xf32> to vector<8x128xf32>
    %646 = vector.shape_cast %643 : vector<8x128xf32> to vector<1x8x128xf32>
    tpu.vector_store %arg4[%c45, %c0_262, %c0_263], %646 {strides = array<i32>} : memref<96x8x128xf32, #tpu.memory_space<vmem>>, vector<1x8x128xf32>,
    %647 = arith.mulf %624, %507 : vector<8x128xf32>
    %648 = arith.mulf %626, %518 : vector<8x128xf32>
    %649 = arith.addf %647, %648 : vector<8x128xf32>
    %650 = arith.mulf %628, %529 : vector<8x128xf32>
    %651 = arith.addf %649, %650 : vector<8x128xf32>
    %c46 = arith.constant 46 : index
    %c0_264 = arith.constant 0 : index
    %c0_265 = arith.constant 0 : index
    %652 = vector.load %arg4[%c46, %c0_264, %c0_265] : memref<96x8x128xf32, #tpu.memory_space<vmem>>, vector<1x8x128xf32>
    %653 = vector.shape_cast %652 : vector<1x8x128xf32> to vector<8x128xf32>
    %654 = vector.shape_cast %651 : vector<8x128xf32> to vector<1x8x128xf32>
    tpu.vector_store %arg4[%c46, %c0_264, %c0_265], %654 {strides = array<i32>} : memref<96x8x128xf32, #tpu.memory_space<vmem>>, vector<1x8x128xf32>,
    %655 = arith.mulf %624, %534 : vector<8x128xf32>
    %656 = arith.mulf %626, %537 : vector<8x128xf32>
    %657 = arith.addf %655, %656 : vector<8x128xf32>
    %658 = arith.mulf %628, %540 : vector<8x128xf32>
    %659 = arith.addf %657, %658 : vector<8x128xf32>
    %660 = arith.addf %659, %630 : vector<8x128xf32>
    %c47 = arith.constant 47 : index
    %c0_266 = arith.constant 0 : index
    %c0_267 = arith.constant 0 : index
    %661 = vector.load %arg4[%c47, %c0_266, %c0_267] : memref<96x8x128xf32, #tpu.memory_space<vmem>>, vector<1x8x128xf32>
    %662 = vector.shape_cast %661 : vector<1x8x128xf32> to vector<8x128xf32>
    %663 = vector.shape_cast %660 : vector<8x128xf32> to vector<1x8x128xf32>
    tpu.vector_store %arg4[%c47, %c0_266, %c0_267], %663 {strides = array<i32>} : memref<96x8x128xf32, #tpu.memory_space<vmem>>, vector<1x8x128xf32>,
    %c12_268 = arith.constant 12 : index
    %c0_269 = arith.constant 0 : index
    %c0_270 = arith.constant 0 : index
    %664 = vector.load %arg1[%c12_268, %c0_269, %c0_270] : memref<24x8x128xf32, #tpu.memory_space<vmem>>, vector<1x8x128xf32>
    %665 = vector.shape_cast %664 : vector<1x8x128xf32> to vector<8x128xf32>
    %c13_271 = arith.constant 13 : index
    %c0_272 = arith.constant 0 : index
    %c0_273 = arith.constant 0 : index
    %666 = vector.load %arg1[%c13_271, %c0_272, %c0_273] : memref<24x8x128xf32, #tpu.memory_space<vmem>>, vector<1x8x128xf32>
    %667 = vector.shape_cast %666 : vector<1x8x128xf32> to vector<8x128xf32>
    %c14_274 = arith.constant 14 : index
    %c0_275 = arith.constant 0 : index
    %c0_276 = arith.constant 0 : index
    %668 = vector.load %arg1[%c14_274, %c0_275, %c0_276] : memref<24x8x128xf32, #tpu.memory_space<vmem>>, vector<1x8x128xf32>
    %669 = vector.shape_cast %668 : vector<1x8x128xf32> to vector<8x128xf32>
    %670 = arith.mulf %665, %665 : vector<8x128xf32>
    %671 = arith.mulf %667, %667 : vector<8x128xf32>
    %672 = arith.addf %670, %671 : vector<8x128xf32>
    %673 = arith.mulf %669, %669 : vector<8x128xf32>
    %674 = arith.addf %672, %673 : vector<8x128xf32>
    %cst_277 = arith.constant 9.99999996E-13 : f32
    %675 = vector.broadcast %cst_277 : f32 to vector<8x128xf32>
    %676 = arith.addf %674, %675 : vector<8x128xf32>
    %677 = math.rsqrt %676 : vector<8x128xf32>
    %678 = arith.mulf %676, %677 : vector<8x128xf32>
    %679 = math.sin %678 : vector<8x128xf32>
    %680 = math.cos %678 : vector<8x128xf32>
    %cst_278 = arith.constant 1.000000e+00 : f32
    %681 = vector.broadcast %cst_278 : f32 to vector<8x128xf32>
    %682 = arith.subf %681, %680 : vector<8x128xf32>
    %683 = arith.mulf %665, %677 : vector<8x128xf32>
    %684 = arith.mulf %667, %677 : vector<8x128xf32>
    %685 = arith.mulf %669, %677 : vector<8x128xf32>
    %686 = arith.mulf %683, %683 : vector<8x128xf32>
    %687 = arith.mulf %686, %682 : vector<8x128xf32>
    %688 = arith.addf %680, %687 : vector<8x128xf32>
    %689 = arith.mulf %683, %684 : vector<8x128xf32>
    %690 = arith.mulf %689, %682 : vector<8x128xf32>
    %691 = arith.mulf %685, %679 : vector<8x128xf32>
    %692 = arith.subf %690, %691 : vector<8x128xf32>
    %693 = arith.mulf %683, %685 : vector<8x128xf32>
    %694 = arith.mulf %693, %682 : vector<8x128xf32>
    %695 = arith.mulf %684, %679 : vector<8x128xf32>
    %696 = arith.addf %694, %695 : vector<8x128xf32>
    %697 = arith.mulf %684, %683 : vector<8x128xf32>
    %698 = arith.mulf %697, %682 : vector<8x128xf32>
    %699 = arith.mulf %685, %679 : vector<8x128xf32>
    %700 = arith.addf %698, %699 : vector<8x128xf32>
    %701 = arith.mulf %684, %684 : vector<8x128xf32>
    %702 = arith.mulf %701, %682 : vector<8x128xf32>
    %703 = arith.addf %680, %702 : vector<8x128xf32>
    %704 = arith.mulf %684, %685 : vector<8x128xf32>
    %705 = arith.mulf %704, %682 : vector<8x128xf32>
    %706 = arith.mulf %683, %679 : vector<8x128xf32>
    %707 = arith.subf %705, %706 : vector<8x128xf32>
    %708 = arith.mulf %685, %683 : vector<8x128xf32>
    %709 = arith.mulf %708, %682 : vector<8x128xf32>
    %710 = arith.mulf %684, %679 : vector<8x128xf32>
    %711 = arith.subf %709, %710 : vector<8x128xf32>
    %712 = arith.mulf %685, %684 : vector<8x128xf32>
    %713 = arith.mulf %712, %682 : vector<8x128xf32>
    %714 = arith.mulf %683, %679 : vector<8x128xf32>
    %715 = arith.addf %713, %714 : vector<8x128xf32>
    %716 = arith.mulf %685, %685 : vector<8x128xf32>
    %717 = arith.mulf %716, %682 : vector<8x128xf32>
    %718 = arith.addf %680, %717 : vector<8x128xf32>
    %c3_279 = arith.constant 3 : index
    %c0_280 = arith.constant 0 : index
    %c0_281 = arith.constant 0 : index
    %719 = vector.load %arg3[%c3_279, %c0_280, %c0_281] : memref<7x8x128xf32, #tpu.memory_space<vmem>>, vector<1x8x128xf32>
    %720 = vector.shape_cast %719 : vector<1x8x128xf32> to vector<8x128xf32>
    %c12_282 = arith.constant 12 : index
    %721 = memref.load %arg2[%c12_282] : memref<24xf32, #tpu.memory_space<smem>>
    %722 = vector.broadcast %721 : f32 to vector<8x128xf32>
    %723 = arith.mulf %722, %720 : vector<8x128xf32>
    %c13_283 = arith.constant 13 : index
    %724 = memref.load %arg2[%c13_283] : memref<24xf32, #tpu.memory_space<smem>>
    %725 = vector.broadcast %724 : f32 to vector<8x128xf32>
    %726 = arith.mulf %725, %720 : vector<8x128xf32>
    %c14_284 = arith.constant 14 : index
    %727 = memref.load %arg2[%c14_284] : memref<24xf32, #tpu.memory_space<smem>>
    %728 = vector.broadcast %727 : f32 to vector<8x128xf32>
    %729 = arith.mulf %728, %720 : vector<8x128xf32>
    %c0_285 = arith.constant 0 : index
    %c0_286 = arith.constant 0 : index
    %c0_287 = arith.constant 0 : index
    %730 = vector.load %arg4[%c0_285, %c0_286, %c0_287] : memref<96x8x128xf32, #tpu.memory_space<vmem>>, vector<1x8x128xf32>
    %731 = vector.shape_cast %730 : vector<1x8x128xf32> to vector<8x128xf32>
    %c1_288 = arith.constant 1 : index
    %c0_289 = arith.constant 0 : index
    %c0_290 = arith.constant 0 : index
    %732 = vector.load %arg4[%c1_288, %c0_289, %c0_290] : memref<96x8x128xf32, #tpu.memory_space<vmem>>, vector<1x8x128xf32>
    %733 = vector.shape_cast %732 : vector<1x8x128xf32> to vector<8x128xf32>
    %c2_291 = arith.constant 2 : index
    %c0_292 = arith.constant 0 : index
    %c0_293 = arith.constant 0 : index
    %734 = vector.load %arg4[%c2_291, %c0_292, %c0_293] : memref<96x8x128xf32, #tpu.memory_space<vmem>>, vector<1x8x128xf32>
    %735 = vector.shape_cast %734 : vector<1x8x128xf32> to vector<8x128xf32>
    %c3_294 = arith.constant 3 : index
    %c0_295 = arith.constant 0 : index
    %c0_296 = arith.constant 0 : index
    %736 = vector.load %arg4[%c3_294, %c0_295, %c0_296] : memref<96x8x128xf32, #tpu.memory_space<vmem>>, vector<1x8x128xf32>
    %737 = vector.shape_cast %736 : vector<1x8x128xf32> to vector<8x128xf32>
    %738 = arith.mulf %731, %688 : vector<8x128xf32>
    %739 = arith.mulf %733, %700 : vector<8x128xf32>
    %740 = arith.addf %738, %739 : vector<8x128xf32>
    %741 = arith.mulf %735, %711 : vector<8x128xf32>
    %742 = arith.addf %740, %741 : vector<8x128xf32>
    %c48 = arith.constant 48 : index
    %c0_297 = arith.constant 0 : index
    %c0_298 = arith.constant 0 : index
    %743 = vector.load %arg4[%c48, %c0_297, %c0_298] : memref<96x8x128xf32, #tpu.memory_space<vmem>>, vector<1x8x128xf32>
    %744 = vector.shape_cast %743 : vector<1x8x128xf32> to vector<8x128xf32>
    %745 = vector.shape_cast %742 : vector<8x128xf32> to vector<1x8x128xf32>
    tpu.vector_store %arg4[%c48, %c0_297, %c0_298], %745 {strides = array<i32>} : memref<96x8x128xf32, #tpu.memory_space<vmem>>, vector<1x8x128xf32>,
    %746 = arith.mulf %731, %692 : vector<8x128xf32>
    %747 = arith.mulf %733, %703 : vector<8x128xf32>
    %748 = arith.addf %746, %747 : vector<8x128xf32>
    %749 = arith.mulf %735, %715 : vector<8x128xf32>
    %750 = arith.addf %748, %749 : vector<8x128xf32>
    %c49 = arith.constant 49 : index
    %c0_299 = arith.constant 0 : index
    %c0_300 = arith.constant 0 : index
    %751 = vector.load %arg4[%c49, %c0_299, %c0_300] : memref<96x8x128xf32, #tpu.memory_space<vmem>>, vector<1x8x128xf32>
    %752 = vector.shape_cast %751 : vector<1x8x128xf32> to vector<8x128xf32>
    %753 = vector.shape_cast %750 : vector<8x128xf32> to vector<1x8x128xf32>
    tpu.vector_store %arg4[%c49, %c0_299, %c0_300], %753 {strides = array<i32>} : memref<96x8x128xf32, #tpu.memory_space<vmem>>, vector<1x8x128xf32>,
    %754 = arith.mulf %731, %696 : vector<8x128xf32>
    %755 = arith.mulf %733, %707 : vector<8x128xf32>
    %756 = arith.addf %754, %755 : vector<8x128xf32>
    %757 = arith.mulf %735, %718 : vector<8x128xf32>
    %758 = arith.addf %756, %757 : vector<8x128xf32>
    %c50 = arith.constant 50 : index
    %c0_301 = arith.constant 0 : index
    %c0_302 = arith.constant 0 : index
    %759 = vector.load %arg4[%c50, %c0_301, %c0_302] : memref<96x8x128xf32, #tpu.memory_space<vmem>>, vector<1x8x128xf32>
    %760 = vector.shape_cast %759 : vector<1x8x128xf32> to vector<8x128xf32>
    %761 = vector.shape_cast %758 : vector<8x128xf32> to vector<1x8x128xf32>
    tpu.vector_store %arg4[%c50, %c0_301, %c0_302], %761 {strides = array<i32>} : memref<96x8x128xf32, #tpu.memory_space<vmem>>, vector<1x8x128xf32>,
    %762 = arith.mulf %731, %723 : vector<8x128xf32>
    %763 = arith.mulf %733, %726 : vector<8x128xf32>
    %764 = arith.addf %762, %763 : vector<8x128xf32>
    %765 = arith.mulf %735, %729 : vector<8x128xf32>
    %766 = arith.addf %764, %765 : vector<8x128xf32>
    %767 = arith.addf %766, %737 : vector<8x128xf32>
    %c51 = arith.constant 51 : index
    %c0_303 = arith.constant 0 : index
    %c0_304 = arith.constant 0 : index
    %768 = vector.load %arg4[%c51, %c0_303, %c0_304] : memref<96x8x128xf32, #tpu.memory_space<vmem>>, vector<1x8x128xf32>
    %769 = vector.shape_cast %768 : vector<1x8x128xf32> to vector<8x128xf32>
    %770 = vector.shape_cast %767 : vector<8x128xf32> to vector<1x8x128xf32>
    tpu.vector_store %arg4[%c51, %c0_303, %c0_304], %770 {strides = array<i32>} : memref<96x8x128xf32, #tpu.memory_space<vmem>>, vector<1x8x128xf32>,
    %c4_305 = arith.constant 4 : index
    %c0_306 = arith.constant 0 : index
    %c0_307 = arith.constant 0 : index
    %771 = vector.load %arg4[%c4_305, %c0_306, %c0_307] : memref<96x8x128xf32, #tpu.memory_space<vmem>>, vector<1x8x128xf32>
    %772 = vector.shape_cast %771 : vector<1x8x128xf32> to vector<8x128xf32>
    %c5_308 = arith.constant 5 : index
    %c0_309 = arith.constant 0 : index
    %c0_310 = arith.constant 0 : index
    %773 = vector.load %arg4[%c5_308, %c0_309, %c0_310] : memref<96x8x128xf32, #tpu.memory_space<vmem>>, vector<1x8x128xf32>
    %774 = vector.shape_cast %773 : vector<1x8x128xf32> to vector<8x128xf32>
    %c6_311 = arith.constant 6 : index
    %c0_312 = arith.constant 0 : index
    %c0_313 = arith.constant 0 : index
    %775 = vector.load %arg4[%c6_311, %c0_312, %c0_313] : memref<96x8x128xf32, #tpu.memory_space<vmem>>, vector<1x8x128xf32>
    %776 = vector.shape_cast %775 : vector<1x8x128xf32> to vector<8x128xf32>
    %c7_314 = arith.constant 7 : index
    %c0_315 = arith.constant 0 : index
    %c0_316 = arith.constant 0 : index
    %777 = vector.load %arg4[%c7_314, %c0_315, %c0_316] : memref<96x8x128xf32, #tpu.memory_space<vmem>>, vector<1x8x128xf32>
    %778 = vector.shape_cast %777 : vector<1x8x128xf32> to vector<8x128xf32>
    %779 = arith.mulf %772, %688 : vector<8x128xf32>
    %780 = arith.mulf %774, %700 : vector<8x128xf32>
    %781 = arith.addf %779, %780 : vector<8x128xf32>
    %782 = arith.mulf %776, %711 : vector<8x128xf32>
    %783 = arith.addf %781, %782 : vector<8x128xf32>
    %c52 = arith.constant 52 : index
    %c0_317 = arith.constant 0 : index
    %c0_318 = arith.constant 0 : index
    %784 = vector.load %arg4[%c52, %c0_317, %c0_318] : memref<96x8x128xf32, #tpu.memory_space<vmem>>, vector<1x8x128xf32>
    %785 = vector.shape_cast %784 : vector<1x8x128xf32> to vector<8x128xf32>
    %786 = vector.shape_cast %783 : vector<8x128xf32> to vector<1x8x128xf32>
    tpu.vector_store %arg4[%c52, %c0_317, %c0_318], %786 {strides = array<i32>} : memref<96x8x128xf32, #tpu.memory_space<vmem>>, vector<1x8x128xf32>,
    %787 = arith.mulf %772, %692 : vector<8x128xf32>
    %788 = arith.mulf %774, %703 : vector<8x128xf32>
    %789 = arith.addf %787, %788 : vector<8x128xf32>
    %790 = arith.mulf %776, %715 : vector<8x128xf32>
    %791 = arith.addf %789, %790 : vector<8x128xf32>
    %c53 = arith.constant 53 : index
    %c0_319 = arith.constant 0 : index
    %c0_320 = arith.constant 0 : index
    %792 = vector.load %arg4[%c53, %c0_319, %c0_320] : memref<96x8x128xf32, #tpu.memory_space<vmem>>, vector<1x8x128xf32>
    %793 = vector.shape_cast %792 : vector<1x8x128xf32> to vector<8x128xf32>
    %794 = vector.shape_cast %791 : vector<8x128xf32> to vector<1x8x128xf32>
    tpu.vector_store %arg4[%c53, %c0_319, %c0_320], %794 {strides = array<i32>} : memref<96x8x128xf32, #tpu.memory_space<vmem>>, vector<1x8x128xf32>,
    %795 = arith.mulf %772, %696 : vector<8x128xf32>
    %796 = arith.mulf %774, %707 : vector<8x128xf32>
    %797 = arith.addf %795, %796 : vector<8x128xf32>
    %798 = arith.mulf %776, %718 : vector<8x128xf32>
    %799 = arith.addf %797, %798 : vector<8x128xf32>
    %c54 = arith.constant 54 : index
    %c0_321 = arith.constant 0 : index
    %c0_322 = arith.constant 0 : index
    %800 = vector.load %arg4[%c54, %c0_321, %c0_322] : memref<96x8x128xf32, #tpu.memory_space<vmem>>, vector<1x8x128xf32>
    %801 = vector.shape_cast %800 : vector<1x8x128xf32> to vector<8x128xf32>
    %802 = vector.shape_cast %799 : vector<8x128xf32> to vector<1x8x128xf32>
    tpu.vector_store %arg4[%c54, %c0_321, %c0_322], %802 {strides = array<i32>} : memref<96x8x128xf32, #tpu.memory_space<vmem>>, vector<1x8x128xf32>,
    %803 = arith.mulf %772, %723 : vector<8x128xf32>
    %804 = arith.mulf %774, %726 : vector<8x128xf32>
    %805 = arith.addf %803, %804 : vector<8x128xf32>
    %806 = arith.mulf %776, %729 : vector<8x128xf32>
    %807 = arith.addf %805, %806 : vector<8x128xf32>
    %808 = arith.addf %807, %778 : vector<8x128xf32>
    %c55 = arith.constant 55 : index
    %c0_323 = arith.constant 0 : index
    %c0_324 = arith.constant 0 : index
    %809 = vector.load %arg4[%c55, %c0_323, %c0_324] : memref<96x8x128xf32, #tpu.memory_space<vmem>>, vector<1x8x128xf32>
    %810 = vector.shape_cast %809 : vector<1x8x128xf32> to vector<8x128xf32>
    %811 = vector.shape_cast %808 : vector<8x128xf32> to vector<1x8x128xf32>
    tpu.vector_store %arg4[%c55, %c0_323, %c0_324], %811 {strides = array<i32>} : memref<96x8x128xf32, #tpu.memory_space<vmem>>, vector<1x8x128xf32>,
    %c8_325 = arith.constant 8 : index
    %c0_326 = arith.constant 0 : index
    %c0_327 = arith.constant 0 : index
    %812 = vector.load %arg4[%c8_325, %c0_326, %c0_327] : memref<96x8x128xf32, #tpu.memory_space<vmem>>, vector<1x8x128xf32>
    %813 = vector.shape_cast %812 : vector<1x8x128xf32> to vector<8x128xf32>
    %c9_328 = arith.constant 9 : index
    %c0_329 = arith.constant 0 : index
    %c0_330 = arith.constant 0 : index
    %814 = vector.load %arg4[%c9_328, %c0_329, %c0_330] : memref<96x8x128xf32, #tpu.memory_space<vmem>>, vector<1x8x128xf32>
    %815 = vector.shape_cast %814 : vector<1x8x128xf32> to vector<8x128xf32>
    %c10_331 = arith.constant 10 : index
    %c0_332 = arith.constant 0 : index
    %c0_333 = arith.constant 0 : index
    %816 = vector.load %arg4[%c10_331, %c0_332, %c0_333] : memref<96x8x128xf32, #tpu.memory_space<vmem>>, vector<1x8x128xf32>
    %817 = vector.shape_cast %816 : vector<1x8x128xf32> to vector<8x128xf32>
    %c11_334 = arith.constant 11 : index
    %c0_335 = arith.constant 0 : index
    %c0_336 = arith.constant 0 : index
    %818 = vector.load %arg4[%c11_334, %c0_335, %c0_336] : memref<96x8x128xf32, #tpu.memory_space<vmem>>, vector<1x8x128xf32>
    %819 = vector.shape_cast %818 : vector<1x8x128xf32> to vector<8x128xf32>
    %820 = arith.mulf %813, %688 : vector<8x128xf32>
    %821 = arith.mulf %815, %700 : vector<8x128xf32>
    %822 = arith.addf %820, %821 : vector<8x128xf32>
    %823 = arith.mulf %817, %711 : vector<8x128xf32>
    %824 = arith.addf %822, %823 : vector<8x128xf32>
    %c56 = arith.constant 56 : index
    %c0_337 = arith.constant 0 : index
    %c0_338 = arith.constant 0 : index
    %825 = vector.load %arg4[%c56, %c0_337, %c0_338] : memref<96x8x128xf32, #tpu.memory_space<vmem>>, vector<1x8x128xf32>
    %826 = vector.shape_cast %825 : vector<1x8x128xf32> to vector<8x128xf32>
    %827 = vector.shape_cast %824 : vector<8x128xf32> to vector<1x8x128xf32>
    tpu.vector_store %arg4[%c56, %c0_337, %c0_338], %827 {strides = array<i32>} : memref<96x8x128xf32, #tpu.memory_space<vmem>>, vector<1x8x128xf32>,
    %828 = arith.mulf %813, %692 : vector<8x128xf32>
    %829 = arith.mulf %815, %703 : vector<8x128xf32>
    %830 = arith.addf %828, %829 : vector<8x128xf32>
    %831 = arith.mulf %817, %715 : vector<8x128xf32>
    %832 = arith.addf %830, %831 : vector<8x128xf32>
    %c57 = arith.constant 57 : index
    %c0_339 = arith.constant 0 : index
    %c0_340 = arith.constant 0 : index
    %833 = vector.load %arg4[%c57, %c0_339, %c0_340] : memref<96x8x128xf32, #tpu.memory_space<vmem>>, vector<1x8x128xf32>
    %834 = vector.shape_cast %833 : vector<1x8x128xf32> to vector<8x128xf32>
    %835 = vector.shape_cast %832 : vector<8x128xf32> to vector<1x8x128xf32>
    tpu.vector_store %arg4[%c57, %c0_339, %c0_340], %835 {strides = array<i32>} : memref<96x8x128xf32, #tpu.memory_space<vmem>>, vector<1x8x128xf32>,
    %836 = arith.mulf %813, %696 : vector<8x128xf32>
    %837 = arith.mulf %815, %707 : vector<8x128xf32>
    %838 = arith.addf %836, %837 : vector<8x128xf32>
    %839 = arith.mulf %817, %718 : vector<8x128xf32>
    %840 = arith.addf %838, %839 : vector<8x128xf32>
    %c58 = arith.constant 58 : index
    %c0_341 = arith.constant 0 : index
    %c0_342 = arith.constant 0 : index
    %841 = vector.load %arg4[%c58, %c0_341, %c0_342] : memref<96x8x128xf32, #tpu.memory_space<vmem>>, vector<1x8x128xf32>
    %842 = vector.shape_cast %841 : vector<1x8x128xf32> to vector<8x128xf32>
    %843 = vector.shape_cast %840 : vector<8x128xf32> to vector<1x8x128xf32>
    tpu.vector_store %arg4[%c58, %c0_341, %c0_342], %843 {strides = array<i32>} : memref<96x8x128xf32, #tpu.memory_space<vmem>>, vector<1x8x128xf32>,
    %844 = arith.mulf %813, %723 : vector<8x128xf32>
    %845 = arith.mulf %815, %726 : vector<8x128xf32>
    %846 = arith.addf %844, %845 : vector<8x128xf32>
    %847 = arith.mulf %817, %729 : vector<8x128xf32>
    %848 = arith.addf %846, %847 : vector<8x128xf32>
    %849 = arith.addf %848, %819 : vector<8x128xf32>
    %c59 = arith.constant 59 : index
    %c0_343 = arith.constant 0 : index
    %c0_344 = arith.constant 0 : index
    %850 = vector.load %arg4[%c59, %c0_343, %c0_344] : memref<96x8x128xf32, #tpu.memory_space<vmem>>, vector<1x8x128xf32>
    %851 = vector.shape_cast %850 : vector<1x8x128xf32> to vector<8x128xf32>
    %852 = vector.shape_cast %849 : vector<8x128xf32> to vector<1x8x128xf32>
    tpu.vector_store %arg4[%c59, %c0_343, %c0_344], %852 {strides = array<i32>} : memref<96x8x128xf32, #tpu.memory_space<vmem>>, vector<1x8x128xf32>,
    %c15_345 = arith.constant 15 : index
    %c0_346 = arith.constant 0 : index
    %c0_347 = arith.constant 0 : index
    %853 = vector.load %arg1[%c15_345, %c0_346, %c0_347] : memref<24x8x128xf32, #tpu.memory_space<vmem>>, vector<1x8x128xf32>
    %854 = vector.shape_cast %853 : vector<1x8x128xf32> to vector<8x128xf32>
    %c16_348 = arith.constant 16 : index
    %c0_349 = arith.constant 0 : index
    %c0_350 = arith.constant 0 : index
    %855 = vector.load %arg1[%c16_348, %c0_349, %c0_350] : memref<24x8x128xf32, #tpu.memory_space<vmem>>, vector<1x8x128xf32>
    %856 = vector.shape_cast %855 : vector<1x8x128xf32> to vector<8x128xf32>
    %c17_351 = arith.constant 17 : index
    %c0_352 = arith.constant 0 : index
    %c0_353 = arith.constant 0 : index
    %857 = vector.load %arg1[%c17_351, %c0_352, %c0_353] : memref<24x8x128xf32, #tpu.memory_space<vmem>>, vector<1x8x128xf32>
    %858 = vector.shape_cast %857 : vector<1x8x128xf32> to vector<8x128xf32>
    %859 = arith.mulf %854, %854 : vector<8x128xf32>
    %860 = arith.mulf %856, %856 : vector<8x128xf32>
    %861 = arith.addf %859, %860 : vector<8x128xf32>
    %862 = arith.mulf %858, %858 : vector<8x128xf32>
    %863 = arith.addf %861, %862 : vector<8x128xf32>
    %cst_354 = arith.constant 9.99999996E-13 : f32
    %864 = vector.broadcast %cst_354 : f32 to vector<8x128xf32>
    %865 = arith.addf %863, %864 : vector<8x128xf32>
    %866 = math.rsqrt %865 : vector<8x128xf32>
    %867 = arith.mulf %865, %866 : vector<8x128xf32>
    %868 = math.sin %867 : vector<8x128xf32>
    %869 = math.cos %867 : vector<8x128xf32>
    %cst_355 = arith.constant 1.000000e+00 : f32
    %870 = vector.broadcast %cst_355 : f32 to vector<8x128xf32>
    %871 = arith.subf %870, %869 : vector<8x128xf32>
    %872 = arith.mulf %854, %866 : vector<8x128xf32>
    %873 = arith.mulf %856, %866 : vector<8x128xf32>
    %874 = arith.mulf %858, %866 : vector<8x128xf32>
    %875 = arith.mulf %872, %872 : vector<8x128xf32>
    %876 = arith.mulf %875, %871 : vector<8x128xf32>
    %877 = arith.addf %869, %876 : vector<8x128xf32>
    %878 = arith.mulf %872, %873 : vector<8x128xf32>
    %879 = arith.mulf %878, %871 : vector<8x128xf32>
    %880 = arith.mulf %874, %868 : vector<8x128xf32>
    %881 = arith.subf %879, %880 : vector<8x128xf32>
    %882 = arith.mulf %872, %874 : vector<8x128xf32>
    %883 = arith.mulf %882, %871 : vector<8x128xf32>
    %884 = arith.mulf %873, %868 : vector<8x128xf32>
    %885 = arith.addf %883, %884 : vector<8x128xf32>
    %886 = arith.mulf %873, %872 : vector<8x128xf32>
    %887 = arith.mulf %886, %871 : vector<8x128xf32>
    %888 = arith.mulf %874, %868 : vector<8x128xf32>
    %889 = arith.addf %887, %888 : vector<8x128xf32>
    %890 = arith.mulf %873, %873 : vector<8x128xf32>
    %891 = arith.mulf %890, %871 : vector<8x128xf32>
    %892 = arith.addf %869, %891 : vector<8x128xf32>
    %893 = arith.mulf %873, %874 : vector<8x128xf32>
    %894 = arith.mulf %893, %871 : vector<8x128xf32>
    %895 = arith.mulf %872, %868 : vector<8x128xf32>
    %896 = arith.subf %894, %895 : vector<8x128xf32>
    %897 = arith.mulf %874, %872 : vector<8x128xf32>
    %898 = arith.mulf %897, %871 : vector<8x128xf32>
    %899 = arith.mulf %873, %868 : vector<8x128xf32>
    %900 = arith.subf %898, %899 : vector<8x128xf32>
    %901 = arith.mulf %874, %873 : vector<8x128xf32>
    %902 = arith.mulf %901, %871 : vector<8x128xf32>
    %903 = arith.mulf %872, %868 : vector<8x128xf32>
    %904 = arith.addf %902, %903 : vector<8x128xf32>
    %905 = arith.mulf %874, %874 : vector<8x128xf32>
    %906 = arith.mulf %905, %871 : vector<8x128xf32>
    %907 = arith.addf %869, %906 : vector<8x128xf32>
    %c4_356 = arith.constant 4 : index
    %c0_357 = arith.constant 0 : index
    %c0_358 = arith.constant 0 : index
    %908 = vector.load %arg3[%c4_356, %c0_357, %c0_358] : memref<7x8x128xf32, #tpu.memory_space<vmem>>, vector<1x8x128xf32>
    %909 = vector.shape_cast %908 : vector<1x8x128xf32> to vector<8x128xf32>
    %c15_359 = arith.constant 15 : index
    %910 = memref.load %arg2[%c15_359] : memref<24xf32, #tpu.memory_space<smem>>
    %911 = vector.broadcast %910 : f32 to vector<8x128xf32>
    %912 = arith.mulf %911, %909 : vector<8x128xf32>
    %c16_360 = arith.constant 16 : index
    %913 = memref.load %arg2[%c16_360] : memref<24xf32, #tpu.memory_space<smem>>
    %914 = vector.broadcast %913 : f32 to vector<8x128xf32>
    %915 = arith.mulf %914, %909 : vector<8x128xf32>
    %c17_361 = arith.constant 17 : index
    %916 = memref.load %arg2[%c17_361] : memref<24xf32, #tpu.memory_space<smem>>
    %917 = vector.broadcast %916 : f32 to vector<8x128xf32>
    %918 = arith.mulf %917, %909 : vector<8x128xf32>
    %c48_362 = arith.constant 48 : index
    %c0_363 = arith.constant 0 : index
    %c0_364 = arith.constant 0 : index
    %919 = vector.load %arg4[%c48_362, %c0_363, %c0_364] : memref<96x8x128xf32, #tpu.memory_space<vmem>>, vector<1x8x128xf32>
    %920 = vector.shape_cast %919 : vector<1x8x128xf32> to vector<8x128xf32>
    %c49_365 = arith.constant 49 : index
    %c0_366 = arith.constant 0 : index
    %c0_367 = arith.constant 0 : index
    %921 = vector.load %arg4[%c49_365, %c0_366, %c0_367] : memref<96x8x128xf32, #tpu.memory_space<vmem>>, vector<1x8x128xf32>
    %922 = vector.shape_cast %921 : vector<1x8x128xf32> to vector<8x128xf32>
    %c50_368 = arith.constant 50 : index
    %c0_369 = arith.constant 0 : index
    %c0_370 = arith.constant 0 : index
    %923 = vector.load %arg4[%c50_368, %c0_369, %c0_370] : memref<96x8x128xf32, #tpu.memory_space<vmem>>, vector<1x8x128xf32>
    %924 = vector.shape_cast %923 : vector<1x8x128xf32> to vector<8x128xf32>
    %c51_371 = arith.constant 51 : index
    %c0_372 = arith.constant 0 : index
    %c0_373 = arith.constant 0 : index
    %925 = vector.load %arg4[%c51_371, %c0_372, %c0_373] : memref<96x8x128xf32, #tpu.memory_space<vmem>>, vector<1x8x128xf32>
    %926 = vector.shape_cast %925 : vector<1x8x128xf32> to vector<8x128xf32>
    %927 = arith.mulf %920, %877 : vector<8x128xf32>
    %928 = arith.mulf %922, %889 : vector<8x128xf32>
    %929 = arith.addf %927, %928 : vector<8x128xf32>
    %930 = arith.mulf %924, %900 : vector<8x128xf32>
    %931 = arith.addf %929, %930 : vector<8x128xf32>
    %c60 = arith.constant 60 : index
    %c0_374 = arith.constant 0 : index
    %c0_375 = arith.constant 0 : index
    %932 = vector.load %arg4[%c60, %c0_374, %c0_375] : memref<96x8x128xf32, #tpu.memory_space<vmem>>, vector<1x8x128xf32>
    %933 = vector.shape_cast %932 : vector<1x8x128xf32> to vector<8x128xf32>
    %934 = vector.shape_cast %931 : vector<8x128xf32> to vector<1x8x128xf32>
    tpu.vector_store %arg4[%c60, %c0_374, %c0_375], %934 {strides = array<i32>} : memref<96x8x128xf32, #tpu.memory_space<vmem>>, vector<1x8x128xf32>,
    %935 = arith.mulf %920, %881 : vector<8x128xf32>
    %936 = arith.mulf %922, %892 : vector<8x128xf32>
    %937 = arith.addf %935, %936 : vector<8x128xf32>
    %938 = arith.mulf %924, %904 : vector<8x128xf32>
    %939 = arith.addf %937, %938 : vector<8x128xf32>
    %c61 = arith.constant 61 : index
    %c0_376 = arith.constant 0 : index
    %c0_377 = arith.constant 0 : index
    %940 = vector.load %arg4[%c61, %c0_376, %c0_377] : memref<96x8x128xf32, #tpu.memory_space<vmem>>, vector<1x8x128xf32>
    %941 = vector.shape_cast %940 : vector<1x8x128xf32> to vector<8x128xf32>
    %942 = vector.shape_cast %939 : vector<8x128xf32> to vector<1x8x128xf32>
    tpu.vector_store %arg4[%c61, %c0_376, %c0_377], %942 {strides = array<i32>} : memref<96x8x128xf32, #tpu.memory_space<vmem>>, vector<1x8x128xf32>,
    %943 = arith.mulf %920, %885 : vector<8x128xf32>
    %944 = arith.mulf %922, %896 : vector<8x128xf32>
    %945 = arith.addf %943, %944 : vector<8x128xf32>
    %946 = arith.mulf %924, %907 : vector<8x128xf32>
    %947 = arith.addf %945, %946 : vector<8x128xf32>
    %c62 = arith.constant 62 : index
    %c0_378 = arith.constant 0 : index
    %c0_379 = arith.constant 0 : index
    %948 = vector.load %arg4[%c62, %c0_378, %c0_379] : memref<96x8x128xf32, #tpu.memory_space<vmem>>, vector<1x8x128xf32>
    %949 = vector.shape_cast %948 : vector<1x8x128xf32> to vector<8x128xf32>
    %950 = vector.shape_cast %947 : vector<8x128xf32> to vector<1x8x128xf32>
    tpu.vector_store %arg4[%c62, %c0_378, %c0_379], %950 {strides = array<i32>} : memref<96x8x128xf32, #tpu.memory_space<vmem>>, vector<1x8x128xf32>,
    %951 = arith.mulf %920, %912 : vector<8x128xf32>
    %952 = arith.mulf %922, %915 : vector<8x128xf32>
    %953 = arith.addf %951, %952 : vector<8x128xf32>
    %954 = arith.mulf %924, %918 : vector<8x128xf32>
    %955 = arith.addf %953, %954 : vector<8x128xf32>
    %956 = arith.addf %955, %926 : vector<8x128xf32>
    %c63 = arith.constant 63 : index
    %c0_380 = arith.constant 0 : index
    %c0_381 = arith.constant 0 : index
    %957 = vector.load %arg4[%c63, %c0_380, %c0_381] : memref<96x8x128xf32, #tpu.memory_space<vmem>>, vector<1x8x128xf32>
    %958 = vector.shape_cast %957 : vector<1x8x128xf32> to vector<8x128xf32>
    %959 = vector.shape_cast %956 : vector<8x128xf32> to vector<1x8x128xf32>
    tpu.vector_store %arg4[%c63, %c0_380, %c0_381], %959 {strides = array<i32>} : memref<96x8x128xf32, #tpu.memory_space<vmem>>, vector<1x8x128xf32>,
    %c52_382 = arith.constant 52 : index
    %c0_383 = arith.constant 0 : index
    %c0_384 = arith.constant 0 : index
    %960 = vector.load %arg4[%c52_382, %c0_383, %c0_384] : memref<96x8x128xf32, #tpu.memory_space<vmem>>, vector<1x8x128xf32>
    %961 = vector.shape_cast %960 : vector<1x8x128xf32> to vector<8x128xf32>
    %c53_385 = arith.constant 53 : index
    %c0_386 = arith.constant 0 : index
    %c0_387 = arith.constant 0 : index
    %962 = vector.load %arg4[%c53_385, %c0_386, %c0_387] : memref<96x8x128xf32, #tpu.memory_space<vmem>>, vector<1x8x128xf32>
    %963 = vector.shape_cast %962 : vector<1x8x128xf32> to vector<8x128xf32>
    %c54_388 = arith.constant 54 : index
    %c0_389 = arith.constant 0 : index
    %c0_390 = arith.constant 0 : index
    %964 = vector.load %arg4[%c54_388, %c0_389, %c0_390] : memref<96x8x128xf32, #tpu.memory_space<vmem>>, vector<1x8x128xf32>
    %965 = vector.shape_cast %964 : vector<1x8x128xf32> to vector<8x128xf32>
    %c55_391 = arith.constant 55 : index
    %c0_392 = arith.constant 0 : index
    %c0_393 = arith.constant 0 : index
    %966 = vector.load %arg4[%c55_391, %c0_392, %c0_393] : memref<96x8x128xf32, #tpu.memory_space<vmem>>, vector<1x8x128xf32>
    %967 = vector.shape_cast %966 : vector<1x8x128xf32> to vector<8x128xf32>
    %968 = arith.mulf %961, %877 : vector<8x128xf32>
    %969 = arith.mulf %963, %889 : vector<8x128xf32>
    %970 = arith.addf %968, %969 : vector<8x128xf32>
    %971 = arith.mulf %965, %900 : vector<8x128xf32>
    %972 = arith.addf %970, %971 : vector<8x128xf32>
    %c64 = arith.constant 64 : index
    %c0_394 = arith.constant 0 : index
    %c0_395 = arith.constant 0 : index
    %973 = vector.load %arg4[%c64, %c0_394, %c0_395] : memref<96x8x128xf32, #tpu.memory_space<vmem>>, vector<1x8x128xf32>
    %974 = vector.shape_cast %973 : vector<1x8x128xf32> to vector<8x128xf32>
    %975 = vector.shape_cast %972 : vector<8x128xf32> to vector<1x8x128xf32>
    tpu.vector_store %arg4[%c64, %c0_394, %c0_395], %975 {strides = array<i32>} : memref<96x8x128xf32, #tpu.memory_space<vmem>>, vector<1x8x128xf32>,
    %976 = arith.mulf %961, %881 : vector<8x128xf32>
    %977 = arith.mulf %963, %892 : vector<8x128xf32>
    %978 = arith.addf %976, %977 : vector<8x128xf32>
    %979 = arith.mulf %965, %904 : vector<8x128xf32>
    %980 = arith.addf %978, %979 : vector<8x128xf32>
    %c65 = arith.constant 65 : index
    %c0_396 = arith.constant 0 : index
    %c0_397 = arith.constant 0 : index
    %981 = vector.load %arg4[%c65, %c0_396, %c0_397] : memref<96x8x128xf32, #tpu.memory_space<vmem>>, vector<1x8x128xf32>
    %982 = vector.shape_cast %981 : vector<1x8x128xf32> to vector<8x128xf32>
    %983 = vector.shape_cast %980 : vector<8x128xf32> to vector<1x8x128xf32>
    tpu.vector_store %arg4[%c65, %c0_396, %c0_397], %983 {strides = array<i32>} : memref<96x8x128xf32, #tpu.memory_space<vmem>>, vector<1x8x128xf32>,
    %984 = arith.mulf %961, %885 : vector<8x128xf32>
    %985 = arith.mulf %963, %896 : vector<8x128xf32>
    %986 = arith.addf %984, %985 : vector<8x128xf32>
    %987 = arith.mulf %965, %907 : vector<8x128xf32>
    %988 = arith.addf %986, %987 : vector<8x128xf32>
    %c66 = arith.constant 66 : index
    %c0_398 = arith.constant 0 : index
    %c0_399 = arith.constant 0 : index
    %989 = vector.load %arg4[%c66, %c0_398, %c0_399] : memref<96x8x128xf32, #tpu.memory_space<vmem>>, vector<1x8x128xf32>
    %990 = vector.shape_cast %989 : vector<1x8x128xf32> to vector<8x128xf32>
    %991 = vector.shape_cast %988 : vector<8x128xf32> to vector<1x8x128xf32>
    tpu.vector_store %arg4[%c66, %c0_398, %c0_399], %991 {strides = array<i32>} : memref<96x8x128xf32, #tpu.memory_space<vmem>>, vector<1x8x128xf32>,
    %992 = arith.mulf %961, %912 : vector<8x128xf32>
    %993 = arith.mulf %963, %915 : vector<8x128xf32>
    %994 = arith.addf %992, %993 : vector<8x128xf32>
    %995 = arith.mulf %965, %918 : vector<8x128xf32>
    %996 = arith.addf %994, %995 : vector<8x128xf32>
    %997 = arith.addf %996, %967 : vector<8x128xf32>
    %c67 = arith.constant 67 : index
    %c0_400 = arith.constant 0 : index
    %c0_401 = arith.constant 0 : index
    %998 = vector.load %arg4[%c67, %c0_400, %c0_401] : memref<96x8x128xf32, #tpu.memory_space<vmem>>, vector<1x8x128xf32>
    %999 = vector.shape_cast %998 : vector<1x8x128xf32> to vector<8x128xf32>
    %1000 = vector.shape_cast %997 : vector<8x128xf32> to vector<1x8x128xf32>
    tpu.vector_store %arg4[%c67, %c0_400, %c0_401], %1000 {strides = array<i32>} : memref<96x8x128xf32, #tpu.memory_space<vmem>>, vector<1x8x128xf32>,
    %c56_402 = arith.constant 56 : index
    %c0_403 = arith.constant 0 : index
    %c0_404 = arith.constant 0 : index
    %1001 = vector.load %arg4[%c56_402, %c0_403, %c0_404] : memref<96x8x128xf32, #tpu.memory_space<vmem>>, vector<1x8x128xf32>
    %1002 = vector.shape_cast %1001 : vector<1x8x128xf32> to vector<8x128xf32>
    %c57_405 = arith.constant 57 : index
    %c0_406 = arith.constant 0 : index
    %c0_407 = arith.constant 0 : index
    %1003 = vector.load %arg4[%c57_405, %c0_406, %c0_407] : memref<96x8x128xf32, #tpu.memory_space<vmem>>, vector<1x8x128xf32>
    %1004 = vector.shape_cast %1003 : vector<1x8x128xf32> to vector<8x128xf32>
    %c58_408 = arith.constant 58 : index
    %c0_409 = arith.constant 0 : index
    %c0_410 = arith.constant 0 : index
    %1005 = vector.load %arg4[%c58_408, %c0_409, %c0_410] : memref<96x8x128xf32, #tpu.memory_space<vmem>>, vector<1x8x128xf32>
    %1006 = vector.shape_cast %1005 : vector<1x8x128xf32> to vector<8x128xf32>
    %c59_411 = arith.constant 59 : index
    %c0_412 = arith.constant 0 : index
    %c0_413 = arith.constant 0 : index
    %1007 = vector.load %arg4[%c59_411, %c0_412, %c0_413] : memref<96x8x128xf32, #tpu.memory_space<vmem>>, vector<1x8x128xf32>
    %1008 = vector.shape_cast %1007 : vector<1x8x128xf32> to vector<8x128xf32>
    %1009 = arith.mulf %1002, %877 : vector<8x128xf32>
    %1010 = arith.mulf %1004, %889 : vector<8x128xf32>
    %1011 = arith.addf %1009, %1010 : vector<8x128xf32>
    %1012 = arith.mulf %1006, %900 : vector<8x128xf32>
    %1013 = arith.addf %1011, %1012 : vector<8x128xf32>
    %c68 = arith.constant 68 : index
    %c0_414 = arith.constant 0 : index
    %c0_415 = arith.constant 0 : index
    %1014 = vector.load %arg4[%c68, %c0_414, %c0_415] : memref<96x8x128xf32, #tpu.memory_space<vmem>>, vector<1x8x128xf32>
    %1015 = vector.shape_cast %1014 : vector<1x8x128xf32> to vector<8x128xf32>
    %1016 = vector.shape_cast %1013 : vector<8x128xf32> to vector<1x8x128xf32>
    tpu.vector_store %arg4[%c68, %c0_414, %c0_415], %1016 {strides = array<i32>} : memref<96x8x128xf32, #tpu.memory_space<vmem>>, vector<1x8x128xf32>,
    %1017 = arith.mulf %1002, %881 : vector<8x128xf32>
    %1018 = arith.mulf %1004, %892 : vector<8x128xf32>
    %1019 = arith.addf %1017, %1018 : vector<8x128xf32>
    %1020 = arith.mulf %1006, %904 : vector<8x128xf32>
    %1021 = arith.addf %1019, %1020 : vector<8x128xf32>
    %c69 = arith.constant 69 : index
    %c0_416 = arith.constant 0 : index
    %c0_417 = arith.constant 0 : index
    %1022 = vector.load %arg4[%c69, %c0_416, %c0_417] : memref<96x8x128xf32, #tpu.memory_space<vmem>>, vector<1x8x128xf32>
    %1023 = vector.shape_cast %1022 : vector<1x8x128xf32> to vector<8x128xf32>
    %1024 = vector.shape_cast %1021 : vector<8x128xf32> to vector<1x8x128xf32>
    tpu.vector_store %arg4[%c69, %c0_416, %c0_417], %1024 {strides = array<i32>} : memref<96x8x128xf32, #tpu.memory_space<vmem>>, vector<1x8x128xf32>,
    %1025 = arith.mulf %1002, %885 : vector<8x128xf32>
    %1026 = arith.mulf %1004, %896 : vector<8x128xf32>
    %1027 = arith.addf %1025, %1026 : vector<8x128xf32>
    %1028 = arith.mulf %1006, %907 : vector<8x128xf32>
    %1029 = arith.addf %1027, %1028 : vector<8x128xf32>
    %c70 = arith.constant 70 : index
    %c0_418 = arith.constant 0 : index
    %c0_419 = arith.constant 0 : index
    %1030 = vector.load %arg4[%c70, %c0_418, %c0_419] : memref<96x8x128xf32, #tpu.memory_space<vmem>>, vector<1x8x128xf32>
    %1031 = vector.shape_cast %1030 : vector<1x8x128xf32> to vector<8x128xf32>
    %1032 = vector.shape_cast %1029 : vector<8x128xf32> to vector<1x8x128xf32>
    tpu.vector_store %arg4[%c70, %c0_418, %c0_419], %1032 {strides = array<i32>} : memref<96x8x128xf32, #tpu.memory_space<vmem>>, vector<1x8x128xf32>,
    %1033 = arith.mulf %1002, %912 : vector<8x128xf32>
    %1034 = arith.mulf %1004, %915 : vector<8x128xf32>
    %1035 = arith.addf %1033, %1034 : vector<8x128xf32>
    %1036 = arith.mulf %1006, %918 : vector<8x128xf32>
    %1037 = arith.addf %1035, %1036 : vector<8x128xf32>
    %1038 = arith.addf %1037, %1008 : vector<8x128xf32>
    %c71 = arith.constant 71 : index
    %c0_420 = arith.constant 0 : index
    %c0_421 = arith.constant 0 : index
    %1039 = vector.load %arg4[%c71, %c0_420, %c0_421] : memref<96x8x128xf32, #tpu.memory_space<vmem>>, vector<1x8x128xf32>
    %1040 = vector.shape_cast %1039 : vector<1x8x128xf32> to vector<8x128xf32>
    %1041 = vector.shape_cast %1038 : vector<8x128xf32> to vector<1x8x128xf32>
    tpu.vector_store %arg4[%c71, %c0_420, %c0_421], %1041 {strides = array<i32>} : memref<96x8x128xf32, #tpu.memory_space<vmem>>, vector<1x8x128xf32>,
    %c18_422 = arith.constant 18 : index
    %c0_423 = arith.constant 0 : index
    %c0_424 = arith.constant 0 : index
    %1042 = vector.load %arg1[%c18_422, %c0_423, %c0_424] : memref<24x8x128xf32, #tpu.memory_space<vmem>>, vector<1x8x128xf32>
    %1043 = vector.shape_cast %1042 : vector<1x8x128xf32> to vector<8x128xf32>
    %c19_425 = arith.constant 19 : index
    %c0_426 = arith.constant 0 : index
    %c0_427 = arith.constant 0 : index
    %1044 = vector.load %arg1[%c19_425, %c0_426, %c0_427] : memref<24x8x128xf32, #tpu.memory_space<vmem>>, vector<1x8x128xf32>
    %1045 = vector.shape_cast %1044 : vector<1x8x128xf32> to vector<8x128xf32>
    %c20_428 = arith.constant 20 : index
    %c0_429 = arith.constant 0 : index
    %c0_430 = arith.constant 0 : index
    %1046 = vector.load %arg1[%c20_428, %c0_429, %c0_430] : memref<24x8x128xf32, #tpu.memory_space<vmem>>, vector<1x8x128xf32>
    %1047 = vector.shape_cast %1046 : vector<1x8x128xf32> to vector<8x128xf32>
    %1048 = arith.mulf %1043, %1043 : vector<8x128xf32>
    %1049 = arith.mulf %1045, %1045 : vector<8x128xf32>
    %1050 = arith.addf %1048, %1049 : vector<8x128xf32>
    %1051 = arith.mulf %1047, %1047 : vector<8x128xf32>
    %1052 = arith.addf %1050, %1051 : vector<8x128xf32>
    %cst_431 = arith.constant 9.99999996E-13 : f32
    %1053 = vector.broadcast %cst_431 : f32 to vector<8x128xf32>
    %1054 = arith.addf %1052, %1053 : vector<8x128xf32>
    %1055 = math.rsqrt %1054 : vector<8x128xf32>
    %1056 = arith.mulf %1054, %1055 : vector<8x128xf32>
    %1057 = math.sin %1056 : vector<8x128xf32>
    %1058 = math.cos %1056 : vector<8x128xf32>
    %cst_432 = arith.constant 1.000000e+00 : f32
    %1059 = vector.broadcast %cst_432 : f32 to vector<8x128xf32>
    %1060 = arith.subf %1059, %1058 : vector<8x128xf32>
    %1061 = arith.mulf %1043, %1055 : vector<8x128xf32>
    %1062 = arith.mulf %1045, %1055 : vector<8x128xf32>
    %1063 = arith.mulf %1047, %1055 : vector<8x128xf32>
    %1064 = arith.mulf %1061, %1061 : vector<8x128xf32>
    %1065 = arith.mulf %1064, %1060 : vector<8x128xf32>
    %1066 = arith.addf %1058, %1065 : vector<8x128xf32>
    %1067 = arith.mulf %1061, %1062 : vector<8x128xf32>
    %1068 = arith.mulf %1067, %1060 : vector<8x128xf32>
    %1069 = arith.mulf %1063, %1057 : vector<8x128xf32>
    %1070 = arith.subf %1068, %1069 : vector<8x128xf32>
    %1071 = arith.mulf %1061, %1063 : vector<8x128xf32>
    %1072 = arith.mulf %1071, %1060 : vector<8x128xf32>
    %1073 = arith.mulf %1062, %1057 : vector<8x128xf32>
    %1074 = arith.addf %1072, %1073 : vector<8x128xf32>
    %1075 = arith.mulf %1062, %1061 : vector<8x128xf32>
    %1076 = arith.mulf %1075, %1060 : vector<8x128xf32>
    %1077 = arith.mulf %1063, %1057 : vector<8x128xf32>
    %1078 = arith.addf %1076, %1077 : vector<8x128xf32>
    %1079 = arith.mulf %1062, %1062 : vector<8x128xf32>
    %1080 = arith.mulf %1079, %1060 : vector<8x128xf32>
    %1081 = arith.addf %1058, %1080 : vector<8x128xf32>
    %1082 = arith.mulf %1062, %1063 : vector<8x128xf32>
    %1083 = arith.mulf %1082, %1060 : vector<8x128xf32>
    %1084 = arith.mulf %1061, %1057 : vector<8x128xf32>
    %1085 = arith.subf %1083, %1084 : vector<8x128xf32>
    %1086 = arith.mulf %1063, %1061 : vector<8x128xf32>
    %1087 = arith.mulf %1086, %1060 : vector<8x128xf32>
    %1088 = arith.mulf %1062, %1057 : vector<8x128xf32>
    %1089 = arith.subf %1087, %1088 : vector<8x128xf32>
    %1090 = arith.mulf %1063, %1062 : vector<8x128xf32>
    %1091 = arith.mulf %1090, %1060 : vector<8x128xf32>
    %1092 = arith.mulf %1061, %1057 : vector<8x128xf32>
    %1093 = arith.addf %1091, %1092 : vector<8x128xf32>
    %1094 = arith.mulf %1063, %1063 : vector<8x128xf32>
    %1095 = arith.mulf %1094, %1060 : vector<8x128xf32>
    %1096 = arith.addf %1058, %1095 : vector<8x128xf32>
    %c5_433 = arith.constant 5 : index
    %c0_434 = arith.constant 0 : index
    %c0_435 = arith.constant 0 : index
    %1097 = vector.load %arg3[%c5_433, %c0_434, %c0_435] : memref<7x8x128xf32, #tpu.memory_space<vmem>>, vector<1x8x128xf32>
    %1098 = vector.shape_cast %1097 : vector<1x8x128xf32> to vector<8x128xf32>
    %c18_436 = arith.constant 18 : index
    %1099 = memref.load %arg2[%c18_436] : memref<24xf32, #tpu.memory_space<smem>>
    %1100 = vector.broadcast %1099 : f32 to vector<8x128xf32>
    %1101 = arith.mulf %1100, %1098 : vector<8x128xf32>
    %c19_437 = arith.constant 19 : index
    %1102 = memref.load %arg2[%c19_437] : memref<24xf32, #tpu.memory_space<smem>>
    %1103 = vector.broadcast %1102 : f32 to vector<8x128xf32>
    %1104 = arith.mulf %1103, %1098 : vector<8x128xf32>
    %c20_438 = arith.constant 20 : index
    %1105 = memref.load %arg2[%c20_438] : memref<24xf32, #tpu.memory_space<smem>>
    %1106 = vector.broadcast %1105 : f32 to vector<8x128xf32>
    %1107 = arith.mulf %1106, %1098 : vector<8x128xf32>
    %c60_439 = arith.constant 60 : index
    %c0_440 = arith.constant 0 : index
    %c0_441 = arith.constant 0 : index
    %1108 = vector.load %arg4[%c60_439, %c0_440, %c0_441] : memref<96x8x128xf32, #tpu.memory_space<vmem>>, vector<1x8x128xf32>
    %1109 = vector.shape_cast %1108 : vector<1x8x128xf32> to vector<8x128xf32>
    %c61_442 = arith.constant 61 : index
    %c0_443 = arith.constant 0 : index
    %c0_444 = arith.constant 0 : index
    %1110 = vector.load %arg4[%c61_442, %c0_443, %c0_444] : memref<96x8x128xf32, #tpu.memory_space<vmem>>, vector<1x8x128xf32>
    %1111 = vector.shape_cast %1110 : vector<1x8x128xf32> to vector<8x128xf32>
    %c62_445 = arith.constant 62 : index
    %c0_446 = arith.constant 0 : index
    %c0_447 = arith.constant 0 : index
    %1112 = vector.load %arg4[%c62_445, %c0_446, %c0_447] : memref<96x8x128xf32, #tpu.memory_space<vmem>>, vector<1x8x128xf32>
    %1113 = vector.shape_cast %1112 : vector<1x8x128xf32> to vector<8x128xf32>
    %c63_448 = arith.constant 63 : index
    %c0_449 = arith.constant 0 : index
    %c0_450 = arith.constant 0 : index
    %1114 = vector.load %arg4[%c63_448, %c0_449, %c0_450] : memref<96x8x128xf32, #tpu.memory_space<vmem>>, vector<1x8x128xf32>
    %1115 = vector.shape_cast %1114 : vector<1x8x128xf32> to vector<8x128xf32>
    %1116 = arith.mulf %1109, %1066 : vector<8x128xf32>
    %1117 = arith.mulf %1111, %1078 : vector<8x128xf32>
    %1118 = arith.addf %1116, %1117 : vector<8x128xf32>
    %1119 = arith.mulf %1113, %1089 : vector<8x128xf32>
    %1120 = arith.addf %1118, %1119 : vector<8x128xf32>
    %c72 = arith.constant 72 : index
    %c0_451 = arith.constant 0 : index
    %c0_452 = arith.constant 0 : index
    %1121 = vector.load %arg4[%c72, %c0_451, %c0_452] : memref<96x8x128xf32, #tpu.memory_space<vmem>>, vector<1x8x128xf32>
    %1122 = vector.shape_cast %1121 : vector<1x8x128xf32> to vector<8x128xf32>
    %1123 = vector.shape_cast %1120 : vector<8x128xf32> to vector<1x8x128xf32>
    tpu.vector_store %arg4[%c72, %c0_451, %c0_452], %1123 {strides = array<i32>} : memref<96x8x128xf32, #tpu.memory_space<vmem>>, vector<1x8x128xf32>,
    %1124 = arith.mulf %1109, %1070 : vector<8x128xf32>
    %1125 = arith.mulf %1111, %1081 : vector<8x128xf32>
    %1126 = arith.addf %1124, %1125 : vector<8x128xf32>
    %1127 = arith.mulf %1113, %1093 : vector<8x128xf32>
    %1128 = arith.addf %1126, %1127 : vector<8x128xf32>
    %c73 = arith.constant 73 : index
    %c0_453 = arith.constant 0 : index
    %c0_454 = arith.constant 0 : index
    %1129 = vector.load %arg4[%c73, %c0_453, %c0_454] : memref<96x8x128xf32, #tpu.memory_space<vmem>>, vector<1x8x128xf32>
    %1130 = vector.shape_cast %1129 : vector<1x8x128xf32> to vector<8x128xf32>
    %1131 = vector.shape_cast %1128 : vector<8x128xf32> to vector<1x8x128xf32>
    tpu.vector_store %arg4[%c73, %c0_453, %c0_454], %1131 {strides = array<i32>} : memref<96x8x128xf32, #tpu.memory_space<vmem>>, vector<1x8x128xf32>,
    %1132 = arith.mulf %1109, %1074 : vector<8x128xf32>
    %1133 = arith.mulf %1111, %1085 : vector<8x128xf32>
    %1134 = arith.addf %1132, %1133 : vector<8x128xf32>
    %1135 = arith.mulf %1113, %1096 : vector<8x128xf32>
    %1136 = arith.addf %1134, %1135 : vector<8x128xf32>
    %c74 = arith.constant 74 : index
    %c0_455 = arith.constant 0 : index
    %c0_456 = arith.constant 0 : index
    %1137 = vector.load %arg4[%c74, %c0_455, %c0_456] : memref<96x8x128xf32, #tpu.memory_space<vmem>>, vector<1x8x128xf32>
    %1138 = vector.shape_cast %1137 : vector<1x8x128xf32> to vector<8x128xf32>
    %1139 = vector.shape_cast %1136 : vector<8x128xf32> to vector<1x8x128xf32>
    tpu.vector_store %arg4[%c74, %c0_455, %c0_456], %1139 {strides = array<i32>} : memref<96x8x128xf32, #tpu.memory_space<vmem>>, vector<1x8x128xf32>,
    %1140 = arith.mulf %1109, %1101 : vector<8x128xf32>
    %1141 = arith.mulf %1111, %1104 : vector<8x128xf32>
    %1142 = arith.addf %1140, %1141 : vector<8x128xf32>
    %1143 = arith.mulf %1113, %1107 : vector<8x128xf32>
    %1144 = arith.addf %1142, %1143 : vector<8x128xf32>
    %1145 = arith.addf %1144, %1115 : vector<8x128xf32>
    %c75 = arith.constant 75 : index
    %c0_457 = arith.constant 0 : index
    %c0_458 = arith.constant 0 : index
    %1146 = vector.load %arg4[%c75, %c0_457, %c0_458] : memref<96x8x128xf32, #tpu.memory_space<vmem>>, vector<1x8x128xf32>
    %1147 = vector.shape_cast %1146 : vector<1x8x128xf32> to vector<8x128xf32>
    %1148 = vector.shape_cast %1145 : vector<8x128xf32> to vector<1x8x128xf32>
    tpu.vector_store %arg4[%c75, %c0_457, %c0_458], %1148 {strides = array<i32>} : memref<96x8x128xf32, #tpu.memory_space<vmem>>, vector<1x8x128xf32>,
    %c64_459 = arith.constant 64 : index
    %c0_460 = arith.constant 0 : index
    %c0_461 = arith.constant 0 : index
    %1149 = vector.load %arg4[%c64_459, %c0_460, %c0_461] : memref<96x8x128xf32, #tpu.memory_space<vmem>>, vector<1x8x128xf32>
    %1150 = vector.shape_cast %1149 : vector<1x8x128xf32> to vector<8x128xf32>
    %c65_462 = arith.constant 65 : index
    %c0_463 = arith.constant 0 : index
    %c0_464 = arith.constant 0 : index
    %1151 = vector.load %arg4[%c65_462, %c0_463, %c0_464] : memref<96x8x128xf32, #tpu.memory_space<vmem>>, vector<1x8x128xf32>
    %1152 = vector.shape_cast %1151 : vector<1x8x128xf32> to vector<8x128xf32>
    %c66_465 = arith.constant 66 : index
    %c0_466 = arith.constant 0 : index
    %c0_467 = arith.constant 0 : index
    %1153 = vector.load %arg4[%c66_465, %c0_466, %c0_467] : memref<96x8x128xf32, #tpu.memory_space<vmem>>, vector<1x8x128xf32>
    %1154 = vector.shape_cast %1153 : vector<1x8x128xf32> to vector<8x128xf32>
    %c67_468 = arith.constant 67 : index
    %c0_469 = arith.constant 0 : index
    %c0_470 = arith.constant 0 : index
    %1155 = vector.load %arg4[%c67_468, %c0_469, %c0_470] : memref<96x8x128xf32, #tpu.memory_space<vmem>>, vector<1x8x128xf32>
    %1156 = vector.shape_cast %1155 : vector<1x8x128xf32> to vector<8x128xf32>
    %1157 = arith.mulf %1150, %1066 : vector<8x128xf32>
    %1158 = arith.mulf %1152, %1078 : vector<8x128xf32>
    %1159 = arith.addf %1157, %1158 : vector<8x128xf32>
    %1160 = arith.mulf %1154, %1089 : vector<8x128xf32>
    %1161 = arith.addf %1159, %1160 : vector<8x128xf32>
    %c76 = arith.constant 76 : index
    %c0_471 = arith.constant 0 : index
    %c0_472 = arith.constant 0 : index
    %1162 = vector.load %arg4[%c76, %c0_471, %c0_472] : memref<96x8x128xf32, #tpu.memory_space<vmem>>, vector<1x8x128xf32>
    %1163 = vector.shape_cast %1162 : vector<1x8x128xf32> to vector<8x128xf32>
    %1164 = vector.shape_cast %1161 : vector<8x128xf32> to vector<1x8x128xf32>
    tpu.vector_store %arg4[%c76, %c0_471, %c0_472], %1164 {strides = array<i32>} : memref<96x8x128xf32, #tpu.memory_space<vmem>>, vector<1x8x128xf32>,
    %1165 = arith.mulf %1150, %1070 : vector<8x128xf32>
    %1166 = arith.mulf %1152, %1081 : vector<8x128xf32>
    %1167 = arith.addf %1165, %1166 : vector<8x128xf32>
    %1168 = arith.mulf %1154, %1093 : vector<8x128xf32>
    %1169 = arith.addf %1167, %1168 : vector<8x128xf32>
    %c77 = arith.constant 77 : index
    %c0_473 = arith.constant 0 : index
    %c0_474 = arith.constant 0 : index
    %1170 = vector.load %arg4[%c77, %c0_473, %c0_474] : memref<96x8x128xf32, #tpu.memory_space<vmem>>, vector<1x8x128xf32>
    %1171 = vector.shape_cast %1170 : vector<1x8x128xf32> to vector<8x128xf32>
    %1172 = vector.shape_cast %1169 : vector<8x128xf32> to vector<1x8x128xf32>
    tpu.vector_store %arg4[%c77, %c0_473, %c0_474], %1172 {strides = array<i32>} : memref<96x8x128xf32, #tpu.memory_space<vmem>>, vector<1x8x128xf32>,
    %1173 = arith.mulf %1150, %1074 : vector<8x128xf32>
    %1174 = arith.mulf %1152, %1085 : vector<8x128xf32>
    %1175 = arith.addf %1173, %1174 : vector<8x128xf32>
    %1176 = arith.mulf %1154, %1096 : vector<8x128xf32>
    %1177 = arith.addf %1175, %1176 : vector<8x128xf32>
    %c78 = arith.constant 78 : index
    %c0_475 = arith.constant 0 : index
    %c0_476 = arith.constant 0 : index
    %1178 = vector.load %arg4[%c78, %c0_475, %c0_476] : memref<96x8x128xf32, #tpu.memory_space<vmem>>, vector<1x8x128xf32>
    %1179 = vector.shape_cast %1178 : vector<1x8x128xf32> to vector<8x128xf32>
    %1180 = vector.shape_cast %1177 : vector<8x128xf32> to vector<1x8x128xf32>
    tpu.vector_store %arg4[%c78, %c0_475, %c0_476], %1180 {strides = array<i32>} : memref<96x8x128xf32, #tpu.memory_space<vmem>>, vector<1x8x128xf32>,
    %1181 = arith.mulf %1150, %1101 : vector<8x128xf32>
    %1182 = arith.mulf %1152, %1104 : vector<8x128xf32>
    %1183 = arith.addf %1181, %1182 : vector<8x128xf32>
    %1184 = arith.mulf %1154, %1107 : vector<8x128xf32>
    %1185 = arith.addf %1183, %1184 : vector<8x128xf32>
    %1186 = arith.addf %1185, %1156 : vector<8x128xf32>
    %c79 = arith.constant 79 : index
    %c0_477 = arith.constant 0 : index
    %c0_478 = arith.constant 0 : index
    %1187 = vector.load %arg4[%c79, %c0_477, %c0_478] : memref<96x8x128xf32, #tpu.memory_space<vmem>>, vector<1x8x128xf32>
    %1188 = vector.shape_cast %1187 : vector<1x8x128xf32> to vector<8x128xf32>
    %1189 = vector.shape_cast %1186 : vector<8x128xf32> to vector<1x8x128xf32>
    tpu.vector_store %arg4[%c79, %c0_477, %c0_478], %1189 {strides = array<i32>} : memref<96x8x128xf32, #tpu.memory_space<vmem>>, vector<1x8x128xf32>,
    %c68_479 = arith.constant 68 : index
    %c0_480 = arith.constant 0 : index
    %c0_481 = arith.constant 0 : index
    %1190 = vector.load %arg4[%c68_479, %c0_480, %c0_481] : memref<96x8x128xf32, #tpu.memory_space<vmem>>, vector<1x8x128xf32>
    %1191 = vector.shape_cast %1190 : vector<1x8x128xf32> to vector<8x128xf32>
    %c69_482 = arith.constant 69 : index
    %c0_483 = arith.constant 0 : index
    %c0_484 = arith.constant 0 : index
    %1192 = vector.load %arg4[%c69_482, %c0_483, %c0_484] : memref<96x8x128xf32, #tpu.memory_space<vmem>>, vector<1x8x128xf32>
    %1193 = vector.shape_cast %1192 : vector<1x8x128xf32> to vector<8x128xf32>
    %c70_485 = arith.constant 70 : index
    %c0_486 = arith.constant 0 : index
    %c0_487 = arith.constant 0 : index
    %1194 = vector.load %arg4[%c70_485, %c0_486, %c0_487] : memref<96x8x128xf32, #tpu.memory_space<vmem>>, vector<1x8x128xf32>
    %1195 = vector.shape_cast %1194 : vector<1x8x128xf32> to vector<8x128xf32>
    %c71_488 = arith.constant 71 : index
    %c0_489 = arith.constant 0 : index
    %c0_490 = arith.constant 0 : index
    %1196 = vector.load %arg4[%c71_488, %c0_489, %c0_490] : memref<96x8x128xf32, #tpu.memory_space<vmem>>, vector<1x8x128xf32>
    %1197 = vector.shape_cast %1196 : vector<1x8x128xf32> to vector<8x128xf32>
    %1198 = arith.mulf %1191, %1066 : vector<8x128xf32>
    %1199 = arith.mulf %1193, %1078 : vector<8x128xf32>
    %1200 = arith.addf %1198, %1199 : vector<8x128xf32>
    %1201 = arith.mulf %1195, %1089 : vector<8x128xf32>
    %1202 = arith.addf %1200, %1201 : vector<8x128xf32>
    %c80 = arith.constant 80 : index
    %c0_491 = arith.constant 0 : index
    %c0_492 = arith.constant 0 : index
    %1203 = vector.load %arg4[%c80, %c0_491, %c0_492] : memref<96x8x128xf32, #tpu.memory_space<vmem>>, vector<1x8x128xf32>
    %1204 = vector.shape_cast %1203 : vector<1x8x128xf32> to vector<8x128xf32>
    %1205 = vector.shape_cast %1202 : vector<8x128xf32> to vector<1x8x128xf32>
    tpu.vector_store %arg4[%c80, %c0_491, %c0_492], %1205 {strides = array<i32>} : memref<96x8x128xf32, #tpu.memory_space<vmem>>, vector<1x8x128xf32>,
    %1206 = arith.mulf %1191, %1070 : vector<8x128xf32>
    %1207 = arith.mulf %1193, %1081 : vector<8x128xf32>
    %1208 = arith.addf %1206, %1207 : vector<8x128xf32>
    %1209 = arith.mulf %1195, %1093 : vector<8x128xf32>
    %1210 = arith.addf %1208, %1209 : vector<8x128xf32>
    %c81 = arith.constant 81 : index
    %c0_493 = arith.constant 0 : index
    %c0_494 = arith.constant 0 : index
    %1211 = vector.load %arg4[%c81, %c0_493, %c0_494] : memref<96x8x128xf32, #tpu.memory_space<vmem>>, vector<1x8x128xf32>
    %1212 = vector.shape_cast %1211 : vector<1x8x128xf32> to vector<8x128xf32>
    %1213 = vector.shape_cast %1210 : vector<8x128xf32> to vector<1x8x128xf32>
    tpu.vector_store %arg4[%c81, %c0_493, %c0_494], %1213 {strides = array<i32>} : memref<96x8x128xf32, #tpu.memory_space<vmem>>, vector<1x8x128xf32>,
    %1214 = arith.mulf %1191, %1074 : vector<8x128xf32>
    %1215 = arith.mulf %1193, %1085 : vector<8x128xf32>
    %1216 = arith.addf %1214, %1215 : vector<8x128xf32>
    %1217 = arith.mulf %1195, %1096 : vector<8x128xf32>
    %1218 = arith.addf %1216, %1217 : vector<8x128xf32>
    %c82 = arith.constant 82 : index
    %c0_495 = arith.constant 0 : index
    %c0_496 = arith.constant 0 : index
    %1219 = vector.load %arg4[%c82, %c0_495, %c0_496] : memref<96x8x128xf32, #tpu.memory_space<vmem>>, vector<1x8x128xf32>
    %1220 = vector.shape_cast %1219 : vector<1x8x128xf32> to vector<8x128xf32>
    %1221 = vector.shape_cast %1218 : vector<8x128xf32> to vector<1x8x128xf32>
    tpu.vector_store %arg4[%c82, %c0_495, %c0_496], %1221 {strides = array<i32>} : memref<96x8x128xf32, #tpu.memory_space<vmem>>, vector<1x8x128xf32>,
    %1222 = arith.mulf %1191, %1101 : vector<8x128xf32>
    %1223 = arith.mulf %1193, %1104 : vector<8x128xf32>
    %1224 = arith.addf %1222, %1223 : vector<8x128xf32>
    %1225 = arith.mulf %1195, %1107 : vector<8x128xf32>
    %1226 = arith.addf %1224, %1225 : vector<8x128xf32>
    %1227 = arith.addf %1226, %1197 : vector<8x128xf32>
    %c83 = arith.constant 83 : index
    %c0_497 = arith.constant 0 : index
    %c0_498 = arith.constant 0 : index
    %1228 = vector.load %arg4[%c83, %c0_497, %c0_498] : memref<96x8x128xf32, #tpu.memory_space<vmem>>, vector<1x8x128xf32>
    %1229 = vector.shape_cast %1228 : vector<1x8x128xf32> to vector<8x128xf32>
    %1230 = vector.shape_cast %1227 : vector<8x128xf32> to vector<1x8x128xf32>
    tpu.vector_store %arg4[%c83, %c0_497, %c0_498], %1230 {strides = array<i32>} : memref<96x8x128xf32, #tpu.memory_space<vmem>>, vector<1x8x128xf32>,
    %c21_499 = arith.constant 21 : index
    %c0_500 = arith.constant 0 : index
    %c0_501 = arith.constant 0 : index
    %1231 = vector.load %arg1[%c21_499, %c0_500, %c0_501] : memref<24x8x128xf32, #tpu.memory_space<vmem>>, vector<1x8x128xf32>
    %1232 = vector.shape_cast %1231 : vector<1x8x128xf32> to vector<8x128xf32>
    %c22_502 = arith.constant 22 : index
    %c0_503 = arith.constant 0 : index
    %c0_504 = arith.constant 0 : index
    %1233 = vector.load %arg1[%c22_502, %c0_503, %c0_504] : memref<24x8x128xf32, #tpu.memory_space<vmem>>, vector<1x8x128xf32>
    %1234 = vector.shape_cast %1233 : vector<1x8x128xf32> to vector<8x128xf32>
    %c23_505 = arith.constant 23 : index
    %c0_506 = arith.constant 0 : index
    %c0_507 = arith.constant 0 : index
    %1235 = vector.load %arg1[%c23_505, %c0_506, %c0_507] : memref<24x8x128xf32, #tpu.memory_space<vmem>>, vector<1x8x128xf32>
    %1236 = vector.shape_cast %1235 : vector<1x8x128xf32> to vector<8x128xf32>
    %1237 = arith.mulf %1232, %1232 : vector<8x128xf32>
    %1238 = arith.mulf %1234, %1234 : vector<8x128xf32>
    %1239 = arith.addf %1237, %1238 : vector<8x128xf32>
    %1240 = arith.mulf %1236, %1236 : vector<8x128xf32>
    %1241 = arith.addf %1239, %1240 : vector<8x128xf32>
    %cst_508 = arith.constant 9.99999996E-13 : f32
    %1242 = vector.broadcast %cst_508 : f32 to vector<8x128xf32>
    %1243 = arith.addf %1241, %1242 : vector<8x128xf32>
    %1244 = math.rsqrt %1243 : vector<8x128xf32>
    %1245 = arith.mulf %1243, %1244 : vector<8x128xf32>
    %1246 = math.sin %1245 : vector<8x128xf32>
    %1247 = math.cos %1245 : vector<8x128xf32>
    %cst_509 = arith.constant 1.000000e+00 : f32
    %1248 = vector.broadcast %cst_509 : f32 to vector<8x128xf32>
    %1249 = arith.subf %1248, %1247 : vector<8x128xf32>
    %1250 = arith.mulf %1232, %1244 : vector<8x128xf32>
    %1251 = arith.mulf %1234, %1244 : vector<8x128xf32>
    %1252 = arith.mulf %1236, %1244 : vector<8x128xf32>
    %1253 = arith.mulf %1250, %1250 : vector<8x128xf32>
    %1254 = arith.mulf %1253, %1249 : vector<8x128xf32>
    %1255 = arith.addf %1247, %1254 : vector<8x128xf32>
    %1256 = arith.mulf %1250, %1251 : vector<8x128xf32>
    %1257 = arith.mulf %1256, %1249 : vector<8x128xf32>
    %1258 = arith.mulf %1252, %1246 : vector<8x128xf32>
    %1259 = arith.subf %1257, %1258 : vector<8x128xf32>
    %1260 = arith.mulf %1250, %1252 : vector<8x128xf32>
    %1261 = arith.mulf %1260, %1249 : vector<8x128xf32>
    %1262 = arith.mulf %1251, %1246 : vector<8x128xf32>
    %1263 = arith.addf %1261, %1262 : vector<8x128xf32>
    %1264 = arith.mulf %1251, %1250 : vector<8x128xf32>
    %1265 = arith.mulf %1264, %1249 : vector<8x128xf32>
    %1266 = arith.mulf %1252, %1246 : vector<8x128xf32>
    %1267 = arith.addf %1265, %1266 : vector<8x128xf32>
    %1268 = arith.mulf %1251, %1251 : vector<8x128xf32>
    %1269 = arith.mulf %1268, %1249 : vector<8x128xf32>
    %1270 = arith.addf %1247, %1269 : vector<8x128xf32>
    %1271 = arith.mulf %1251, %1252 : vector<8x128xf32>
    %1272 = arith.mulf %1271, %1249 : vector<8x128xf32>
    %1273 = arith.mulf %1250, %1246 : vector<8x128xf32>
    %1274 = arith.subf %1272, %1273 : vector<8x128xf32>
    %1275 = arith.mulf %1252, %1250 : vector<8x128xf32>
    %1276 = arith.mulf %1275, %1249 : vector<8x128xf32>
    %1277 = arith.mulf %1251, %1246 : vector<8x128xf32>
    %1278 = arith.subf %1276, %1277 : vector<8x128xf32>
    %1279 = arith.mulf %1252, %1251 : vector<8x128xf32>
    %1280 = arith.mulf %1279, %1249 : vector<8x128xf32>
    %1281 = arith.mulf %1250, %1246 : vector<8x128xf32>
    %1282 = arith.addf %1280, %1281 : vector<8x128xf32>
    %1283 = arith.mulf %1252, %1252 : vector<8x128xf32>
    %1284 = arith.mulf %1283, %1249 : vector<8x128xf32>
    %1285 = arith.addf %1247, %1284 : vector<8x128xf32>
    %c6_510 = arith.constant 6 : index
    %c0_511 = arith.constant 0 : index
    %c0_512 = arith.constant 0 : index
    %1286 = vector.load %arg3[%c6_510, %c0_511, %c0_512] : memref<7x8x128xf32, #tpu.memory_space<vmem>>, vector<1x8x128xf32>
    %1287 = vector.shape_cast %1286 : vector<1x8x128xf32> to vector<8x128xf32>
    %c21_513 = arith.constant 21 : index
    %1288 = memref.load %arg2[%c21_513] : memref<24xf32, #tpu.memory_space<smem>>
    %1289 = vector.broadcast %1288 : f32 to vector<8x128xf32>
    %1290 = arith.mulf %1289, %1287 : vector<8x128xf32>
    %c22_514 = arith.constant 22 : index
    %1291 = memref.load %arg2[%c22_514] : memref<24xf32, #tpu.memory_space<smem>>
    %1292 = vector.broadcast %1291 : f32 to vector<8x128xf32>
    %1293 = arith.mulf %1292, %1287 : vector<8x128xf32>
    %c23_515 = arith.constant 23 : index
    %1294 = memref.load %arg2[%c23_515] : memref<24xf32, #tpu.memory_space<smem>>
    %1295 = vector.broadcast %1294 : f32 to vector<8x128xf32>
    %1296 = arith.mulf %1295, %1287 : vector<8x128xf32>
    %c0_516 = arith.constant 0 : index
    %c0_517 = arith.constant 0 : index
    %c0_518 = arith.constant 0 : index
    %1297 = vector.load %arg4[%c0_516, %c0_517, %c0_518] : memref<96x8x128xf32, #tpu.memory_space<vmem>>, vector<1x8x128xf32>
    %1298 = vector.shape_cast %1297 : vector<1x8x128xf32> to vector<8x128xf32>
    %c1_519 = arith.constant 1 : index
    %c0_520 = arith.constant 0 : index
    %c0_521 = arith.constant 0 : index
    %1299 = vector.load %arg4[%c1_519, %c0_520, %c0_521] : memref<96x8x128xf32, #tpu.memory_space<vmem>>, vector<1x8x128xf32>
    %1300 = vector.shape_cast %1299 : vector<1x8x128xf32> to vector<8x128xf32>
    %c2_522 = arith.constant 2 : index
    %c0_523 = arith.constant 0 : index
    %c0_524 = arith.constant 0 : index
    %1301 = vector.load %arg4[%c2_522, %c0_523, %c0_524] : memref<96x8x128xf32, #tpu.memory_space<vmem>>, vector<1x8x128xf32>
    %1302 = vector.shape_cast %1301 : vector<1x8x128xf32> to vector<8x128xf32>
    %c3_525 = arith.constant 3 : index
    %c0_526 = arith.constant 0 : index
    %c0_527 = arith.constant 0 : index
    %1303 = vector.load %arg4[%c3_525, %c0_526, %c0_527] : memref<96x8x128xf32, #tpu.memory_space<vmem>>, vector<1x8x128xf32>
    %1304 = vector.shape_cast %1303 : vector<1x8x128xf32> to vector<8x128xf32>
    %1305 = arith.mulf %1298, %1255 : vector<8x128xf32>
    %1306 = arith.mulf %1300, %1267 : vector<8x128xf32>
    %1307 = arith.addf %1305, %1306 : vector<8x128xf32>
    %1308 = arith.mulf %1302, %1278 : vector<8x128xf32>
    %1309 = arith.addf %1307, %1308 : vector<8x128xf32>
    %c84 = arith.constant 84 : index
    %c0_528 = arith.constant 0 : index
    %c0_529 = arith.constant 0 : index
    %1310 = vector.load %arg4[%c84, %c0_528, %c0_529] : memref<96x8x128xf32, #tpu.memory_space<vmem>>, vector<1x8x128xf32>
    %1311 = vector.shape_cast %1310 : vector<1x8x128xf32> to vector<8x128xf32>
    %1312 = vector.shape_cast %1309 : vector<8x128xf32> to vector<1x8x128xf32>
    tpu.vector_store %arg4[%c84, %c0_528, %c0_529], %1312 {strides = array<i32>} : memref<96x8x128xf32, #tpu.memory_space<vmem>>, vector<1x8x128xf32>,
    %1313 = arith.mulf %1298, %1259 : vector<8x128xf32>
    %1314 = arith.mulf %1300, %1270 : vector<8x128xf32>
    %1315 = arith.addf %1313, %1314 : vector<8x128xf32>
    %1316 = arith.mulf %1302, %1282 : vector<8x128xf32>
    %1317 = arith.addf %1315, %1316 : vector<8x128xf32>
    %c85 = arith.constant 85 : index
    %c0_530 = arith.constant 0 : index
    %c0_531 = arith.constant 0 : index
    %1318 = vector.load %arg4[%c85, %c0_530, %c0_531] : memref<96x8x128xf32, #tpu.memory_space<vmem>>, vector<1x8x128xf32>
    %1319 = vector.shape_cast %1318 : vector<1x8x128xf32> to vector<8x128xf32>
    %1320 = vector.shape_cast %1317 : vector<8x128xf32> to vector<1x8x128xf32>
    tpu.vector_store %arg4[%c85, %c0_530, %c0_531], %1320 {strides = array<i32>} : memref<96x8x128xf32, #tpu.memory_space<vmem>>, vector<1x8x128xf32>,
    %1321 = arith.mulf %1298, %1263 : vector<8x128xf32>
    %1322 = arith.mulf %1300, %1274 : vector<8x128xf32>
    %1323 = arith.addf %1321, %1322 : vector<8x128xf32>
    %1324 = arith.mulf %1302, %1285 : vector<8x128xf32>
    %1325 = arith.addf %1323, %1324 : vector<8x128xf32>
    %c86 = arith.constant 86 : index
    %c0_532 = arith.constant 0 : index
    %c0_533 = arith.constant 0 : index
    %1326 = vector.load %arg4[%c86, %c0_532, %c0_533] : memref<96x8x128xf32, #tpu.memory_space<vmem>>, vector<1x8x128xf32>
    %1327 = vector.shape_cast %1326 : vector<1x8x128xf32> to vector<8x128xf32>
    %1328 = vector.shape_cast %1325 : vector<8x128xf32> to vector<1x8x128xf32>
    tpu.vector_store %arg4[%c86, %c0_532, %c0_533], %1328 {strides = array<i32>} : memref<96x8x128xf32, #tpu.memory_space<vmem>>, vector<1x8x128xf32>,
    %1329 = arith.mulf %1298, %1290 : vector<8x128xf32>
    %1330 = arith.mulf %1300, %1293 : vector<8x128xf32>
    %1331 = arith.addf %1329, %1330 : vector<8x128xf32>
    %1332 = arith.mulf %1302, %1296 : vector<8x128xf32>
    %1333 = arith.addf %1331, %1332 : vector<8x128xf32>
    %1334 = arith.addf %1333, %1304 : vector<8x128xf32>
    %c87 = arith.constant 87 : index
    %c0_534 = arith.constant 0 : index
    %c0_535 = arith.constant 0 : index
    %1335 = vector.load %arg4[%c87, %c0_534, %c0_535] : memref<96x8x128xf32, #tpu.memory_space<vmem>>, vector<1x8x128xf32>
    %1336 = vector.shape_cast %1335 : vector<1x8x128xf32> to vector<8x128xf32>
    %1337 = vector.shape_cast %1334 : vector<8x128xf32> to vector<1x8x128xf32>
    tpu.vector_store %arg4[%c87, %c0_534, %c0_535], %1337 {strides = array<i32>} : memref<96x8x128xf32, #tpu.memory_space<vmem>>, vector<1x8x128xf32>,
    %c4_536 = arith.constant 4 : index
    %c0_537 = arith.constant 0 : index
    %c0_538 = arith.constant 0 : index
    %1338 = vector.load %arg4[%c4_536, %c0_537, %c0_538] : memref<96x8x128xf32, #tpu.memory_space<vmem>>, vector<1x8x128xf32>
    %1339 = vector.shape_cast %1338 : vector<1x8x128xf32> to vector<8x128xf32>
    %c5_539 = arith.constant 5 : index
    %c0_540 = arith.constant 0 : index
    %c0_541 = arith.constant 0 : index
    %1340 = vector.load %arg4[%c5_539, %c0_540, %c0_541] : memref<96x8x128xf32, #tpu.memory_space<vmem>>, vector<1x8x128xf32>
    %1341 = vector.shape_cast %1340 : vector<1x8x128xf32> to vector<8x128xf32>
    %c6_542 = arith.constant 6 : index
    %c0_543 = arith.constant 0 : index
    %c0_544 = arith.constant 0 : index
    %1342 = vector.load %arg4[%c6_542, %c0_543, %c0_544] : memref<96x8x128xf32, #tpu.memory_space<vmem>>, vector<1x8x128xf32>
    %1343 = vector.shape_cast %1342 : vector<1x8x128xf32> to vector<8x128xf32>
    %c7_545 = arith.constant 7 : index
    %c0_546 = arith.constant 0 : index
    %c0_547 = arith.constant 0 : index
    %1344 = vector.load %arg4[%c7_545, %c0_546, %c0_547] : memref<96x8x128xf32, #tpu.memory_space<vmem>>, vector<1x8x128xf32>
    %1345 = vector.shape_cast %1344 : vector<1x8x128xf32> to vector<8x128xf32>
    %1346 = arith.mulf %1339, %1255 : vector<8x128xf32>
    %1347 = arith.mulf %1341, %1267 : vector<8x128xf32>
    %1348 = arith.addf %1346, %1347 : vector<8x128xf32>
    %1349 = arith.mulf %1343, %1278 : vector<8x128xf32>
    %1350 = arith.addf %1348, %1349 : vector<8x128xf32>
    %c88 = arith.constant 88 : index
    %c0_548 = arith.constant 0 : index
    %c0_549 = arith.constant 0 : index
    %1351 = vector.load %arg4[%c88, %c0_548, %c0_549] : memref<96x8x128xf32, #tpu.memory_space<vmem>>, vector<1x8x128xf32>
    %1352 = vector.shape_cast %1351 : vector<1x8x128xf32> to vector<8x128xf32>
    %1353 = vector.shape_cast %1350 : vector<8x128xf32> to vector<1x8x128xf32>
    tpu.vector_store %arg4[%c88, %c0_548, %c0_549], %1353 {strides = array<i32>} : memref<96x8x128xf32, #tpu.memory_space<vmem>>, vector<1x8x128xf32>,
    %1354 = arith.mulf %1339, %1259 : vector<8x128xf32>
    %1355 = arith.mulf %1341, %1270 : vector<8x128xf32>
    %1356 = arith.addf %1354, %1355 : vector<8x128xf32>
    %1357 = arith.mulf %1343, %1282 : vector<8x128xf32>
    %1358 = arith.addf %1356, %1357 : vector<8x128xf32>
    %c89 = arith.constant 89 : index
    %c0_550 = arith.constant 0 : index
    %c0_551 = arith.constant 0 : index
    %1359 = vector.load %arg4[%c89, %c0_550, %c0_551] : memref<96x8x128xf32, #tpu.memory_space<vmem>>, vector<1x8x128xf32>
    %1360 = vector.shape_cast %1359 : vector<1x8x128xf32> to vector<8x128xf32>
    %1361 = vector.shape_cast %1358 : vector<8x128xf32> to vector<1x8x128xf32>
    tpu.vector_store %arg4[%c89, %c0_550, %c0_551], %1361 {strides = array<i32>} : memref<96x8x128xf32, #tpu.memory_space<vmem>>, vector<1x8x128xf32>,
    %1362 = arith.mulf %1339, %1263 : vector<8x128xf32>
    %1363 = arith.mulf %1341, %1274 : vector<8x128xf32>
    %1364 = arith.addf %1362, %1363 : vector<8x128xf32>
    %1365 = arith.mulf %1343, %1285 : vector<8x128xf32>
    %1366 = arith.addf %1364, %1365 : vector<8x128xf32>
    %c90 = arith.constant 90 : index
    %c0_552 = arith.constant 0 : index
    %c0_553 = arith.constant 0 : index
    %1367 = vector.load %arg4[%c90, %c0_552, %c0_553] : memref<96x8x128xf32, #tpu.memory_space<vmem>>, vector<1x8x128xf32>
    %1368 = vector.shape_cast %1367 : vector<1x8x128xf32> to vector<8x128xf32>
    %1369 = vector.shape_cast %1366 : vector<8x128xf32> to vector<1x8x128xf32>
    tpu.vector_store %arg4[%c90, %c0_552, %c0_553], %1369 {strides = array<i32>} : memref<96x8x128xf32, #tpu.memory_space<vmem>>, vector<1x8x128xf32>,
    %1370 = arith.mulf %1339, %1290 : vector<8x128xf32>
    %1371 = arith.mulf %1341, %1293 : vector<8x128xf32>
    %1372 = arith.addf %1370, %1371 : vector<8x128xf32>
    %1373 = arith.mulf %1343, %1296 : vector<8x128xf32>
    %1374 = arith.addf %1372, %1373 : vector<8x128xf32>
    %1375 = arith.addf %1374, %1345 : vector<8x128xf32>
    %c91 = arith.constant 91 : index
    %c0_554 = arith.constant 0 : index
    %c0_555 = arith.constant 0 : index
    %1376 = vector.load %arg4[%c91, %c0_554, %c0_555] : memref<96x8x128xf32, #tpu.memory_space<vmem>>, vector<1x8x128xf32>
    %1377 = vector.shape_cast %1376 : vector<1x8x128xf32> to vector<8x128xf32>
    %1378 = vector.shape_cast %1375 : vector<8x128xf32> to vector<1x8x128xf32>
    tpu.vector_store %arg4[%c91, %c0_554, %c0_555], %1378 {strides = array<i32>} : memref<96x8x128xf32, #tpu.memory_space<vmem>>, vector<1x8x128xf32>,
    %c8_556 = arith.constant 8 : index
    %c0_557 = arith.constant 0 : index
    %c0_558 = arith.constant 0 : index
    %1379 = vector.load %arg4[%c8_556, %c0_557, %c0_558] : memref<96x8x128xf32, #tpu.memory_space<vmem>>, vector<1x8x128xf32>
    %1380 = vector.shape_cast %1379 : vector<1x8x128xf32> to vector<8x128xf32>
    %c9_559 = arith.constant 9 : index
    %c0_560 = arith.constant 0 : index
    %c0_561 = arith.constant 0 : index
    %1381 = vector.load %arg4[%c9_559, %c0_560, %c0_561] : memref<96x8x128xf32, #tpu.memory_space<vmem>>, vector<1x8x128xf32>
    %1382 = vector.shape_cast %1381 : vector<1x8x128xf32> to vector<8x128xf32>
    %c10_562 = arith.constant 10 : index
    %c0_563 = arith.constant 0 : index
    %c0_564 = arith.constant 0 : index
    %1383 = vector.load %arg4[%c10_562, %c0_563, %c0_564] : memref<96x8x128xf32, #tpu.memory_space<vmem>>, vector<1x8x128xf32>
    %1384 = vector.shape_cast %1383 : vector<1x8x128xf32> to vector<8x128xf32>
    %c11_565 = arith.constant 11 : index
    %c0_566 = arith.constant 0 : index
    %c0_567 = arith.constant 0 : index
    %1385 = vector.load %arg4[%c11_565, %c0_566, %c0_567] : memref<96x8x128xf32, #tpu.memory_space<vmem>>, vector<1x8x128xf32>
    %1386 = vector.shape_cast %1385 : vector<1x8x128xf32> to vector<8x128xf32>
    %1387 = arith.mulf %1380, %1255 : vector<8x128xf32>
    %1388 = arith.mulf %1382, %1267 : vector<8x128xf32>
    %1389 = arith.addf %1387, %1388 : vector<8x128xf32>
    %1390 = arith.mulf %1384, %1278 : vector<8x128xf32>
    %1391 = arith.addf %1389, %1390 : vector<8x128xf32>
    %c92 = arith.constant 92 : index
    %c0_568 = arith.constant 0 : index
    %c0_569 = arith.constant 0 : index
    %1392 = vector.load %arg4[%c92, %c0_568, %c0_569] : memref<96x8x128xf32, #tpu.memory_space<vmem>>, vector<1x8x128xf32>
    %1393 = vector.shape_cast %1392 : vector<1x8x128xf32> to vector<8x128xf32>
    %1394 = vector.shape_cast %1391 : vector<8x128xf32> to vector<1x8x128xf32>
    tpu.vector_store %arg4[%c92, %c0_568, %c0_569], %1394 {strides = array<i32>} : memref<96x8x128xf32, #tpu.memory_space<vmem>>, vector<1x8x128xf32>,
    %1395 = arith.mulf %1380, %1259 : vector<8x128xf32>
    %1396 = arith.mulf %1382, %1270 : vector<8x128xf32>
    %1397 = arith.addf %1395, %1396 : vector<8x128xf32>
    %1398 = arith.mulf %1384, %1282 : vector<8x128xf32>
    %1399 = arith.addf %1397, %1398 : vector<8x128xf32>
    %c93 = arith.constant 93 : index
    %c0_570 = arith.constant 0 : index
    %c0_571 = arith.constant 0 : index
    %1400 = vector.load %arg4[%c93, %c0_570, %c0_571] : memref<96x8x128xf32, #tpu.memory_space<vmem>>, vector<1x8x128xf32>
    %1401 = vector.shape_cast %1400 : vector<1x8x128xf32> to vector<8x128xf32>
    %1402 = vector.shape_cast %1399 : vector<8x128xf32> to vector<1x8x128xf32>
    tpu.vector_store %arg4[%c93, %c0_570, %c0_571], %1402 {strides = array<i32>} : memref<96x8x128xf32, #tpu.memory_space<vmem>>, vector<1x8x128xf32>,
    %1403 = arith.mulf %1380, %1263 : vector<8x128xf32>
    %1404 = arith.mulf %1382, %1274 : vector<8x128xf32>
    %1405 = arith.addf %1403, %1404 : vector<8x128xf32>
    %1406 = arith.mulf %1384, %1285 : vector<8x128xf32>
    %1407 = arith.addf %1405, %1406 : vector<8x128xf32>
    %c94 = arith.constant 94 : index
    %c0_572 = arith.constant 0 : index
    %c0_573 = arith.constant 0 : index
    %1408 = vector.load %arg4[%c94, %c0_572, %c0_573] : memref<96x8x128xf32, #tpu.memory_space<vmem>>, vector<1x8x128xf32>
    %1409 = vector.shape_cast %1408 : vector<1x8x128xf32> to vector<8x128xf32>
    %1410 = vector.shape_cast %1407 : vector<8x128xf32> to vector<1x8x128xf32>
    tpu.vector_store %arg4[%c94, %c0_572, %c0_573], %1410 {strides = array<i32>} : memref<96x8x128xf32, #tpu.memory_space<vmem>>, vector<1x8x128xf32>,
    %1411 = arith.mulf %1380, %1290 : vector<8x128xf32>
    %1412 = arith.mulf %1382, %1293 : vector<8x128xf32>
    %1413 = arith.addf %1411, %1412 : vector<8x128xf32>
    %1414 = arith.mulf %1384, %1296 : vector<8x128xf32>
    %1415 = arith.addf %1413, %1414 : vector<8x128xf32>
    %1416 = arith.addf %1415, %1386 : vector<8x128xf32>
    %c95 = arith.constant 95 : index
    %c0_574 = arith.constant 0 : index
    %c0_575 = arith.constant 0 : index
    %1417 = vector.load %arg4[%c95, %c0_574, %c0_575] : memref<96x8x128xf32, #tpu.memory_space<vmem>>, vector<1x8x128xf32>
    %1418 = vector.shape_cast %1417 : vector<1x8x128xf32> to vector<8x128xf32>
    %1419 = vector.shape_cast %1416 : vector<8x128xf32> to vector<1x8x128xf32>
    tpu.vector_store %arg4[%c95, %c0_574, %c0_575], %1419 {strides = array<i32>} : memref<96x8x128xf32, #tpu.memory_space<vmem>>, vector<1x8x128xf32>,
    return
  }
  func.func @transform_0(%arg0: i32) -> (i32, i32, i32) {
    %c0_i32 = arith.constant 0 : i32
    %c0_i32_0 = arith.constant 0 : i32
    %c0_i32_1 = arith.constant 0 : i32
    return %c0_i32, %arg0, %c0_i32_0 : i32, i32, i32
  }
  func.func @transform_1(%arg0: i32) -> i32 {
    %c0_i32 = arith.constant 0 : i32
    %c0_i32_0 = arith.constant 0 : i32
    return %c0_i32 : i32
  }
  func.func @transform_2(%arg0: i32) -> (i32, i32, i32) {
    %c0_i32 = arith.constant 0 : i32
    %c0_i32_0 = arith.constant 0 : i32
    %c0_i32_1 = arith.constant 0 : i32
    return %c0_i32, %arg0, %c0_i32_0 : i32, i32, i32
  }
  func.func @transform_3(%arg0: i32) -> (i32, i32, i32) {
    %c0_i32 = arith.constant 0 : i32
    %c0_i32_0 = arith.constant 0 : i32
    %c0_i32_1 = arith.constant 0 : i32
    return %c0_i32, %arg0, %c0_i32_0 : i32, i32, i32
  }
}

</mosaic_0001>

<llo_original>
// kernel: tpu_custom_call.1
$region0: #{tpu_custom_call.1}
  #allocation0 [shape = 'u32[]', space=smem, size = 0x4, offset = 0x4, fixed_abs, tag = 'smem constant byte address 0x4 - core index']
  #allocation1 [shape = 'u32[144,128]{1,0:T(1,128)}', space=vmem, size = 0x12000, scoped, tag = 'internal scratch']
  %s0 = inlined_call_operand.hbm [shape: f32[24,8,128], index: 0, kind: input, shape index: {}]
  %s1 = inlined_call_operand.vmem [shape: f32[24], index: 1, kind: input, shape index: {}]
  %s2 = inlined_call_operand.hbm [shape: f32[7,8,128], index: 2, kind: input, shape index: {}]
  %s3 = inlined_call_operand.hbm [shape: f32[96,8,128], index: 3, kind: output, shape index: {}]
  %s4 = sld [smem:[#allocation0]]
  $region34: #{tpu_custom_call.1} parent=0
    _
  %s6 = ssub.s32 1, %s4
  %s7 = scalar_select 0, %s6, %s4
  $region1: #{tpu_custom_call.1} parent=0
    #allocation2 [shape = 'u8[98304]{0}', space=vmem, size = 0x18000, scoped, tag = 'input window, operand 0, single buffered']
    #allocation3 [shape = 's32[1]{0}', space=sflag, size = 0x4, scoped, tag = 'scoped memory for tpu_custom_call.1']
    #allocation4 [shape = 's32[1]{0}', space=sflag, size = 0x4, scoped, tag = 'scoped memory for tpu_custom_call.1']
    #allocation5 [shape = 's32[1]{0}', space=sflag, size = 0x4, scoped, tag = 'scoped memory for tpu_custom_call.1']
    #allocation6 [shape = 'u8[512]{0}', space=smem, size = 0x200, scoped, tag = 'input window, operand 1, single buffered']
    #allocation7 [shape = 'u8[28672]{0}', space=vmem, size = 0x7000, scoped, tag = 'input window, operand 2, single buffered']
    #allocation8 [shape = 's32[1]{0}', space=sflag, size = 0x4, scoped, tag = 'scoped memory for tpu_custom_call.1']
    #allocation9 [shape = 'u8[393216]{0}', space=vmem, size = 0x60000, scoped, tag = 'output window, operand 0, single buffered']
    %8 = vsyncpa [#allocation3], 0
    %9 = vsyncpa [#allocation5], 0
    %10 = vsyncpa [#allocation8], 0
    %11 = vsyncpa [#allocation4], 0
    // Predicated region
    $region2: #{tpu_custom_call.1} parent=1 // pred_check
      _
    $region3: #{tpu_custom_call.1} parent=1 // pred_check_branch
      %13 = sbr.rel (0) target = $region5
    $region4: #{tpu_custom_call.1} parent=1 // pred_region
      %s15 = ssub.s32 3072, 3072
      %16 = vsyncadd [#allocation3], %s15
      %s17 = sshll.u32 [#allocation2], 4
      %s18 = int_to_ptr.vmem [resolvable:$true] %s17
      %23 = dma.hbm_to_vmem [thread:$0]  %s0, 3072, %s18, [#allocation3], 128, 128, 8
    $region5: #{tpu_custom_call.1} parent=1 // pred_fallthru
      _
    // Predicated region
    $region6: #{tpu_custom_call.1} parent=1 // pred_check
      _
    $region7: #{tpu_custom_call.1} parent=1 // pred_check_branch
      %25 = sbr.rel (0) target = $region9
    $region8: #{tpu_custom_call.1} parent=1 // pred_region
      %s27 = ssub.s32 16, 16
      %28 = vsyncadd [#allocation5], %s27
      %s30 = sshll.u32 %s1, 4
      %s31 = int_to_ptr.vmem [resolvable:$true] %s30
      %33 = dma.vmem_to_smem %s31, 16, [#allocation6], [#allocation5]
    $region9: #{tpu_custom_call.1} parent=1 // pred_fallthru
      _
    // Predicated region
    $region10: #{tpu_custom_call.1} parent=1 // pred_check
      _
    $region11: #{tpu_custom_call.1} parent=1 // pred_check_branch
      %35 = sbr.rel (0) target = $region13
    $region12: #{tpu_custom_call.1} parent=1 // pred_region
      %s37 = ssub.s32 896, 896
      %38 = vsyncadd [#allocation8], %s37
      %s39 = sshll.u32 [#allocation7], 4
      %s40 = int_to_ptr.vmem [resolvable:$true] %s39
      %45 = dma.hbm_to_vmem [thread:$0]  %s2, 896, %s40, [#allocation8], 128, 128, 8
    $region13: #{tpu_custom_call.1} parent=1 // pred_fallthru
      _
    // Predicated region
    $region14: #{tpu_custom_call.1} parent=1 // pred_check
      _
    $region15: #{tpu_custom_call.1} parent=1 // pred_check_branch
      %47 = sbr.rel (0) target = $region17
    $region16: #{tpu_custom_call.1} parent=1 // pred_region
      %48 = dma.done [#allocation3], 3072
    $region17: #{tpu_custom_call.1} parent=1 // pred_fallthru
      _
    // Predicated region
    $region18: #{tpu_custom_call.1} parent=1 // pred_check
      _
    $region19: #{tpu_custom_call.1} parent=1 // pred_check_branch
      %50 = sbr.rel (0) target = $region21
    $region20: #{tpu_custom_call.1} parent=1 // pred_region
      %51 = dma.done [#allocation5], 16
    $region21: #{tpu_custom_call.1} parent=1 // pred_fallthru
      _
    // Predicated region
    $region22: #{tpu_custom_call.1} parent=1 // pred_check
      _
    $region23: #{tpu_custom_call.1} parent=1 // pred_check_branch
      %53 = sbr.rel (0) target = $region25
    $region24: #{tpu_custom_call.1} parent=1 // pred_region
      %54 = dma.done [#allocation8], 896
    $region25: #{tpu_custom_call.1} parent=1 // pred_fallthru
      _
    %55 = sfence
    %v56 = vld [vmem:[#allocation2] sm:$0xff]
    %s57 = scalar_lea.vmem [#allocation2], 8
    %v58 = vld [vmem:[%s57] sm:$0xff]
    %s59 = scalar_lea.vmem [#allocation2], 16
    %v60 = vld [vmem:[%s59] sm:$0xff]
    %v61 = vmul.f32 %v56, %v56
    %v62 = vmul.f32 %v58, %v58
    %v63 = vadd.f32 %v61, %v62
    %v64 = vmul.f32 %v60, %v60
    %v65 = vadd.f32 %v63, %v64
    %v66 = vadd.f32 %v65, 1e-12
    %v67 = vrsqrt.pop %v66
    %v68 = vmul.f32 %v66, %v67
    %v69 = vand.u32 2147483647, %v68
    %vm70 = vcmp.le.f32.partialorder %v69, 0.7853982
    %vm71 = vcmp.lt.s32.totalorder %v68, 0
    %v72 = vand.u32 %v68, 2139095040
    %v73 = vshrl.u32 %v72, 23
    %v74 = vsub.s32 %v73, 127
    %v75 = vand.u32 2147483647, %v68
    %v76 = vand.u32 %v75, 8388607
    %v77 = vor.u32 %v76, 8388608
    %v78 = vsub.s32 0, %v77
    %v79 = vadd.s32 %v74, 1
    %vm80 = vcmp.gt.s32.totalorder %v79, 0
    %v81 = vsel %vm80, %v79, 0
    %v82 = vshrl.u32 %v81, 5
    %v83 = vand.u32 %v81, 31
    %v84 = vsub.s32 32, %v83
    %v85 = vshrl.u32 683565275, %v84
    %v86 = vshll.u32 683565275, %v83
    %v87 = vshrl.u32 2475754826, %v84
    %v88 = vor.u32 %v86, %v87
    %v89 = vshll.u32 2475754826, %v83
    %v90 = vshrl.u32 2131351028, %v84
    %v91 = vor.u32 %v89, %v90
    %v92 = vshll.u32 2131351028, %v83
    %v93 = vshrl.u32 2102212464, %v84
    %v94 = vor.u32 %v92, %v93
    %v95 = vshll.u32 2102212464, %v83
    %v96 = vshrl.u32 920167782, %v84
    %v97 = vor.u32 %v95, %v96
    %v98 = vshll.u32 920167782, %v83
    %v99 = vshrl.u32 1326507024, %v84
    %v100 = vor.u32 %v98, %v99
    %vm101 = vcmp.lt.s32.totalorder %v82, 1
    %vm102 = vcmp.lt.s32.totalorder %v82, 2
    %vm103 = vcmp.lt.s32.totalorder %v82, 3
    %vm104 = vcmp.lt.s32.totalorder %v82, 4
    %v105 = vsel %vm101, %v85, %v88
    %v106 = vsel %vm104, %v94, 2102212464
    %v107 = vsel %vm103, %v91, %v106
    %v108 = vsel %vm102, %v105, %v107
    %v109 = vsel %vm101, %v88, %v91
    %v110 = vsel %vm104, %v97, 920167782
    %v111 = vsel %vm103, %v94, %v110
    %v112 = vsel %vm102, %v109, %v111
    %v113 = vsel %vm101, %v91, %v94
    %v114 = vsel %vm104, %v100, 1326507024
    %v115 = vsel %vm103, %v97, %v114
    %v116 = vsel %vm102, %v113, %v115
    %v117 = vshll.u32 %v77, 8
    %v118 = vmul.u32.u64.compose %v117, %v116
    %v119 = vextract.low.u32 %v118
    %v120 = vextract.high.u32 %v118
    %v121 = vmul.u32.u64.compose %v117, %v112
    %v122 = vextract.low.u32 %v121
    %v123 = vextract.high.u32 %v121
    %v124 = vmul.u32 %v117, %v108
    %v125 = vadd.s32 %v120, %v122
    %vm126 = vc.u32 %v120, %v122
    %v127 = vadd.s32 %v123, 1
    %v128 = vsel %vm126, %v127, %v123
    %v129 = vadd.s32 %v124, %v128
    %v130 = vadd.s32 %v129, 536870912
    %v131 = vshrl.u32 %v130, 30
    %v132 = vshll.u32 %v131, 30
    %v133 = vsub.s32 %v129, %v132
    %vm134 = vcmp.lt.s32.totalorder %v133, 0
    %v135 = vsub.s32 0, %v133
    %v136 = vsel %vm134, %v135, %v133
    %v137 = vclz %v136
    %v138 = vsub.s32 %v137, 2
    %vm139 = vcmp.gt.s32.totalorder 0, %v138
    %v140 = vsel %vm139, 0, %v138
    %v141 = vsub.s32 32, %v140
    %v142 = vshll.u32 %v133, %v140
    %v143 = vshrl.u32 %v125, %v141
    %v144 = vor.u32 %v142, %v143
    %v145 = vsub.s32 4294967266, %v140
    %v146 = vadd.s32 %v145, 127
    %v147 = vshll.u32 %v146, 23
    %v148 = vor.u32 4788187, %v147
    %v149 = vand.u32 2147483647, %v148
    %v151 = vcvt.s32.f32 %v144
    %v152 = vmul.f32 %v151, %v149
    %v153 = vxor.u32 %v152, 2147483648
    %v154 = vsel %vm71, %v153, %v152
    %v155 = vsub.s32 4, %v131
    %v156 = vsel %vm71, %v155, %v131
    %v157 = vsel %vm70, %v68, %v154
    %v158 = vsel %vm70, 0, %v156
    %v159 = vcosq.f32.pop %v157
    %v160 = vsinq.f32.pop %v157
    %vm161 = vweird.f32 %v68
    %v162 = vadd.s32 %v158, 3
    %v163 = vand.u32 %v162, 3
    %vm164 = vcmp.lt.s32.totalorder %v163, 2
    %vm165 = vcmp.eq.s32.totalorder %v163, 0
    %v166 = vxor.u32 %v160, 2147483648
    %v167 = vsel %vm165, %v159, %v166
    %vm168 = vcmp.eq.s32.totalorder %v163, 2
    %v169 = vxor.u32 %v159, 2147483648
    %v170 = vsel %vm168, %v169, %v160
    %v171 = vsel %vm164, %v167, %v170
    %v172 = vsel %vm161, nan, %v171
    %v173 = vand.u32 2147483647, %v68
    %vm174 = vcmp.le.f32.partialorder %v173, 0.7853982
    %vm175 = vcmp.lt.s32.totalorder %v68, 0
    %v176 = vand.u32 %v68, 2139095040
    %v177 = vshrl.u32 %v176, 23
    %v178 = vsub.s32 %v177, 127
    %v179 = vand.u32 2147483647, %v68
    %v180 = vand.u32 %v179, 8388607
    %v181 = vor.u32 %v180, 8388608
    %v182 = vsub.s32 0, %v181
    %v183 = vadd.s32 %v178, 1
    %vm184 = vcmp.gt.s32.totalorder %v183, 0
    %v185 = vsel %vm184, %v183, 0
    %v186 = vshrl.u32 %v185, 5
    %v187 = vand.u32 %v185, 31
    %v188 = vsub.s32 32, %v187
    %v189 = vshrl.u32 683565275, %v188
    %v190 = vshll.u32 683565275, %v187
    %v191 = vshrl.u32 2475754826, %v188
    %v192 = vor.u32 %v190, %v191
    %v193 = vshll.u32 2475754826, %v187
    %v194 = vshrl.u32 2131351028, %v188
    %v195 = vor.u32 %v193, %v194
    %v196 = vshll.u32 2131351028, %v187
    %v197 = vshrl.u32 2102212464, %v188
    %v198 = vor.u32 %v196, %v197
    %v199 = vshll.u32 2102212464, %v187
    %v200 = vshrl.u32 920167782, %v188
    %v201 = vor.u32 %v199, %v200
    %v202 = vshll.u32 920167782, %v187
    %v203 = vshrl.u32 1326507024, %v188
    %v204 = vor.u32 %v202, %v203
    %vm205 = vcmp.lt.s32.totalorder %v186, 1
    %vm206 = vcmp.lt.s32.totalorder %v186, 2
    %vm207 = vcmp.lt.s32.totalorder %v186, 3
    %vm208 = vcmp.lt.s32.totalorder %v186, 4
    %v209 = vsel %vm205, %v189, %v192
    %v210 = vsel %vm208, %v198, 2102212464
    %v211 = vsel %vm207, %v195, %v210
    %v212 = vsel %vm206, %v209, %v211
    %v213 = vsel %vm205, %v192, %v195
    %v214 = vsel %vm208, %v201, 920167782
    %v215 = vsel %vm207, %v198, %v214
    %v216 = vsel %vm206, %v213, %v215
    %v217 = vsel %vm205, %v195, %v198
    %v218 = vsel %vm208, %v204, 1326507024
    %v219 = vsel %vm207, %v201, %v218
    %v220 = vsel %vm206, %v217, %v219
    %v221 = vshll.u32 %v181, 8
    %v222 = vmul.u32.u64.compose %v221, %v220
    %v223 = vextract.low.u32 %v222
    %v224 = vextract.high.u32 %v222
    %v225 = vmul.u32.u64.compose %v221, %v216
    %v226 = vextract.low.u32 %v225
    %v227 = vextract.high.u32 %v225
    %v228 = vmul.u32 %v221, %v212
    %v229 = vadd.s32 %v224, %v226
    %vm230 = vc.u32 %v224, %v226
    %v231 = vadd.s32 %v227, 1
    %v232 = vsel %vm230, %v231, %v227
    %v233 = vadd.s32 %v228, %v232
    %v234 = vadd.s32 %v233, 536870912
    %v235 = vshrl.u32 %v234, 30
    %v236 = vshll.u32 %v235, 30
    %v237 = vsub.s32 %v233, %v236
    %vm238 = vcmp.lt.s32.totalorder %v237, 0
    %v239 = vsub.s32 0, %v237
    %v240 = vsel %vm238, %v239, %v237
    %v241 = vclz %v240
    %v242 = vsub.s32 %v241, 2
    %vm243 = vcmp.gt.s32.totalorder 0, %v242
    %v244 = vsel %vm243, 0, %v242
    %v245 = vsub.s32 32, %v244
    %v246 = vshll.u32 %v237, %v244
    %v247 = vshrl.u32 %v229, %v245
    %v248 = vor.u32 %v246, %v247
    %v249 = vsub.s32 4294967266, %v244
    %v250 = vadd.s32 %v249, 127
    %v251 = vshll.u32 %v250, 23
    %v252 = vor.u32 4788187, %v251
    %v253 = vand.u32 2147483647, %v252
    %v255 = vcvt.s32.f32 %v248
    %v256 = vmul.f32 %v255, %v253
    %v257 = vxor.u32 %v256, 2147483648
    %v258 = vsel %vm175, %v257, %v256
    %v259 = vsub.s32 4, %v235
    %v260 = vsel %vm175, %v259, %v235
    %v261 = vsel %vm174, %v68, %v258
    %v262 = vsel %vm174, 0, %v260
    %v263 = vcosq.f32.pop %v261
    %v264 = vsinq.f32.pop %v261
    %vm265 = vweird.f32 %v68
    %v266 = vand.u32 %v262, 3
    %vm267 = vcmp.lt.s32.totalorder %v266, 2
    %vm268 = vcmp.eq.s32.totalorder %v266, 0
    %v269 = vxor.u32 %v264, 2147483648
    %v270 = vsel %vm268, %v263, %v269
    %vm271 = vcmp.eq.s32.totalorder %v266, 2
    %v272 = vxor.u32 %v263, 2147483648
    %v273 = vsel %vm271, %v272, %v264
    %v274 = vsel %vm267, %v270, %v273
    %v275 = vsel %vm265, nan, %v274
    %v276 = vsub.f32 1.0, %v275
    %v277 = vmul.f32 %v56, %v67
    %v278 = vmul.f32 %v58, %v67
    %v279 = vmul.f32 %v60, %v67
    %v280 = vmul.f32 %v277, %v277
    %v281 = vmul.f32 %v280, %v276
    %v282 = vadd.f32 %v275, %v281
    %v283 = vmul.f32 %v277, %v278
    %v284 = vmul.f32 %v283, %v276
    %v285 = vmul.f32 %v279, %v172
    %v286 = vsub.f32 %v284, %v285
    %v287 = vmul.f32 %v277, %v279
    %v288 = vmul.f32 %v287, %v276
    %v289 = vmul.f32 %v278, %v172
    %v290 = vadd.f32 %v288, %v289
    %v291 = vadd.f32 %v284, %v285
    %v292 = vmul.f32 %v278, %v278
    %v293 = vmul.f32 %v292, %v276
    %v294 = vadd.f32 %v275, %v293
    %v295 = vmul.f32 %v278, %v279
    %v296 = vmul.f32 %v295, %v276
    %v297 = vmul.f32 %v277, %v172
    %v298 = vsub.f32 %v296, %v297
    %v299 = vsub.f32 %v288, %v289
    %v300 = vadd.f32 %v296, %v297
    %v301 = vmul.f32 %v279, %v279
    %v302 = vmul.f32 %v301, %v276
    %v303 = vadd.f32 %v275, %v302
    %304 = vst [vmem:[#allocation9] sm:$0xff] %v282
    %s305 = scalar_lea.vmem [#allocation9], 8
    %306 = vst [vmem:[%s305] sm:$0xff] %v286
    %s307 = scalar_lea.vmem [#allocation9], 16
    %308 = vst [vmem:[%s307] sm:$0xff] %v290
    %s309 = sld [smem:[#allocation6]]
    %v310 = vstv %s309
    %s311 = scalar_lea.vmem [#allocation9], 24
    %312 = vst [vmem:[%s311] sm:$0xff] %v310
    %s313 = scalar_lea.vmem [#allocation9], 32
    %314 = vst [vmem:[%s313] sm:$0xff] %v291
    %s315 = scalar_lea.vmem [#allocation9], 40
    %316 = vst [vmem:[%s315] sm:$0xff] %v294
    %s317 = scalar_lea.vmem [#allocation9], 48
    %318 = vst [vmem:[%s317] sm:$0xff] %v298
    %s319 = sld [smem:[#allocation6 + $0x1]]
    %v320 = vstv %s319
    %s321 = scalar_lea.vmem [#allocation9], 56
    %322 = vst [vmem:[%s321] sm:$0xff] %v320
    %s323 = scalar_lea.vmem [#allocation9], 64
    %324 = vst [vmem:[%s323] sm:$0xff] %v299
    %s325 = scalar_lea.vmem [#allocation9], 72
    %326 = vst [vmem:[%s325] sm:$0xff] %v300
    %s327 = scalar_lea.vmem [#allocation9], 80
    %328 = vst [vmem:[%s327] sm:$0xff] %v303
    %s329 = sld [smem:[#allocation6 + $0x2]]
    %v330 = vstv %s329
    %s331 = scalar_lea.vmem [#allocation9], 88
    %332 = vst [vmem:[%s331] sm:$0xff] %v330
    %s333 = scalar_lea.vmem [#allocation2], 24
    %v334 = vld [vmem:[%s333] sm:$0xff]
    %s335 = scalar_lea.vmem [#allocation2], 32
    %v336 = vld [vmem:[%s335] sm:$0xff]
    %s337 = scalar_lea.vmem [#allocation2], 40
    %v338 = vld [vmem:[%s337] sm:$0xff]
    %v339 = vmul.f32 %v334, %v334
    %v340 = vmul.f32 %v336, %v336
    %v341 = vadd.f32 %v339, %v340
    %v342 = vmul.f32 %v338, %v338
    %v343 = vadd.f32 %v341, %v342
    %v344 = vadd.f32 %v343, 1e-12
    %v345 = vrsqrt.pop %v344
    %v346 = vmul.f32 %v344, %v345
    %v347 = vand.u32 2147483647, %v346
    %vm348 = vcmp.le.f32.partialorder %v347, 0.7853982
    %vm349 = vcmp.lt.s32.totalorder %v346, 0
    %v350 = vand.u32 %v346, 2139095040
    %v351 = vshrl.u32 %v350, 23
    %v352 = vsub.s32 %v351, 127
    %v353 = vand.u32 2147483647, %v346
    %v354 = vand.u32 %v353, 8388607
    %v355 = vor.u32 %v354, 8388608
    %v356 = vsub.s32 0, %v355
    %v357 = vadd.s32 %v352, 1
    %vm358 = vcmp.gt.s32.totalorder %v357, 0
    %v359 = vsel %vm358, %v357, 0
    %v360 = vshrl.u32 %v359, 5
    %v361 = vand.u32 %v359, 31
    %v362 = vsub.s32 32, %v361
    %v363 = vshrl.u32 683565275, %v362
    %v364 = vshll.u32 683565275, %v361
    %v365 = vshrl.u32 2475754826, %v362
    %v366 = vor.u32 %v364, %v365
    %v367 = vshll.u32 2475754826, %v361
    %v368 = vshrl.u32 2131351028, %v362
    %v369 = vor.u32 %v367, %v368
    %v370 = vshll.u32 2131351028, %v361
    %v371 = vshrl.u32 2102212464, %v362
    %v372 = vor.u32 %v370, %v371
    %v373 = vshll.u32 2102212464, %v361
    %v374 = vshrl.u32 920167782, %v362
    %v375 = vor.u32 %v373, %v374
    %v376 = vshll.u32 920167782, %v361
    %v377 = vshrl.u32 1326507024, %v362
    %v378 = vor.u32 %v376, %v377
    %vm379 = vcmp.lt.s32.totalorder %v360, 1
    %vm380 = vcmp.lt.s32.totalorder %v360, 2
    %vm381 = vcmp.lt.s32.totalorder %v360, 3
    %vm382 = vcmp.lt.s32.totalorder %v360, 4
    %v383 = vsel %vm379, %v363, %v366
    %v384 = vsel %vm382, %v372, 2102212464
    %v385 = vsel %vm381, %v369, %v384
    %v386 = vsel %vm380, %v383, %v385
    %v387 = vsel %vm379, %v366, %v369
    %v388 = vsel %vm382, %v375, 920167782
    %v389 = vsel %vm381, %v372, %v388
    %v390 = vsel %vm380, %v387, %v389
    %v391 = vsel %vm379, %v369, %v372
    %v392 = vsel %vm382, %v378, 1326507024
    %v393 = vsel %vm381, %v375, %v392
    %v394 = vsel %vm380, %v391, %v393
    %v395 = vshll.u32 %v355, 8
    %v396 = vmul.u32.u64.compose %v395, %v394
    %v397 = vextract.low.u32 %v396
    %v398 = vextract.high.u32 %v396
    %v399 = vmul.u32.u64.compose %v395, %v390
    %v400 = vextract.low.u32 %v399
    %v401 = vextract.high.u32 %v399
    %v402 = vmul.u32 %v395, %v386
    %v403 = vadd.s32 %v398, %v400
    %vm404 = vc.u32 %v398, %v400
    %v405 = vadd.s32 %v401, 1
    %v406 = vsel %vm404, %v405, %v401
    %v407 = vadd.s32 %v402, %v406
    %v408 = vadd.s32 %v407, 536870912
    %v409 = vshrl.u32 %v408, 30
    %v410 = vshll.u32 %v409, 30
    %v411 = vsub.s32 %v407, %v410
    %vm412 = vcmp.lt.s32.totalorder %v411, 0
    %v413 = vsub.s32 0, %v411
    %v414 = vsel %vm412, %v413, %v411
    %v415 = vclz %v414
    %v416 = vsub.s32 %v415, 2
    %vm417 = vcmp.gt.s32.totalorder 0, %v416
    %v418 = vsel %vm417, 0, %v416
    %v419 = vsub.s32 32, %v418
    %v420 = vshll.u32 %v411, %v418
    %v421 = vshrl.u32 %v403, %v419
    %v422 = vor.u32 %v420, %v421
    %v423 = vsub.s32 4294967266, %v418
    %v424 = vadd.s32 %v423, 127
    %v425 = vshll.u32 %v424, 23
    %v426 = vor.u32 4788187, %v425
    %v427 = vand.u32 2147483647, %v426
    %v429 = vcvt.s32.f32 %v422
    %v430 = vmul.f32 %v429, %v427
    %v431 = vxor.u32 %v430, 2147483648
    %v432 = vsel %vm349, %v431, %v430
    %v433 = vsub.s32 4, %v409
    %v434 = vsel %vm349, %v433, %v409
    %v435 = vsel %vm348, %v346, %v432
    %v436 = vsel %vm348, 0, %v434
    %v437 = vcosq.f32.pop %v435
    %v438 = vsinq.f32.pop %v435
    %vm439 = vweird.f32 %v346
    %v440 = vadd.s32 %v436, 3
    %v441 = vand.u32 %v440, 3
    %vm442 = vcmp.lt.s32.totalorder %v441, 2
    %vm443 = vcmp.eq.s32.totalorder %v441, 0
    %v444 = vxor.u32 %v438, 2147483648
    %v445 = vsel %vm443, %v437, %v444
    %vm446 = vcmp.eq.s32.totalorder %v441, 2
    %v447 = vxor.u32 %v437, 2147483648
    %v448 = vsel %vm446, %v447, %v438
    %v449 = vsel %vm442, %v445, %v448
    %v450 = vsel %vm439, nan, %v449
    %v451 = vand.u32 2147483647, %v346
    %vm452 = vcmp.le.f32.partialorder %v451, 0.7853982
    %vm453 = vcmp.lt.s32.totalorder %v346, 0
    %v454 = vand.u32 %v346, 2139095040
    %v455 = vshrl.u32 %v454, 23
    %v456 = vsub.s32 %v455, 127
    %v457 = vand.u32 2147483647, %v346
    %v458 = vand.u32 %v457, 8388607
    %v459 = vor.u32 %v458, 8388608
    %v460 = vsub.s32 0, %v459
    %v461 = vadd.s32 %v456, 1
    %vm462 = vcmp.gt.s32.totalorder %v461, 0
    %v463 = vsel %vm462, %v461, 0
    %v464 = vshrl.u32 %v463, 5
    %v465 = vand.u32 %v463, 31
    %v466 = vsub.s32 32, %v465
    %v467 = vshrl.u32 683565275, %v466
    %v468 = vshll.u32 683565275, %v465
    %v469 = vshrl.u32 2475754826, %v466
    %v470 = vor.u32 %v468, %v469
    %v471 = vshll.u32 2475754826, %v465
    %v472 = vshrl.u32 2131351028, %v466
    %v473 = vor.u32 %v471, %v472
    %v474 = vshll.u32 2131351028, %v465
    %v475 = vshrl.u32 2102212464, %v466
    %v476 = vor.u32 %v474, %v475
    %v477 = vshll.u32 2102212464, %v465
    %v478 = vshrl.u32 920167782, %v466
    %v479 = vor.u32 %v477, %v478
    %v480 = vshll.u32 920167782, %v465
    %v481 = vshrl.u32 1326507024, %v466
    %v482 = vor.u32 %v480, %v481
    %vm483 = vcmp.lt.s32.totalorder %v464, 1
    %vm484 = vcmp.lt.s32.totalorder %v464, 2
    %vm485 = vcmp.lt.s32.totalorder %v464, 3
    %vm486 = vcmp.lt.s32.totalorder %v464, 4
    %v487 = vsel %vm483, %v467, %v470
    %v488 = vsel %vm486, %v476, 2102212464
    %v489 = vsel %vm485, %v473, %v488
    %v490 = vsel %vm484, %v487, %v489
    %v491 = vsel %vm483, %v470, %v473
    %v492 = vsel %vm486, %v479, 920167782
    %v493 = vsel %vm485, %v476, %v492
    %v494 = vsel %vm484, %v491, %v493
    %v495 = vsel %vm483, %v473, %v476
    %v496 = vsel %vm486, %v482, 1326507024
    %v497 = vsel %vm485, %v479, %v496
    %v498 = vsel %vm484, %v495, %v497
    %v499 = vshll.u32 %v459, 8
    %v500 = vmul.u32.u64.compose %v499, %v498
    %v501 = vextract.low.u32 %v500
    %v502 = vextract.high.u32 %v500
    %v503 = vmul.u32.u64.compose %v499, %v494
    %v504 = vextract.low.u32 %v503
    %v505 = vextract.high.u32 %v503
    %v506 = vmul.u32 %v499, %v490
    %v507 = vadd.s32 %v502, %v504
    %vm508 = vc.u32 %v502, %v504
    %v509 = vadd.s32 %v505, 1
    %v510 = vsel %vm508, %v509, %v505
    %v511 = vadd.s32 %v506, %v510
    %v512 = vadd.s32 %v511, 536870912
    %v513 = vshrl.u32 %v512, 30
    %v514 = vshll.u32 %v513, 30
    %v515 = vsub.s32 %v511, %v514
    %vm516 = vcmp.lt.s32.totalorder %v515, 0
    %v517 = vsub.s32 0, %v515
    %v518 = vsel %vm516, %v517, %v515
    %v519 = vclz %v518
    %v520 = vsub.s32 %v519, 2
    %vm521 = vcmp.gt.s32.totalorder 0, %v520
    %v522 = vsel %vm521, 0, %v520
    %v523 = vsub.s32 32, %v522
    %v524 = vshll.u32 %v515, %v522
    %v525 = vshrl.u32 %v507, %v523
    %v526 = vor.u32 %v524, %v525
    %v527 = vsub.s32 4294967266, %v522
    %v528 = vadd.s32 %v527, 127
    %v529 = vshll.u32 %v528, 23
    %v530 = vor.u32 4788187, %v529
    %v531 = vand.u32 2147483647, %v530
    %v533 = vcvt.s32.f32 %v526
    %v534 = vmul.f32 %v533, %v531
    %v535 = vxor.u32 %v534, 2147483648
    %v536 = vsel %vm453, %v535, %v534
    %v537 = vsub.s32 4, %v513
    %v538 = vsel %vm453, %v537, %v513
    %v539 = vsel %vm452, %v346, %v536
    %v540 = vsel %vm452, 0, %v538
    %v541 = vcosq.f32.pop %v539
    %v542 = vsinq.f32.pop %v539
    %vm543 = vweird.f32 %v346
    %v544 = vand.u32 %v540, 3
    %vm545 = vcmp.lt.s32.totalorder %v544, 2
    %vm546 = vcmp.eq.s32.totalorder %v544, 0
    %v547 = vxor.u32 %v542, 2147483648
    %v548 = vsel %vm546, %v541, %v547
    %vm549 = vcmp.eq.s32.totalorder %v544, 2
    %v550 = vxor.u32 %v541, 2147483648
    %v551 = vsel %vm549, %v550, %v542
    %v552 = vsel %vm545, %v548, %v551
    %v553 = vsel %vm543, nan, %v552
    %v554 = vsub.f32 1.0, %v553
    %v555 = vmul.f32 %v334, %v345
    %v556 = vmul.f32 %v336, %v345
    %v557 = vmul.f32 %v338, %v345
    %v558 = vmul.f32 %v555, %v555
    %v559 = vmul.f32 %v558, %v554
    %v560 = vadd.f32 %v553, %v559
    %v561 = vmul.f32 %v555, %v556
    %v562 = vmul.f32 %v561, %v554
    %v563 = vmul.f32 %v557, %v450
    %v564 = vsub.f32 %v562, %v563
    %v565 = vmul.f32 %v555, %v557
    %v566 = vmul.f32 %v565, %v554
    %v567 = vmul.f32 %v556, %v450
    %v568 = vadd.f32 %v566, %v567
    %v569 = vadd.f32 %v562, %v563
    %v570 = vmul.f32 %v556, %v556
    %v571 = vmul.f32 %v570, %v554
    %v572 = vadd.f32 %v553, %v571
    %v573 = vmul.f32 %v556, %v557
    %v574 = vmul.f32 %v573, %v554
    %v575 = vmul.f32 %v555, %v450
    %v576 = vsub.f32 %v574, %v575
    %v577 = vsub.f32 %v566, %v567
    %v578 = vadd.f32 %v574, %v575
    %v579 = vmul.f32 %v557, %v557
    %v580 = vmul.f32 %v579, %v554
    %v581 = vadd.f32 %v553, %v580
    %v582 = vld [vmem:[#allocation7] sm:$0xff]
    %s583 = sld [smem:[#allocation6 + $0x3]]
    %v584 = vstv %s583
    %v585 = vmul.f32 %v584, %v582
    %s586 = sld [smem:[#allocation6 + $0x4]]
    %v587 = vstv %s586
    %v588 = vmul.f32 %v587, %v582
    %s589 = sld [smem:[#allocation6 + $0x5]]
    %v590 = vstv %s589
    %v591 = vmul.f32 %v590, %v582
    %v592 = vld [vmem:[#allocation9] sm:$0xff]
    %v593 = vld [vmem:[%s305] sm:$0xff]
    %v594 = vld [vmem:[%s307] sm:$0xff]
    %v595 = vld [vmem:[%s311] sm:$0xff]
    %v596 = vmul.f32 %v592, %v560
    %v597 = vmul.f32 %v593, %v569
    %v598 = vadd.f32 %v596, %v597
    %v599 = vmul.f32 %v594, %v577
    %v600 = vadd.f32 %v598, %v599
    %s601 = scalar_lea.vmem [#allocation9], 96
    %602 = vst [vmem:[%s601] sm:$0xff] %v600
    %v603 = vmul.f32 %v592, %v564
    %v604 = vmul.f32 %v593, %v572
    %v605 = vadd.f32 %v603, %v604
    %v606 = vmul.f32 %v594, %v578
    %v607 = vadd.f32 %v605, %v606
    %s608 = scalar_lea.vmem [#allocation9], 104
    %609 = vst [vmem:[%s608] sm:$0xff] %v607
    %v610 = vmul.f32 %v592, %v568
    %v611 = vmul.f32 %v593, %v576
    %v612 = vadd.f32 %v610, %v611
    %v613 = vmul.f32 %v594, %v581
    %v614 = vadd.f32 %v612, %v613
    %s615 = scalar_lea.vmem [#allocation9], 112
    %616 = vst [vmem:[%s615] sm:$0xff] %v614
    %v617 = vmul.f32 %v592, %v585
    %v618 = vmul.f32 %v593, %v588
    %v619 = vadd.f32 %v617, %v618
    %v620 = vmul.f32 %v594, %v591
    %v621 = vadd.f32 %v619, %v620
    %v622 = vadd.f32 %v621, %v595
    %s623 = scalar_lea.vmem [#allocation9], 120
    %624 = vst [vmem:[%s623] sm:$0xff] %v622
    %v625 = vld [vmem:[%s313] sm:$0xff]
    %v626 = vld [vmem:[%s315] sm:$0xff]
    %v627 = vld [vmem:[%s317] sm:$0xff]
    %v628 = vld [vmem:[%s321] sm:$0xff]
    %v629 = vmul.f32 %v625, %v560
    %v630 = vmul.f32 %v626, %v569
    %v631 = vadd.f32 %v629, %v630
    %v632 = vmul.f32 %v627, %v577
    %v633 = vadd.f32 %v631, %v632
    %s634 = scalar_lea.vmem [#allocation9], 128
    %635 = vst [vmem:[%s634] sm:$0xff] %v633
    %v636 = vmul.f32 %v625, %v564
    %v637 = vmul.f32 %v626, %v572
    %v638 = vadd.f32 %v636, %v637
    %v639 = vmul.f32 %v627, %v578
    %v640 = vadd.f32 %v638, %v639
    %s641 = scalar_lea.vmem [#allocation9], 136
    %642 = vst [vmem:[%s641] sm:$0xff] %v640
    %v643 = vmul.f32 %v625, %v568
    %v644 = vmul.f32 %v626, %v576
    %v645 = vadd.f32 %v643, %v644
    %v646 = vmul.f32 %v627, %v581
    %v647 = vadd.f32 %v645, %v646
    %s648 = scalar_lea.vmem [#allocation9], 144
    %649 = vst [vmem:[%s648] sm:$0xff] %v647
    %v650 = vmul.f32 %v625, %v585
    %v651 = vmul.f32 %v626, %v588
    %v652 = vadd.f32 %v650, %v651
    %v653 = vmul.f32 %v627, %v591
    %v654 = vadd.f32 %v652, %v653
    %v655 = vadd.f32 %v654, %v628
    %s656 = scalar_lea.vmem [#allocation9], 152
    %657 = vst [vmem:[%s656] sm:$0xff] %v655
    %v658 = vld [vmem:[%s323] sm:$0xff]
    %v659 = vld [vmem:[%s325] sm:$0xff]
    %v660 = vld [vmem:[%s327] sm:$0xff]
    %v661 = vld [vmem:[%s331] sm:$0xff]
    %v662 = vmul.f32 %v658, %v560
    %v663 = vmul.f32 %v659, %v569
    %v664 = vadd.f32 %v662, %v663
    %v665 = vmul.f32 %v660, %v577
    %v666 = vadd.f32 %v664, %v665
    %s667 = scalar_lea.vmem [#allocation9], 160
    %668 = vst [vmem:[%s667] sm:$0xff] %v666
    %v669 = vmul.f32 %v658, %v564
    %v670 = vmul.f32 %v659, %v572
    %v671 = vadd.f32 %v669, %v670
    %v672 = vmul.f32 %v660, %v578
    %v673 = vadd.f32 %v671, %v672
    %s674 = scalar_lea.vmem [#allocation9], 168
    %675 = vst [vmem:[%s674] sm:$0xff] %v673
    %v676 = vmul.f32 %v658, %v568
    %v677 = vmul.f32 %v659, %v576
    %v678 = vadd.f32 %v676, %v677
    %v679 = vmul.f32 %v660, %v581
    %v680 = vadd.f32 %v678, %v679
    %s681 = scalar_lea.vmem [#allocation9], 176
    %682 = vst [vmem:[%s681] sm:$0xff] %v680
    %v683 = vmul.f32 %v658, %v585
    %v684 = vmul.f32 %v659, %v588
    %v685 = vadd.f32 %v683, %v684
    %v686 = vmul.f32 %v660, %v591
    %v687 = vadd.f32 %v685, %v686
    %v688 = vadd.f32 %v687, %v661
    %s689 = scalar_lea.vmem [#allocation9], 184
    %690 = vst [vmem:[%s689] sm:$0xff] %v688
    %s691 = scalar_lea.vmem [#allocation2], 48
    %v692 = vld [vmem:[%s691] sm:$0xff]
    %s693 = scalar_lea.vmem [#allocation2], 56
    %v694 = vld [vmem:[%s693] sm:$0xff]
    %s695 = scalar_lea.vmem [#allocation2], 64
    %v696 = vld [vmem:[%s695] sm:$0xff]
    %v697 = vmul.f32 %v692, %v692
    %v698 = vmul.f32 %v694, %v694
    %v699 = vadd.f32 %v697, %v698
    %v700 = vmul.f32 %v696, %v696
    %v701 = vadd.f32 %v699, %v700
    %v702 = vadd.f32 %v701, 1e-12
    %v703 = vrsqrt.pop %v702
    %v704 = vmul.f32 %v702, %v703
    %v705 = vand.u32 2147483647, %v704
    %vm706 = vcmp.le.f32.partialorder %v705, 0.7853982
    %vm707 = vcmp.lt.s32.totalorder %v704, 0
    %v708 = vand.u32 %v704, 2139095040
    %v709 = vshrl.u32 %v708, 23
    %v710 = vsub.s32 %v709, 127
    %v711 = vand.u32 2147483647, %v704
    %v712 = vand.u32 %v711, 8388607
    %v713 = vor.u32 %v712, 8388608
    %v714 = vsub.s32 0, %v713
    %v715 = vadd.s32 %v710, 1
    %vm716 = vcmp.gt.s32.totalorder %v715, 0
    %v717 = vsel %vm716, %v715, 0
    %v718 = vshrl.u32 %v717, 5
    %v719 = vand.u32 %v717, 31
    %v720 = vsub.s32 32, %v719
    %v721 = vshrl.u32 683565275, %v720
    %v722 = vshll.u32 683565275, %v719
    %v723 = vshrl.u32 2475754826, %v720
    %v724 = vor.u32 %v722, %v723
    %v725 = vshll.u32 2475754826, %v719
    %v726 = vshrl.u32 2131351028, %v720
    %v727 = vor.u32 %v725, %v726
    %v728 = vshll.u32 2131351028, %v719
    %v729 = vshrl.u32 2102212464, %v720
    %v730 = vor.u32 %v728, %v729
    %v731 = vshll.u32 2102212464, %v719
    %v732 = vshrl.u32 920167782, %v720
    %v733 = vor.u32 %v731, %v732
    %v734 = vshll.u32 920167782, %v719
    %v735 = vshrl.u32 1326507024, %v720
    %v736 = vor.u32 %v734, %v735
    %vm737 = vcmp.lt.s32.totalorder %v718, 1
    %vm738 = vcmp.lt.s32.totalorder %v718, 2
    %vm739 = vcmp.lt.s32.totalorder %v718, 3
    %vm740 = vcmp.lt.s32.totalorder %v718, 4
    %v741 = vsel %vm737, %v721, %v724
    %v742 = vsel %vm740, %v730, 2102212464
    %v743 = vsel %vm739, %v727, %v742
    %v744 = vsel %vm738, %v741, %v743
    %v745 = vsel %vm737, %v724, %v727
    %v746 = vsel %vm740, %v733, 920167782
    %v747 = vsel %vm739, %v730, %v746
    %v748 = vsel %vm738, %v745, %v747
    %v749 = vsel %vm737, %v727, %v730
    %v750 = vsel %vm740, %v736, 1326507024
    %v751 = vsel %vm739, %v733, %v750
    %v752 = vsel %vm738, %v749, %v751
    %v753 = vshll.u32 %v713, 8
    %v754 = vmul.u32.u64.compose %v753, %v752
    %v755 = vextract.low.u32 %v754
    %v756 = vextract.high.u32 %v754
    %v757 = vmul.u32.u64.compose %v753, %v748
    %v758 = vextract.low.u32 %v757
    %v759 = vextract.high.u32 %v757
    %v760 = vmul.u32 %v753, %v744
    %v761 = vadd.s32 %v756, %v758
    %vm762 = vc.u32 %v756, %v758
    %v763 = vadd.s32 %v759, 1
    %v764 = vsel %vm762, %v763, %v759
    %v765 = vadd.s32 %v760, %v764
    %v766 = vadd.s32 %v765, 536870912
    %v767 = vshrl.u32 %v766, 30
    %v768 = vshll.u32 %v767, 30
    %v769 = vsub.s32 %v765, %v768
    %vm770 = vcmp.lt.s32.totalorder %v769, 0
    %v771 = vsub.s32 0, %v769
    %v772 = vsel %vm770, %v771, %v769
    %v773 = vclz %v772
    %v774 = vsub.s32 %v773, 2
    %vm775 = vcmp.gt.s32.totalorder 0, %v774
    %v776 = vsel %vm775, 0, %v774
    %v777 = vsub.s32 32, %v776
    %v778 = vshll.u32 %v769, %v776
    %v779 = vshrl.u32 %v761, %v777
    %v780 = vor.u32 %v778, %v779
    %v781 = vsub.s32 4294967266, %v776
    %v782 = vadd.s32 %v781, 127
    %v783 = vshll.u32 %v782, 23
    %v784 = vor.u32 4788187, %v783
    %v785 = vand.u32 2147483647, %v784
    %v787 = vcvt.s32.f32 %v780
    %v788 = vmul.f32 %v787, %v785
    %v789 = vxor.u32 %v788, 2147483648
    %v790 = vsel %vm707, %v789, %v788
    %v791 = vsub.s32 4, %v767
    %v792 = vsel %vm707, %v791, %v767
    %v793 = vsel %vm706, %v704, %v790
    %v794 = vsel %vm706, 0, %v792
    %v795 = vcosq.f32.pop %v793
    %v796 = vsinq.f32.pop %v793
    %vm797 = vweird.f32 %v704
    %v798 = vadd.s32 %v794, 3
    %v799 = vand.u32 %v798, 3
    %vm800 = vcmp.lt.s32.totalorder %v799, 2
    %vm801 = vcmp.eq.s32.totalorder %v799, 0
    %v802 = vxor.u32 %v796, 2147483648
    %v803 = vsel %vm801, %v795, %v802
    %vm804 = vcmp.eq.s32.totalorder %v799, 2
    %v805 = vxor.u32 %v795, 2147483648
    %v806 = vsel %vm804, %v805, %v796
    %v807 = vsel %vm800, %v803, %v806
    %v808 = vsel %vm797, nan, %v807
    %v809 = vand.u32 2147483647, %v704
    %vm810 = vcmp.le.f32.partialorder %v809, 0.7853982
    %vm811 = vcmp.lt.s32.totalorder %v704, 0
    %v812 = vand.u32 %v704, 2139095040
    %v813 = vshrl.u32 %v812, 23
    %v814 = vsub.s32 %v813, 127
    %v815 = vand.u32 2147483647, %v704
    %v816 = vand.u32 %v815, 8388607
    %v817 = vor.u32 %v816, 8388608
    %v818 = vsub.s32 0, %v817
    %v819 = vadd.s32 %v814, 1
    %vm820 = vcmp.gt.s32.totalorder %v819, 0
    %v821 = vsel %vm820, %v819, 0
    %v822 = vshrl.u32 %v821, 5
    %v823 = vand.u32 %v821, 31
    %v824 = vsub.s32 32, %v823
    %v825 = vshrl.u32 683565275, %v824
    %v826 = vshll.u32 683565275, %v823
    %v827 = vshrl.u32 2475754826, %v824
    %v828 = vor.u32 %v826, %v827
    %v829 = vshll.u32 2475754826, %v823
    %v830 = vshrl.u32 2131351028, %v824
    %v831 = vor.u32 %v829, %v830
    %v832 = vshll.u32 2131351028, %v823
    %v833 = vshrl.u32 2102212464, %v824
    %v834 = vor.u32 %v832, %v833
    %v835 = vshll.u32 2102212464, %v823
    %v836 = vshrl.u32 920167782, %v824
    %v837 = vor.u32 %v835, %v836
    %v838 = vshll.u32 920167782, %v823
    %v839 = vshrl.u32 1326507024, %v824
    %v840 = vor.u32 %v838, %v839
    %vm841 = vcmp.lt.s32.totalorder %v822, 1
    %vm842 = vcmp.lt.s32.totalorder %v822, 2
    %vm843 = vcmp.lt.s32.totalorder %v822, 3
    %vm844 = vcmp.lt.s32.totalorder %v822, 4
    %v845 = vsel %vm841, %v825, %v828
    %v846 = vsel %vm844, %v834, 2102212464
    %v847 = vsel %vm843, %v831, %v846
    %v848 = vsel %vm842, %v845, %v847
    %v849 = vsel %vm841, %v828, %v831
    %v850 = vsel %vm844, %v837, 920167782
    %v851 = vsel %vm843, %v834, %v850
    %v852 = vsel %vm842, %v849, %v851
    %v853 = vsel %vm841, %v831, %v834
    %v854 = vsel %vm844, %v840, 1326507024
    %v855 = vsel %vm843, %v837, %v854
    %v856 = vsel %vm842, %v853, %v855
    %v857 = vshll.u32 %v817, 8
    %v858 = vmul.u32.u64.compose %v857, %v856
    %v859 = vextract.low.u32 %v858
    %v860 = vextract.high.u32 %v858
    %v861 = vmul.u32.u64.compose %v857, %v852
    %v862 = vextract.low.u32 %v861
    %v863 = vextract.high.u32 %v861
    %v864 = vmul.u32 %v857, %v848
    %v865 = vadd.s32 %v860, %v862
    %vm866 = vc.u32 %v860, %v862
    %v867 = vadd.s32 %v863, 1
    %v868 = vsel %vm866, %v867, %v863
    %v869 = vadd.s32 %v864, %v868
    %v870 = vadd.s32 %v869, 536870912
    %v871 = vshrl.u32 %v870, 30
    %v872 = vshll.u32 %v871, 30
    %v873 = vsub.s32 %v869, %v872
    %vm874 = vcmp.lt.s32.totalorder %v873, 0
    %v875 = vsub.s32 0, %v873
    %v876 = vsel %vm874, %v875, %v873
    %v877 = vclz %v876
    %v878 = vsub.s32 %v877, 2
    %vm879 = vcmp.gt.s32.totalorder 0, %v878
    %v880 = vsel %vm879, 0, %v878
    %v881 = vsub.s32 32, %v880
    %v882 = vshll.u32 %v873, %v880
    %v883 = vshrl.u32 %v865, %v881
    %v884 = vor.u32 %v882, %v883
    %v885 = vsub.s32 4294967266, %v880
    %v886 = vadd.s32 %v885, 127
    %v887 = vshll.u32 %v886, 23
    %v888 = vor.u32 4788187, %v887
    %v889 = vand.u32 2147483647, %v888
    %v891 = vcvt.s32.f32 %v884
    %v892 = vmul.f32 %v891, %v889
    %v893 = vxor.u32 %v892, 2147483648
    %v894 = vsel %vm811, %v893, %v892
    %v895 = vsub.s32 4, %v871
    %v896 = vsel %vm811, %v895, %v871
    %v897 = vsel %vm810, %v704, %v894
    %v898 = vsel %vm810, 0, %v896
    %v899 = vcosq.f32.pop %v897
    %v900 = vsinq.f32.pop %v897
    %vm901 = vweird.f32 %v704
    %v902 = vand.u32 %v898, 3
    %vm903 = vcmp.lt.s32.totalorder %v902, 2
    %vm904 = vcmp.eq.s32.totalorder %v902, 0
    %v905 = vxor.u32 %v900, 2147483648
    %v906 = vsel %vm904, %v899, %v905
    %vm907 = vcmp.eq.s32.totalorder %v902, 2
    %v908 = vxor.u32 %v899, 2147483648
    %v909 = vsel %vm907, %v908, %v900
    %v910 = vsel %vm903, %v906, %v909
    %v911 = vsel %vm901, nan, %v910
    %v912 = vsub.f32 1.0, %v911
    %v913 = vmul.f32 %v692, %v703
    %v914 = vmul.f32 %v694, %v703
    %v915 = vmul.f32 %v696, %v703
    %v916 = vmul.f32 %v913, %v913
    %v917 = vmul.f32 %v916, %v912
    %v918 = vadd.f32 %v911, %v917
    %v919 = vmul.f32 %v913, %v914
    %v920 = vmul.f32 %v919, %v912
    %v921 = vmul.f32 %v915, %v808
    %v922 = vsub.f32 %v920, %v921
    %v923 = vmul.f32 %v913, %v915
    %v924 = vmul.f32 %v923, %v912
    %v925 = vmul.f32 %v914, %v808
    %v926 = vadd.f32 %v924, %v925
    %v927 = vadd.f32 %v920, %v921
    %v928 = vmul.f32 %v914, %v914
    %v929 = vmul.f32 %v928, %v912
    %v930 = vadd.f32 %v911, %v929
    %v931 = vmul.f32 %v914, %v915
    %v932 = vmul.f32 %v931, %v912
    %v933 = vmul.f32 %v913, %v808
    %v934 = vsub.f32 %v932, %v933
    %v935 = vsub.f32 %v924, %v925
    %v936 = vadd.f32 %v932, %v933
    %v937 = vmul.f32 %v915, %v915
    %v938 = vmul.f32 %v937, %v912
    %v939 = vadd.f32 %v911, %v938
    %s940 = scalar_lea.vmem [#allocation7], 8
    %v941 = vld [vmem:[%s940] sm:$0xff]
    %s942 = sld [smem:[#allocation6 + $0x6]]
    %v943 = vstv %s942
    %v944 = vmul.f32 %v943, %v941
    %s945 = sld [smem:[#allocation6 + $0x7]]
    %v946 = vstv %s945
    %v947 = vmul.f32 %v946, %v941
    %s948 = sld [smem:[#allocation6 + $0x8]]
    %v949 = vstv %s948
    %v950 = vmul.f32 %v949, %v941
    %v951 = vld [vmem:[%s601] sm:$0xff]
    %v952 = vld [vmem:[%s608] sm:$0xff]
    %v953 = vld [vmem:[%s615] sm:$0xff]
    %v954 = vld [vmem:[%s623] sm:$0xff]
    %v955 = vmul.f32 %v951, %v918
    %v956 = vmul.f32 %v952, %v927
    %v957 = vadd.f32 %v955, %v956
    %v958 = vmul.f32 %v953, %v935
    %v959 = vadd.f32 %v957, %v958
    %s960 = scalar_lea.vmem [#allocation9], 192
    %961 = vst [vmem:[%s960] sm:$0xff] %v959
    %v962 = vmul.f32 %v951, %v922
    %v963 = vmul.f32 %v952, %v930
    %v964 = vadd.f32 %v962, %v963
    %v965 = vmul.f32 %v953, %v936
    %v966 = vadd.f32 %v964, %v965
    %s967 = scalar_lea.vmem [#allocation9], 200
    %968 = vst [vmem:[%s967] sm:$0xff] %v966
    %v969 = vmul.f32 %v951, %v926
    %v970 = vmul.f32 %v952, %v934
    %v971 = vadd.f32 %v969, %v970
    %v972 = vmul.f32 %v953, %v939
    %v973 = vadd.f32 %v971, %v972
    %s974 = scalar_lea.vmem [#allocation9], 208
    %975 = vst [vmem:[%s974] sm:$0xff] %v973
    %v976 = vmul.f32 %v951, %v944
    %v977 = vmul.f32 %v952, %v947
    %v978 = vadd.f32 %v976, %v977
    %v979 = vmul.f32 %v953, %v950
    %v980 = vadd.f32 %v978, %v979
    %v981 = vadd.f32 %v980, %v954
    %s982 = scalar_lea.vmem [#allocation9], 216
    %983 = vst [vmem:[%s982] sm:$0xff] %v981
    %v984 = vld [vmem:[%s634] sm:$0xff]
    %v985 = vld [vmem:[%s641] sm:$0xff]
    %v986 = vld [vmem:[%s648] sm:$0xff]
    %v987 = vld [vmem:[%s656] sm:$0xff]
    %v988 = vmul.f32 %v984, %v918
    %v989 = vmul.f32 %v985, %v927
    %v990 = vadd.f32 %v988, %v989
    %v991 = vmul.f32 %v986, %v935
    %v992 = vadd.f32 %v990, %v991
    %s993 = scalar_lea.vmem [#allocation9], 224
    %994 = vst [vmem:[%s993] sm:$0xff] %v992
    %v995 = vmul.f32 %v984, %v922
    %v996 = vmul.f32 %v985, %v930
    %v997 = vadd.f32 %v995, %v996
    %v998 = vmul.f32 %v986, %v936
    %v999 = vadd.f32 %v997, %v998
    %s1000 = scalar_lea.vmem [#allocation9], 232
    %1001 = vst [vmem:[%s1000] sm:$0xff] %v999
    %v1002 = vmul.f32 %v984, %v926
    %v1003 = vmul.f32 %v985, %v934
    %v1004 = vadd.f32 %v1002, %v1003
    %v1005 = vmul.f32 %v986, %v939
    %v1006 = vadd.f32 %v1004, %v1005
    %s1007 = scalar_lea.vmem [#allocation9], 240
    %1008 = vst [vmem:[%s1007] sm:$0xff] %v1006
    %v1009 = vmul.f32 %v984, %v944
    %v1010 = vmul.f32 %v985, %v947
    %v1011 = vadd.f32 %v1009, %v1010
    %v1012 = vmul.f32 %v986, %v950
    %v1013 = vadd.f32 %v1011, %v1012
    %v1014 = vadd.f32 %v1013, %v987
    %s1015 = scalar_lea.vmem [#allocation9], 248
    %1016 = vst [vmem:[%s1015] sm:$0xff] %v1014
    %v1017 = vld [vmem:[%s667] sm:$0xff]
    %v1018 = vld [vmem:[%s674] sm:$0xff]
    %v1019 = vld [vmem:[%s681] sm:$0xff]
    %v1020 = vld [vmem:[%s689] sm:$0xff]
    %v1021 = vmul.f32 %v1017, %v918
    %v1022 = vmul.f32 %v1018, %v927
    %v1023 = vadd.f32 %v1021, %v1022
    %v1024 = vmul.f32 %v1019, %v935
    %v1025 = vadd.f32 %v1023, %v1024
    %s1026 = scalar_lea.vmem [#allocation9], 256
    %1027 = vst [vmem:[%s1026] sm:$0xff] %v1025
    %v1028 = vmul.f32 %v1017, %v922
    %v1029 = vmul.f32 %v1018, %v930
    %v1030 = vadd.f32 %v1028, %v1029
    %v1031 = vmul.f32 %v1019, %v936
    %v1032 = vadd.f32 %v1030, %v1031
    %s1033 = scalar_lea.vmem [#allocation9], 264
    %1034 = vst [vmem:[%s1033] sm:$0xff] %v1032
    %v1035 = vmul.f32 %v1017, %v926
    %v1036 = vmul.f32 %v1018, %v934
    %v1037 = vadd.f32 %v1035, %v1036
    %v1038 = vmul.f32 %v1019, %v939
    %v1039 = vadd.f32 %v1037, %v1038
    %s1040 = scalar_lea.vmem [#allocation9], 272
    %1041 = vst [vmem:[%s1040] sm:$0xff] %v1039
    %v1042 = vmul.f32 %v1017, %v944
    %v1043 = vmul.f32 %v1018, %v947
    %v1044 = vadd.f32 %v1042, %v1043
    %v1045 = vmul.f32 %v1019, %v950
    %v1046 = vadd.f32 %v1044, %v1045
    %v1047 = vadd.f32 %v1046, %v1020
    %s1048 = scalar_lea.vmem [#allocation9], 280
    %1049 = vst [vmem:[%s1048] sm:$0xff] %v1047
    %s1050 = scalar_lea.vmem [#allocation2], 72
    %v1051 = vld [vmem:[%s1050] sm:$0xff]
    %s1052 = scalar_lea.vmem [#allocation2], 80
    %v1053 = vld [vmem:[%s1052] sm:$0xff]
    %s1054 = scalar_lea.vmem [#allocation2], 88
    %v1055 = vld [vmem:[%s1054] sm:$0xff]
    %v1056 = vmul.f32 %v1051, %v1051
    %v1057 = vmul.f32 %v1053, %v1053
    %v1058 = vadd.f32 %v1056, %v1057
    %v1059 = vmul.f32 %v1055, %v1055
    %v1060 = vadd.f32 %v1058, %v1059
    %v1061 = vadd.f32 %v1060, 1e-12
    %v1062 = vrsqrt.pop %v1061
    %v1063 = vmul.f32 %v1061, %v1062
    %v1064 = vand.u32 2147483647, %v1063
    %vm1065 = vcmp.le.f32.partialorder %v1064, 0.7853982
    %vm1066 = vcmp.lt.s32.totalorder %v1063, 0
    %v1067 = vand.u32 %v1063, 2139095040
    %v1068 = vshrl.u32 %v1067, 23
    %v1069 = vsub.s32 %v1068, 127
    %v1070 = vand.u32 2147483647, %v1063
    %v1071 = vand.u32 %v1070, 8388607
    %v1072 = vor.u32 %v1071, 8388608
    %v1073 = vsub.s32 0, %v1072
    %v1074 = vadd.s32 %v1069, 1
    %vm1075 = vcmp.gt.s32.totalorder %v1074, 0
    %v1076 = vsel %vm1075, %v1074, 0
    %v1077 = vshrl.u32 %v1076, 5
    %v1078 = vand.u32 %v1076, 31
    %v1079 = vsub.s32 32, %v1078
    %v1080 = vshrl.u32 683565275, %v1079
    %v1081 = vshll.u32 683565275, %v1078
    %v1082 = vshrl.u32 2475754826, %v1079
    %v1083 = vor.u32 %v1081, %v1082
    %v1084 = vshll.u32 2475754826, %v1078
    %v1085 = vshrl.u32 2131351028, %v1079
    %v1086 = vor.u32 %v1084, %v1085
    %v1087 = vshll.u32 2131351028, %v1078
    %v1088 = vshrl.u32 2102212464, %v1079
    %v1089 = vor.u32 %v1087, %v1088
    %v1090 = vshll.u32 2102212464, %v1078
    %v1091 = vshrl.u32 920167782, %v1079
    %v1092 = vor.u32 %v1090, %v1091
    %v1093 = vshll.u32 920167782, %v1078
    %v1094 = vshrl.u32 1326507024, %v1079
    %v1095 = vor.u32 %v1093, %v1094
    %vm1096 = vcmp.lt.s32.totalorder %v1077, 1
    %vm1097 = vcmp.lt.s32.totalorder %v1077, 2
    %vm1098 = vcmp.lt.s32.totalorder %v1077, 3
    %vm1099 = vcmp.lt.s32.totalorder %v1077, 4
    %v1100 = vsel %vm1096, %v1080, %v1083
    %v1101 = vsel %vm1099, %v1089, 2102212464
    %v1102 = vsel %vm1098, %v1086, %v1101
    %v1103 = vsel %vm1097, %v1100, %v1102
    %v1104 = vsel %vm1096, %v1083, %v1086
    %v1105 = vsel %vm1099, %v1092, 920167782
    %v1106 = vsel %vm1098, %v1089, %v1105
    %v1107 = vsel %vm1097, %v1104, %v1106
    %v1108 = vsel %vm1096, %v1086, %v1089
    %v1109 = vsel %vm1099, %v1095, 1326507024
    %v1110 = vsel %vm1098, %v1092, %v1109
    %v1111 = vsel %vm1097, %v1108, %v1110
    %v1112 = vshll.u32 %v1072, 8
    %v1113 = vmul.u32.u64.compose %v1112, %v1111
    %v1114 = vextract.low.u32 %v1113
    %v1115 = vextract.high.u32 %v1113
    %v1116 = vmul.u32.u64.compose %v1112, %v1107
    %v1117 = vextract.low.u32 %v1116
    %v1118 = vextract.high.u32 %v1116
    %v1119 = vmul.u32 %v1112, %v1103
    %v1120 = vadd.s32 %v1115, %v1117
    %vm1121 = vc.u32 %v1115, %v1117
    %v1122 = vadd.s32 %v1118, 1
    %v1123 = vsel %vm1121, %v1122, %v1118
    %v1124 = vadd.s32 %v1119, %v1123
    %v1125 = vadd.s32 %v1124, 536870912
    %v1126 = vshrl.u32 %v1125, 30
    %v1127 = vshll.u32 %v1126, 30
    %v1128 = vsub.s32 %v1124, %v1127
    %vm1129 = vcmp.lt.s32.totalorder %v1128, 0
    %v1130 = vsub.s32 0, %v1128
    %v1131 = vsel %vm1129, %v1130, %v1128
    %v1132 = vclz %v1131
    %v1133 = vsub.s32 %v1132, 2
    %vm1134 = vcmp.gt.s32.totalorder 0, %v1133
    %v1135 = vsel %vm1134, 0, %v1133
    %v1136 = vsub.s32 32, %v1135
    %v1137 = vshll.u32 %v1128, %v1135
    %v1138 = vshrl.u32 %v1120, %v1136
    %v1139 = vor.u32 %v1137, %v1138
    %v1140 = vsub.s32 4294967266, %v1135
    %v1141 = vadd.s32 %v1140, 127
    %v1142 = vshll.u32 %v1141, 23
    %v1143 = vor.u32 4788187, %v1142
    %v1144 = vand.u32 2147483647, %v1143
    %v1146 = vcvt.s32.f32 %v1139
    %v1147 = vmul.f32 %v1146, %v1144
    %v1148 = vxor.u32 %v1147, 2147483648
    %v1149 = vsel %vm1066, %v1148, %v1147
    %v1150 = vsub.s32 4, %v1126
    %v1151 = vsel %vm1066, %v1150, %v1126
    %v1152 = vsel %vm1065, %v1063, %v1149
    %v1153 = vsel %vm1065, 0, %v1151
    %v1154 = vcosq.f32.pop %v1152
    %v1155 = vsinq.f32.pop %v1152
    %vm1156 = vweird.f32 %v1063
    %v1157 = vadd.s32 %v1153, 3
    %v1158 = vand.u32 %v1157, 3
    %vm1159 = vcmp.lt.s32.totalorder %v1158, 2
    %vm1160 = vcmp.eq.s32.totalorder %v1158, 0
    %v1161 = vxor.u32 %v1155, 2147483648
    %v1162 = vsel %vm1160, %v1154, %v1161
    %vm1163 = vcmp.eq.s32.totalorder %v1158, 2
    %v1164 = vxor.u32 %v1154, 2147483648
    %v1165 = vsel %vm1163, %v1164, %v1155
    %v1166 = vsel %vm1159, %v1162, %v1165
    %v1167 = vsel %vm1156, nan, %v1166
    %v1168 = vand.u32 2147483647, %v1063
    %vm1169 = vcmp.le.f32.partialorder %v1168, 0.7853982
    %vm1170 = vcmp.lt.s32.totalorder %v1063, 0
    %v1171 = vand.u32 %v1063, 2139095040
    %v1172 = vshrl.u32 %v1171, 23
    %v1173 = vsub.s32 %v1172, 127
    %v1174 = vand.u32 2147483647, %v1063
    %v1175 = vand.u32 %v1174, 8388607
    %v1176 = vor.u32 %v1175, 8388608
    %v1177 = vsub.s32 0, %v1176
    %v1178 = vadd.s32 %v1173, 1
    %vm1179 = vcmp.gt.s32.totalorder %v1178, 0
    %v1180 = vsel %vm1179, %v1178, 0
    %v1181 = vshrl.u32 %v1180, 5
    %v1182 = vand.u32 %v1180, 31
    %v1183 = vsub.s32 32, %v1182
    %v1184 = vshrl.u32 683565275, %v1183
    %v1185 = vshll.u32 683565275, %v1182
    %v1186 = vshrl.u32 2475754826, %v1183
    %v1187 = vor.u32 %v1185, %v1186
    %v1188 = vshll.u32 2475754826, %v1182
    %v1189 = vshrl.u32 2131351028, %v1183
    %v1190 = vor.u32 %v1188, %v1189
    %v1191 = vshll.u32 2131351028, %v1182
    %v1192 = vshrl.u32 2102212464, %v1183
    %v1193 = vor.u32 %v1191, %v1192
    %v1194 = vshll.u32 2102212464, %v1182
    %v1195 = vshrl.u32 920167782, %v1183
    %v1196 = vor.u32 %v1194, %v1195
    %v1197 = vshll.u32 920167782, %v1182
    %v1198 = vshrl.u32 1326507024, %v1183
    %v1199 = vor.u32 %v1197, %v1198
    %vm1200 = vcmp.lt.s32.totalorder %v1181, 1
    %vm1201 = vcmp.lt.s32.totalorder %v1181, 2
    %vm1202 = vcmp.lt.s32.totalorder %v1181, 3
    %vm1203 = vcmp.lt.s32.totalorder %v1181, 4
    %v1204 = vsel %vm1200, %v1184, %v1187
    %v1205 = vsel %vm1203, %v1193, 2102212464
    %v1206 = vsel %vm1202, %v1190, %v1205
    %v1207 = vsel %vm1201, %v1204, %v1206
    %v1208 = vsel %vm1200, %v1187, %v1190
    %v1209 = vsel %vm1203, %v1196, 920167782
    %v1210 = vsel %vm1202, %v1193, %v1209
    %v1211 = vsel %vm1201, %v1208, %v1210
    %v1212 = vsel %vm1200, %v1190, %v1193
    %v1213 = vsel %vm1203, %v1199, 1326507024
    %v1214 = vsel %vm1202, %v1196, %v1213
    %v1215 = vsel %vm1201, %v1212, %v1214
    %v1216 = vshll.u32 %v1176, 8
    %v1217 = vmul.u32.u64.compose %v1216, %v1215
    %v1218 = vextract.low.u32 %v1217
    %v1219 = vextract.high.u32 %v1217
    %v1220 = vmul.u32.u64.compose %v1216, %v1211
    %v1221 = vextract.low.u32 %v1220
    %v1222 = vextract.high.u32 %v1220
    %v1223 = vmul.u32 %v1216, %v1207
    %v1224 = vadd.s32 %v1219, %v1221
    %vm1225 = vc.u32 %v1219, %v1221
    %v1226 = vadd.s32 %v1222, 1
    %v1227 = vsel %vm1225, %v1226, %v1222
    %v1228 = vadd.s32 %v1223, %v1227
    %v1229 = vadd.s32 %v1228, 536870912
    %v1230 = vshrl.u32 %v1229, 30
    %v1231 = vshll.u32 %v1230, 30
    %v1232 = vsub.s32 %v1228, %v1231
    %vm1233 = vcmp.lt.s32.totalorder %v1232, 0
    %v1234 = vsub.s32 0, %v1232
    %v1235 = vsel %vm1233, %v1234, %v1232
    %v1236 = vclz %v1235
    %v1237 = vsub.s32 %v1236, 2
    %vm1238 = vcmp.gt.s32.totalorder 0, %v1237
    %v1239 = vsel %vm1238, 0, %v1237
    %v1240 = vsub.s32 32, %v1239
    %v1241 = vshll.u32 %v1232, %v1239
    %v1242 = vshrl.u32 %v1224, %v1240
    %v1243 = vor.u32 %v1241, %v1242
    %v1244 = vsub.s32 4294967266, %v1239
    %v1245 = vadd.s32 %v1244, 127
    %v1246 = vshll.u32 %v1245, 23
    %v1247 = vor.u32 4788187, %v1246
    %v1248 = vand.u32 2147483647, %v1247
    %v1250 = vcvt.s32.f32 %v1243
    %v1251 = vmul.f32 %v1250, %v1248
    %v1252 = vxor.u32 %v1251, 2147483648
    %v1253 = vsel %vm1170, %v1252, %v1251
    %v1254 = vsub.s32 4, %v1230
    %v1255 = vsel %vm1170, %v1254, %v1230
    %v1256 = vsel %vm1169, %v1063, %v1253
    %v1257 = vsel %vm1169, 0, %v1255
    %v1258 = vcosq.f32.pop %v1256
    %v1259 = vsinq.f32.pop %v1256
    %vm1260 = vweird.f32 %v1063
    %v1261 = vand.u32 %v1257, 3
    %vm1262 = vcmp.lt.s32.totalorder %v1261, 2
    %vm1263 = vcmp.eq.s32.totalorder %v1261, 0
    %v1264 = vxor.u32 %v1259, 2147483648
    %v1265 = vsel %vm1263, %v1258, %v1264
    %vm1266 = vcmp.eq.s32.totalorder %v1261, 2
    %v1267 = vxor.u32 %v1258, 2147483648
    %v1268 = vsel %vm1266, %v1267, %v1259
    %v1269 = vsel %vm1262, %v1265, %v1268
    %v1270 = vsel %vm1260, nan, %v1269
    %v1271 = vsub.f32 1.0, %v1270
    %v1272 = vmul.f32 %v1051, %v1062
    %v1273 = vmul.f32 %v1053, %v1062
    %v1274 = vmul.f32 %v1055, %v1062
    %v1275 = vmul.f32 %v1272, %v1272
    %v1276 = vmul.f32 %v1275, %v1271
    %v1277 = vadd.f32 %v1270, %v1276
    %v1278 = vmul.f32 %v1272, %v1273
    %v1279 = vmul.f32 %v1278, %v1271
    %v1280 = vmul.f32 %v1274, %v1167
    %v1281 = vsub.f32 %v1279, %v1280
    %v1282 = vmul.f32 %v1272, %v1274
    %v1283 = vmul.f32 %v1282, %v1271
    %v1284 = vmul.f32 %v1273, %v1167
    %v1285 = vadd.f32 %v1283, %v1284
    %v1286 = vadd.f32 %v1279, %v1280
    %v1287 = vmul.f32 %v1273, %v1273
    %v1288 = vmul.f32 %v1287, %v1271
    %v1289 = vadd.f32 %v1270, %v1288
    %v1290 = vmul.f32 %v1273, %v1274
    %v1291 = vmul.f32 %v1290, %v1271
    %v1292 = vmul.f32 %v1272, %v1167
    %v1293 = vsub.f32 %v1291, %v1292
    %v1294 = vsub.f32 %v1283, %v1284
    %v1295 = vadd.f32 %v1291, %v1292
    %v1296 = vmul.f32 %v1274, %v1274
    %v1297 = vmul.f32 %v1296, %v1271
    %v1298 = vadd.f32 %v1270, %v1297
    %s1299 = scalar_lea.vmem [#allocation7], 16
    %v1300 = vld [vmem:[%s1299] sm:$0xff]
    %s1301 = sld [smem:[#allocation6 + $0x9]]
    %v1302 = vstv %s1301
    %v1303 = vmul.f32 %v1302, %v1300
    %s1304 = sld [smem:[#allocation6 + $0xa]]
    %v1305 = vstv %s1304
    %v1306 = vmul.f32 %v1305, %v1300
    %s1307 = sld [smem:[#allocation6 + $0xb]]
    %v1308 = vstv %s1307
    %v1309 = vmul.f32 %v1308, %v1300
    %v1310 = vld [vmem:[%s960] sm:$0xff]
    %v1311 = vld [vmem:[%s967] sm:$0xff]
    %v1312 = vld [vmem:[%s974] sm:$0xff]
    %v1313 = vld [vmem:[%s982] sm:$0xff]
    %v1314 = vmul.f32 %v1310, %v1277
    %v1315 = vmul.f32 %v1311, %v1286
    %v1316 = vadd.f32 %v1314, %v1315
    %v1317 = vmul.f32 %v1312, %v1294
    %v1318 = vadd.f32 %v1316, %v1317
    %s1319 = scalar_lea.vmem [#allocation9], 288
    %1320 = vst [vmem:[%s1319] sm:$0xff] %v1318
    %v1321 = vmul.f32 %v1310, %v1281
    %v1322 = vmul.f32 %v1311, %v1289
    %v1323 = vadd.f32 %v1321, %v1322
    %v1324 = vmul.f32 %v1312, %v1295
    %v1325 = vadd.f32 %v1323, %v1324
    %s1326 = scalar_lea.vmem [#allocation9], 296
    %1327 = vst [vmem:[%s1326] sm:$0xff] %v1325
    %v1328 = vmul.f32 %v1310, %v1285
    %v1329 = vmul.f32 %v1311, %v1293
    %v1330 = vadd.f32 %v1328, %v1329
    %v1331 = vmul.f32 %v1312, %v1298
    %v1332 = vadd.f32 %v1330, %v1331
    %s1333 = scalar_lea.vmem [#allocation9], 304
    %1334 = vst [vmem:[%s1333] sm:$0xff] %v1332
    %v1335 = vmul.f32 %v1310, %v1303
    %v1336 = vmul.f32 %v1311, %v1306
    %v1337 = vadd.f32 %v1335, %v1336
    %v1338 = vmul.f32 %v1312, %v1309
    %v1339 = vadd.f32 %v1337, %v1338
    %v1340 = vadd.f32 %v1339, %v1313
    %s1341 = scalar_lea.vmem [#allocation9], 312
    %1342 = vst [vmem:[%s1341] sm:$0xff] %v1340
    %v1343 = vld [vmem:[%s993] sm:$0xff]
    %v1344 = vld [vmem:[%s1000] sm:$0xff]
    %v1345 = vld [vmem:[%s1007] sm:$0xff]
    %v1346 = vld [vmem:[%s1015] sm:$0xff]
    %v1347 = vmul.f32 %v1343, %v1277
    %v1348 = vmul.f32 %v1344, %v1286
    %v1349 = vadd.f32 %v1347, %v1348
    %v1350 = vmul.f32 %v1345, %v1294
    %v1351 = vadd.f32 %v1349, %v1350
    %s1352 = scalar_lea.vmem [#allocation9], 320
    %1353 = vst [vmem:[%s1352] sm:$0xff] %v1351
    %v1354 = vmul.f32 %v1343, %v1281
    %v1355 = vmul.f32 %v1344, %v1289
    %v1356 = vadd.f32 %v1354, %v1355
    %v1357 = vmul.f32 %v1345, %v1295
    %v1358 = vadd.f32 %v1356, %v1357
    %s1359 = scalar_lea.vmem [#allocation9], 328
    %1360 = vst [vmem:[%s1359] sm:$0xff] %v1358
    %v1361 = vmul.f32 %v1343, %v1285
    %v1362 = vmul.f32 %v1344, %v1293
    %v1363 = vadd.f32 %v1361, %v1362
    %v1364 = vmul.f32 %v1345, %v1298
    %v1365 = vadd.f32 %v1363, %v1364
    %s1366 = scalar_lea.vmem [#allocation9], 336
    %1367 = vst [vmem:[%s1366] sm:$0xff] %v1365
    %v1368 = vmul.f32 %v1343, %v1303
    %v1369 = vmul.f32 %v1344, %v1306
    %v1370 = vadd.f32 %v1368, %v1369
    %v1371 = vmul.f32 %v1345, %v1309
    %v1372 = vadd.f32 %v1370, %v1371
    %v1373 = vadd.f32 %v1372, %v1346
    %s1374 = scalar_lea.vmem [#allocation9], 344
    %1375 = vst [vmem:[%s1374] sm:$0xff] %v1373
    %v1376 = vld [vmem:[%s1026] sm:$0xff]
    %v1377 = vld [vmem:[%s1033] sm:$0xff]
    %v1378 = vld [vmem:[%s1040] sm:$0xff]
    %v1379 = vld [vmem:[%s1048] sm:$0xff]
    %v1380 = vmul.f32 %v1376, %v1277
    %v1381 = vmul.f32 %v1377, %v1286
    %v1382 = vadd.f32 %v1380, %v1381
    %v1383 = vmul.f32 %v1378, %v1294
    %v1384 = vadd.f32 %v1382, %v1383
    %s1385 = scalar_lea.vmem [#allocation9], 352
    %1386 = vst [vmem:[%s1385] sm:$0xff] %v1384
    %v1387 = vmul.f32 %v1376, %v1281
    %v1388 = vmul.f32 %v1377, %v1289
    %v1389 = vadd.f32 %v1387, %v1388
    %v1390 = vmul.f32 %v1378, %v1295
    %v1391 = vadd.f32 %v1389, %v1390
    %s1392 = scalar_lea.vmem [#allocation9], 360
    %1393 = vst [vmem:[%s1392] sm:$0xff] %v1391
    %v1394 = vmul.f32 %v1376, %v1285
    %v1395 = vmul.f32 %v1377, %v1293
    %v1396 = vadd.f32 %v1394, %v1395
    %v1397 = vmul.f32 %v1378, %v1298
    %v1398 = vadd.f32 %v1396, %v1397
    %s1399 = scalar_lea.vmem [#allocation9], 368
    %1400 = vst [vmem:[%s1399] sm:$0xff] %v1398
    %v1401 = vmul.f32 %v1376, %v1303
    %v1402 = vmul.f32 %v1377, %v1306
    %v1403 = vadd.f32 %v1401, %v1402
    %v1404 = vmul.f32 %v1378, %v1309
    %v1405 = vadd.f32 %v1403, %v1404
    %v1406 = vadd.f32 %v1405, %v1379
    %s1407 = scalar_lea.vmem [#allocation9], 376
    %1408 = vst [vmem:[%s1407] sm:$0xff] %v1406
    %s1409 = scalar_lea.vmem [#allocation2], 96
    %v1410 = vld [vmem:[%s1409] sm:$0xff]
    %s1411 = scalar_lea.vmem [#allocation2], 104
    %v1412 = vld [vmem:[%s1411] sm:$0xff]
    %s1413 = scalar_lea.vmem [#allocation2], 112
    %v1414 = vld [vmem:[%s1413] sm:$0xff]
    %v1415 = vmul.f32 %v1410, %v1410
    %v1416 = vmul.f32 %v1412, %v1412
    %v1417 = vadd.f32 %v1415, %v1416
    %v1418 = vmul.f32 %v1414, %v1414
    %v1419 = vadd.f32 %v1417, %v1418
    %v1420 = vadd.f32 %v1419, 1e-12
    %v1421 = vrsqrt.pop %v1420
    %v1422 = vmul.f32 %v1420, %v1421
    %v1423 = vand.u32 2147483647, %v1422
    %vm1424 = vcmp.le.f32.partialorder %v1423, 0.7853982
    %vm1425 = vcmp.lt.s32.totalorder %v1422, 0
    %v1426 = vand.u32 %v1422, 2139095040
    %v1427 = vshrl.u32 %v1426, 23
    %v1428 = vsub.s32 %v1427, 127
    %v1429 = vand.u32 2147483647, %v1422
    %v1430 = vand.u32 %v1429, 8388607
    %v1431 = vor.u32 %v1430, 8388608
    %v1432 = vsub.s32 0, %v1431
    %v1433 = vadd.s32 %v1428, 1
    %vm1434 = vcmp.gt.s32.totalorder %v1433, 0
    %v1435 = vsel %vm1434, %v1433, 0
    %v1436 = vshrl.u32 %v1435, 5
    %v1437 = vand.u32 %v1435, 31
    %v1438 = vsub.s32 32, %v1437
    %v1439 = vshrl.u32 683565275, %v1438
    %v1440 = vshll.u32 683565275, %v1437
    %v1441 = vshrl.u32 2475754826, %v1438
    %v1442 = vor.u32 %v1440, %v1441
    %v1443 = vshll.u32 2475754826, %v1437
    %v1444 = vshrl.u32 2131351028, %v1438
    %v1445 = vor.u32 %v1443, %v1444
    %v1446 = vshll.u32 2131351028, %v1437
    %v1447 = vshrl.u32 2102212464, %v1438
    %v1448 = vor.u32 %v1446, %v1447
    %v1449 = vshll.u32 2102212464, %v1437
    %v1450 = vshrl.u32 920167782, %v1438
    %v1451 = vor.u32 %v1449, %v1450
    %v1452 = vshll.u32 920167782, %v1437
    %v1453 = vshrl.u32 1326507024, %v1438
    %v1454 = vor.u32 %v1452, %v1453
    %vm1455 = vcmp.lt.s32.totalorder %v1436, 1
    %vm1456 = vcmp.lt.s32.totalorder %v1436, 2
    %vm1457 = vcmp.lt.s32.totalorder %v1436, 3
    %vm1458 = vcmp.lt.s32.totalorder %v1436, 4
    %v1459 = vsel %vm1455, %v1439, %v1442
    %v1460 = vsel %vm1458, %v1448, 2102212464
    %v1461 = vsel %vm1457, %v1445, %v1460
    %v1462 = vsel %vm1456, %v1459, %v1461
    %v1463 = vsel %vm1455, %v1442, %v1445
    %v1464 = vsel %vm1458, %v1451, 920167782
    %v1465 = vsel %vm1457, %v1448, %v1464
    %v1466 = vsel %vm1456, %v1463, %v1465
    %v1467 = vsel %vm1455, %v1445, %v1448
    %v1468 = vsel %vm1458, %v1454, 1326507024
    %v1469 = vsel %vm1457, %v1451, %v1468
    %v1470 = vsel %vm1456, %v1467, %v1469
    %v1471 = vshll.u32 %v1431, 8
    %v1472 = vmul.u32.u64.compose %v1471, %v1470
    %v1473 = vextract.low.u32 %v1472
    %v1474 = vextract.high.u32 %v1472
    %v1475 = vmul.u32.u64.compose %v1471, %v1466
    %v1476 = vextract.low.u32 %v1475
    %v1477 = vextract.high.u32 %v1475
    %v1478 = vmul.u32 %v1471, %v1462
    %v1479 = vadd.s32 %v1474, %v1476
    %vm1480 = vc.u32 %v1474, %v1476
    %v1481 = vadd.s32 %v1477, 1
    %v1482 = vsel %vm1480, %v1481, %v1477
    %v1483 = vadd.s32 %v1478, %v1482
    %v1484 = vadd.s32 %v1483, 536870912
    %v1485 = vshrl.u32 %v1484, 30
    %v1486 = vshll.u32 %v1485, 30
    %v1487 = vsub.s32 %v1483, %v1486
    %vm1488 = vcmp.lt.s32.totalorder %v1487, 0
    %v1489 = vsub.s32 0, %v1487
    %v1490 = vsel %vm1488, %v1489, %v1487
    %v1491 = vclz %v1490
    %v1492 = vsub.s32 %v1491, 2
    %vm1493 = vcmp.gt.s32.totalorder 0, %v1492
    %v1494 = vsel %vm1493, 0, %v1492
    %v1495 = vsub.s32 32, %v1494
    %v1496 = vshll.u32 %v1487, %v1494
    %v1497 = vshrl.u32 %v1479, %v1495
    %v1498 = vor.u32 %v1496, %v1497
    %v1499 = vsub.s32 4294967266, %v1494
    %v1500 = vadd.s32 %v1499, 127
    %v1501 = vshll.u32 %v1500, 23
    %v1502 = vor.u32 4788187, %v1501
    %v1503 = vand.u32 2147483647, %v1502
    %v1505 = vcvt.s32.f32 %v1498
    %v1506 = vmul.f32 %v1505, %v1503
    %v1507 = vxor.u32 %v1506, 2147483648
    %v1508 = vsel %vm1425, %v1507, %v1506
    %v1509 = vsub.s32 4, %v1485
    %v1510 = vsel %vm1425, %v1509, %v1485
    %v1511 = vsel %vm1424, %v1422, %v1508
    %v1512 = vsel %vm1424, 0, %v1510
    %v1513 = vcosq.f32.pop %v1511
    %v1514 = vsinq.f32.pop %v1511
    %vm1515 = vweird.f32 %v1422
    %v1516 = vadd.s32 %v1512, 3
    %v1517 = vand.u32 %v1516, 3
    %vm1518 = vcmp.lt.s32.totalorder %v1517, 2
    %vm1519 = vcmp.eq.s32.totalorder %v1517, 0
    %v1520 = vxor.u32 %v1514, 2147483648
    %v1521 = vsel %vm1519, %v1513, %v1520
    %vm1522 = vcmp.eq.s32.totalorder %v1517, 2
    %v1523 = vxor.u32 %v1513, 2147483648
    %v1524 = vsel %vm1522, %v1523, %v1514
    %v1525 = vsel %vm1518, %v1521, %v1524
    %v1526 = vsel %vm1515, nan, %v1525
    %v1527 = vand.u32 2147483647, %v1422
    %vm1528 = vcmp.le.f32.partialorder %v1527, 0.7853982
    %vm1529 = vcmp.lt.s32.totalorder %v1422, 0
    %v1530 = vand.u32 %v1422, 2139095040
    %v1531 = vshrl.u32 %v1530, 23
    %v1532 = vsub.s32 %v1531, 127
    %v1533 = vand.u32 2147483647, %v1422
    %v1534 = vand.u32 %v1533, 8388607
    %v1535 = vor.u32 %v1534, 8388608
    %v1536 = vsub.s32 0, %v1535
    %v1537 = vadd.s32 %v1532, 1
    %vm1538 = vcmp.gt.s32.totalorder %v1537, 0
    %v1539 = vsel %vm1538, %v1537, 0
    %v1540 = vshrl.u32 %v1539, 5
    %v1541 = vand.u32 %v1539, 31
    %v1542 = vsub.s32 32, %v1541
    %v1543 = vshrl.u32 683565275, %v1542
    %v1544 = vshll.u32 683565275, %v1541
    %v1545 = vshrl.u32 2475754826, %v1542
    %v1546 = vor.u32 %v1544, %v1545
    %v1547 = vshll.u32 2475754826, %v1541
    %v1548 = vshrl.u32 2131351028, %v1542
    %v1549 = vor.u32 %v1547, %v1548
    %v1550 = vshll.u32 2131351028, %v1541
    %v1551 = vshrl.u32 2102212464, %v1542
    %v1552 = vor.u32 %v1550, %v1551
    %v1553 = vshll.u32 2102212464, %v1541
    %v1554 = vshrl.u32 920167782, %v1542
    %v1555 = vor.u32 %v1553, %v1554
    %v1556 = vshll.u32 920167782, %v1541
    %v1557 = vshrl.u32 1326507024, %v1542
    %v1558 = vor.u32 %v1556, %v1557
    %vm1559 = vcmp.lt.s32.totalorder %v1540, 1
    %vm1560 = vcmp.lt.s32.totalorder %v1540, 2
    %vm1561 = vcmp.lt.s32.totalorder %v1540, 3
    %vm1562 = vcmp.lt.s32.totalorder %v1540, 4
    %v1563 = vsel %vm1559, %v1543, %v1546
    %v1564 = vsel %vm1562, %v1552, 2102212464
    %v1565 = vsel %vm1561, %v1549, %v1564
    %v1566 = vsel %vm1560, %v1563, %v1565
    %v1567 = vsel %vm1559, %v1546, %v1549
    %v1568 = vsel %vm1562, %v1555, 920167782
    %v1569 = vsel %vm1561, %v1552, %v1568
    %v1570 = vsel %vm1560, %v1567, %v1569
    %v1571 = vsel %vm1559, %v1549, %v1552
    %v1572 = vsel %vm1562, %v1558, 1326507024
    %v1573 = vsel %vm1561, %v1555, %v1572
    %v1574 = vsel %vm1560, %v1571, %v1573
    %v1575 = vshll.u32 %v1535, 8
    %v1576 = vmul.u32.u64.compose %v1575, %v1574
    %v1577 = vextract.low.u32 %v1576
    %v1578 = vextract.high.u32 %v1576
    %v1579 = vmul.u32.u64.compose %v1575, %v1570
    %v1580 = vextract.low.u32 %v1579
    %v1581 = vextract.high.u32 %v1579
    %v1582 = vmul.u32 %v1575, %v1566
    %v1583 = vadd.s32 %v1578, %v1580
    %vm1584 = vc.u32 %v1578, %v1580
    %v1585 = vadd.s32 %v1581, 1
    %v1586 = vsel %vm1584, %v1585, %v1581
    %v1587 = vadd.s32 %v1582, %v1586
    %v1588 = vadd.s32 %v1587, 536870912
    %v1589 = vshrl.u32 %v1588, 30
    %v1590 = vshll.u32 %v1589, 30
    %v1591 = vsub.s32 %v1587, %v1590
    %vm1592 = vcmp.lt.s32.totalorder %v1591, 0
    %v1593 = vsub.s32 0, %v1591
    %v1594 = vsel %vm1592, %v1593, %v1591
    %v1595 = vclz %v1594
    %v1596 = vsub.s32 %v1595, 2
    %vm1597 = vcmp.gt.s32.totalorder 0, %v1596
    %v1598 = vsel %vm1597, 0, %v1596
    %v1599 = vsub.s32 32, %v1598
    %v1600 = vshll.u32 %v1591, %v1598
    %v1601 = vshrl.u32 %v1583, %v1599
    %v1602 = vor.u32 %v1600, %v1601
    %v1603 = vsub.s32 4294967266, %v1598
    %v1604 = vadd.s32 %v1603, 127
    %v1605 = vshll.u32 %v1604, 23
    %v1606 = vor.u32 4788187, %v1605
    %v1607 = vand.u32 2147483647, %v1606
    %v1609 = vcvt.s32.f32 %v1602
    %v1610 = vmul.f32 %v1609, %v1607
    %v1611 = vxor.u32 %v1610, 2147483648
    %v1612 = vsel %vm1529, %v1611, %v1610
    %v1613 = vsub.s32 4, %v1589
    %v1614 = vsel %vm1529, %v1613, %v1589
    %v1615 = vsel %vm1528, %v1422, %v1612
    %v1616 = vsel %vm1528, 0, %v1614
    %v1617 = vcosq.f32.pop %v1615
    %v1618 = vsinq.f32.pop %v1615
    %vm1619 = vweird.f32 %v1422
    %v1620 = vand.u32 %v1616, 3
    %vm1621 = vcmp.lt.s32.totalorder %v1620, 2
    %vm1622 = vcmp.eq.s32.totalorder %v1620, 0
    %v1623 = vxor.u32 %v1618, 2147483648
    %v1624 = vsel %vm1622, %v1617, %v1623
    %vm1625 = vcmp.eq.s32.totalorder %v1620, 2
    %v1626 = vxor.u32 %v1617, 2147483648
    %v1627 = vsel %vm1625, %v1626, %v1618
    %v1628 = vsel %vm1621, %v1624, %v1627
    %v1629 = vsel %vm1619, nan, %v1628
    %v1630 = vsub.f32 1.0, %v1629
    %v1631 = vmul.f32 %v1410, %v1421
    %v1632 = vmul.f32 %v1412, %v1421
    %v1633 = vmul.f32 %v1414, %v1421
    %v1634 = vmul.f32 %v1631, %v1631
    %v1635 = vmul.f32 %v1634, %v1630
    %v1636 = vadd.f32 %v1629, %v1635
    %v1637 = vmul.f32 %v1631, %v1632
    %v1638 = vmul.f32 %v1637, %v1630
    %v1639 = vmul.f32 %v1633, %v1526
    %v1640 = vsub.f32 %v1638, %v1639
    %v1641 = vmul.f32 %v1631, %v1633
    %v1642 = vmul.f32 %v1641, %v1630
    %v1643 = vmul.f32 %v1632, %v1526
    %v1644 = vadd.f32 %v1642, %v1643
    %v1645 = vadd.f32 %v1638, %v1639
    %v1646 = vmul.f32 %v1632, %v1632
    %v1647 = vmul.f32 %v1646, %v1630
    %v1648 = vadd.f32 %v1629, %v1647
    %v1649 = vmul.f32 %v1632, %v1633
    %v1650 = vmul.f32 %v1649, %v1630
    %v1651 = vmul.f32 %v1631, %v1526
    %v1652 = vsub.f32 %v1650, %v1651
    %v1653 = vsub.f32 %v1642, %v1643
    %v1654 = vadd.f32 %v1650, %v1651
    %v1655 = vmul.f32 %v1633, %v1633
    %v1656 = vmul.f32 %v1655, %v1630
    %v1657 = vadd.f32 %v1629, %v1656
    %s1658 = scalar_lea.vmem [#allocation7], 24
    %v1659 = vld [vmem:[%s1658] sm:$0xff]
    %s1660 = sld [smem:[#allocation6 + $0xc]]
    %v1661 = vstv %s1660
    %v1662 = vmul.f32 %v1661, %v1659
    %s1663 = sld [smem:[#allocation6 + $0xd]]
    %v1664 = vstv %s1663
    %v1665 = vmul.f32 %v1664, %v1659
    %s1666 = sld [smem:[#allocation6 + $0xe]]
    %v1667 = vstv %s1666
    %v1668 = vmul.f32 %v1667, %v1659
    %v1669 = vld [vmem:[#allocation9] sm:$0xff]
    %v1670 = vld [vmem:[%s305] sm:$0xff]
    %v1671 = vld [vmem:[%s307] sm:$0xff]
    %v1672 = vld [vmem:[%s311] sm:$0xff]
    %v1673 = vmul.f32 %v1669, %v1636
    %v1674 = vmul.f32 %v1670, %v1645
    %v1675 = vadd.f32 %v1673, %v1674
    %v1676 = vmul.f32 %v1671, %v1653
    %v1677 = vadd.f32 %v1675, %v1676
    %s1678 = scalar_lea.vmem [#allocation9], 384
    %1679 = vst [vmem:[%s1678] sm:$0xff] %v1677
    %v1680 = vmul.f32 %v1669, %v1640
    %v1681 = vmul.f32 %v1670, %v1648
    %v1682 = vadd.f32 %v1680, %v1681
    %v1683 = vmul.f32 %v1671, %v1654
    %v1684 = vadd.f32 %v1682, %v1683
    %s1685 = scalar_lea.vmem [#allocation9], 392
    %1686 = vst [vmem:[%s1685] sm:$0xff] %v1684
    %v1687 = vmul.f32 %v1669, %v1644
    %v1688 = vmul.f32 %v1670, %v1652
    %v1689 = vadd.f32 %v1687, %v1688
    %v1690 = vmul.f32 %v1671, %v1657
    %v1691 = vadd.f32 %v1689, %v1690
    %s1692 = scalar_lea.vmem [#allocation9], 400
    %1693 = vst [vmem:[%s1692] sm:$0xff] %v1691
    %v1694 = vmul.f32 %v1669, %v1662
    %v1695 = vmul.f32 %v1670, %v1665
    %v1696 = vadd.f32 %v1694, %v1695
    %v1697 = vmul.f32 %v1671, %v1668
    %v1698 = vadd.f32 %v1696, %v1697
    %v1699 = vadd.f32 %v1698, %v1672
    %s1700 = scalar_lea.vmem [#allocation9], 408
    %1701 = vst [vmem:[%s1700] sm:$0xff] %v1699
    %v1702 = vld [vmem:[%s313] sm:$0xff]
    %v1703 = vld [vmem:[%s315] sm:$0xff]
    %v1704 = vld [vmem:[%s317] sm:$0xff]
    %v1705 = vld [vmem:[%s321] sm:$0xff]
    %v1706 = vmul.f32 %v1702, %v1636
    %v1707 = vmul.f32 %v1703, %v1645
    %v1708 = vadd.f32 %v1706, %v1707
    %v1709 = vmul.f32 %v1704, %v1653
    %v1710 = vadd.f32 %v1708, %v1709
    %s1711 = scalar_lea.vmem [#allocation9], 416
    %1712 = vst [vmem:[%s1711] sm:$0xff] %v1710
    %v1713 = vmul.f32 %v1702, %v1640
    %v1714 = vmul.f32 %v1703, %v1648
    %v1715 = vadd.f32 %v1713, %v1714
    %v1716 = vmul.f32 %v1704, %v1654
    %v1717 = vadd.f32 %v1715, %v1716
    %s1718 = scalar_lea.vmem [#allocation9], 424
    %1719 = vst [vmem:[%s1718] sm:$0xff] %v1717
    %v1720 = vmul.f32 %v1702, %v1644
    %v1721 = vmul.f32 %v1703, %v1652
    %v1722 = vadd.f32 %v1720, %v1721
    %v1723 = vmul.f32 %v1704, %v1657
    %v1724 = vadd.f32 %v1722, %v1723
    %s1725 = scalar_lea.vmem [#allocation9], 432
    %1726 = vst [vmem:[%s1725] sm:$0xff] %v1724
    %v1727 = vmul.f32 %v1702, %v1662
    %v1728 = vmul.f32 %v1703, %v1665
    %v1729 = vadd.f32 %v1727, %v1728
    %v1730 = vmul.f32 %v1704, %v1668
    %v1731 = vadd.f32 %v1729, %v1730
    %v1732 = vadd.f32 %v1731, %v1705
    %s1733 = scalar_lea.vmem [#allocation9], 440
    %1734 = vst [vmem:[%s1733] sm:$0xff] %v1732
    %v1735 = vld [vmem:[%s323] sm:$0xff]
    %v1736 = vld [vmem:[%s325] sm:$0xff]
    %v1737 = vld [vmem:[%s327] sm:$0xff]
    %v1738 = vld [vmem:[%s331] sm:$0xff]
    %v1739 = vmul.f32 %v1735, %v1636
    %v1740 = vmul.f32 %v1736, %v1645
    %v1741 = vadd.f32 %v1739, %v1740
    %v1742 = vmul.f32 %v1737, %v1653
    %v1743 = vadd.f32 %v1741, %v1742
    %s1744 = scalar_lea.vmem [#allocation9], 448
    %1745 = vst [vmem:[%s1744] sm:$0xff] %v1743
    %v1746 = vmul.f32 %v1735, %v1640
    %v1747 = vmul.f32 %v1736, %v1648
    %v1748 = vadd.f32 %v1746, %v1747
    %v1749 = vmul.f32 %v1737, %v1654
    %v1750 = vadd.f32 %v1748, %v1749
    %s1751 = scalar_lea.vmem [#allocation9], 456
    %1752 = vst [vmem:[%s1751] sm:$0xff] %v1750
    %v1753 = vmul.f32 %v1735, %v1644
    %v1754 = vmul.f32 %v1736, %v1652
    %v1755 = vadd.f32 %v1753, %v1754
    %v1756 = vmul.f32 %v1737, %v1657
    %v1757 = vadd.f32 %v1755, %v1756
    %s1758 = scalar_lea.vmem [#allocation9], 464
    %1759 = vst [vmem:[%s1758] sm:$0xff] %v1757
    %v1760 = vmul.f32 %v1735, %v1662
    %v1761 = vmul.f32 %v1736, %v1665
    %v1762 = vadd.f32 %v1760, %v1761
    %v1763 = vmul.f32 %v1737, %v1668
    %v1764 = vadd.f32 %v1762, %v1763
    %v1765 = vadd.f32 %v1764, %v1738
    %s1766 = scalar_lea.vmem [#allocation9], 472
    %1767 = vst [vmem:[%s1766] sm:$0xff] %v1765
    %s1768 = scalar_lea.vmem [#allocation2], 120
    %v1769 = vld [vmem:[%s1768] sm:$0xff]
    %s1770 = scalar_lea.vmem [#allocation2], 128
    %v1771 = vld [vmem:[%s1770] sm:$0xff]
    %s1772 = scalar_lea.vmem [#allocation2], 136
    %v1773 = vld [vmem:[%s1772] sm:$0xff]
    %v1774 = vmul.f32 %v1769, %v1769
    %v1775 = vmul.f32 %v1771, %v1771
    %v1776 = vadd.f32 %v1774, %v1775
    %v1777 = vmul.f32 %v1773, %v1773
    %v1778 = vadd.f32 %v1776, %v1777
    %v1779 = vadd.f32 %v1778, 1e-12
    %v1780 = vrsqrt.pop %v1779
    %v1781 = vmul.f32 %v1779, %v1780
    %v1782 = vand.u32 2147483647, %v1781
    %vm1783 = vcmp.le.f32.partialorder %v1782, 0.7853982
    %vm1784 = vcmp.lt.s32.totalorder %v1781, 0
    %v1785 = vand.u32 %v1781, 2139095040
    %v1786 = vshrl.u32 %v1785, 23
    %v1787 = vsub.s32 %v1786, 127
    %v1788 = vand.u32 2147483647, %v1781
    %v1789 = vand.u32 %v1788, 8388607
    %v1790 = vor.u32 %v1789, 8388608
    %v1791 = vsub.s32 0, %v1790
    %v1792 = vadd.s32 %v1787, 1
    %vm1793 = vcmp.gt.s32.totalorder %v1792, 0
    %v1794 = vsel %vm1793, %v1792, 0
    %v1795 = vshrl.u32 %v1794, 5
    %v1796 = vand.u32 %v1794, 31
    %v1797 = vsub.s32 32, %v1796
    %v1798 = vshrl.u32 683565275, %v1797
    %v1799 = vshll.u32 683565275, %v1796
    %v1800 = vshrl.u32 2475754826, %v1797
    %v1801 = vor.u32 %v1799, %v1800
    %v1802 = vshll.u32 2475754826, %v1796
    %v1803 = vshrl.u32 2131351028, %v1797
    %v1804 = vor.u32 %v1802, %v1803
    %v1805 = vshll.u32 2131351028, %v1796
    %v1806 = vshrl.u32 2102212464, %v1797
    %v1807 = vor.u32 %v1805, %v1806
    %v1808 = vshll.u32 2102212464, %v1796
    %v1809 = vshrl.u32 920167782, %v1797
    %v1810 = vor.u32 %v1808, %v1809
    %v1811 = vshll.u32 920167782, %v1796
    %v1812 = vshrl.u32 1326507024, %v1797
    %v1813 = vor.u32 %v1811, %v1812
    %vm1814 = vcmp.lt.s32.totalorder %v1795, 1
    %vm1815 = vcmp.lt.s32.totalorder %v1795, 2
    %vm1816 = vcmp.lt.s32.totalorder %v1795, 3
    %vm1817 = vcmp.lt.s32.totalorder %v1795, 4
    %v1818 = vsel %vm1814, %v1798, %v1801
    %v1819 = vsel %vm1817, %v1807, 2102212464
    %v1820 = vsel %vm1816, %v1804, %v1819
    %v1821 = vsel %vm1815, %v1818, %v1820
    %v1822 = vsel %vm1814, %v1801, %v1804
    %v1823 = vsel %vm1817, %v1810, 920167782
    %v1824 = vsel %vm1816, %v1807, %v1823
    %v1825 = vsel %vm1815, %v1822, %v1824
    %v1826 = vsel %vm1814, %v1804, %v1807
    %v1827 = vsel %vm1817, %v1813, 1326507024
    %v1828 = vsel %vm1816, %v1810, %v1827
    %v1829 = vsel %vm1815, %v1826, %v1828
    %v1830 = vshll.u32 %v1790, 8
    %v1831 = vmul.u32.u64.compose %v1830, %v1829
    %v1832 = vextract.low.u32 %v1831
    %v1833 = vextract.high.u32 %v1831
    %v1834 = vmul.u32.u64.compose %v1830, %v1825
    %v1835 = vextract.low.u32 %v1834
    %v1836 = vextract.high.u32 %v1834
    %v1837 = vmul.u32 %v1830, %v1821
    %v1838 = vadd.s32 %v1833, %v1835
    %vm1839 = vc.u32 %v1833, %v1835
    %v1840 = vadd.s32 %v1836, 1
    %v1841 = vsel %vm1839, %v1840, %v1836
    %v1842 = vadd.s32 %v1837, %v1841
    %v1843 = vadd.s32 %v1842, 536870912
    %v1844 = vshrl.u32 %v1843, 30
    %v1845 = vshll.u32 %v1844, 30
    %v1846 = vsub.s32 %v1842, %v1845
    %vm1847 = vcmp.lt.s32.totalorder %v1846, 0
    %v1848 = vsub.s32 0, %v1846
    %v1849 = vsel %vm1847, %v1848, %v1846
    %v1850 = vclz %v1849
    %v1851 = vsub.s32 %v1850, 2
    %vm1852 = vcmp.gt.s32.totalorder 0, %v1851
    %v1853 = vsel %vm1852, 0, %v1851
    %v1854 = vsub.s32 32, %v1853
    %v1855 = vshll.u32 %v1846, %v1853
    %v1856 = vshrl.u32 %v1838, %v1854
    %v1857 = vor.u32 %v1855, %v1856
    %v1858 = vsub.s32 4294967266, %v1853
    %v1859 = vadd.s32 %v1858, 127
    %v1860 = vshll.u32 %v1859, 23
    %v1861 = vor.u32 4788187, %v1860
    %v1862 = vand.u32 2147483647, %v1861
    %v1864 = vcvt.s32.f32 %v1857
    %v1865 = vmul.f32 %v1864, %v1862
    %v1866 = vxor.u32 %v1865, 2147483648
    %v1867 = vsel %vm1784, %v1866, %v1865
    %v1868 = vsub.s32 4, %v1844
    %v1869 = vsel %vm1784, %v1868, %v1844
    %v1870 = vsel %vm1783, %v1781, %v1867
    %v1871 = vsel %vm1783, 0, %v1869
    %v1872 = vcosq.f32.pop %v1870
    %v1873 = vsinq.f32.pop %v1870
    %vm1874 = vweird.f32 %v1781
    %v1875 = vadd.s32 %v1871, 3
    %v1876 = vand.u32 %v1875, 3
    %vm1877 = vcmp.lt.s32.totalorder %v1876, 2
    %vm1878 = vcmp.eq.s32.totalorder %v1876, 0
    %v1879 = vxor.u32 %v1873, 2147483648
    %v1880 = vsel %vm1878, %v1872, %v1879
    %vm1881 = vcmp.eq.s32.totalorder %v1876, 2
    %v1882 = vxor.u32 %v1872, 2147483648
    %v1883 = vsel %vm1881, %v1882, %v1873
    %v1884 = vsel %vm1877, %v1880, %v1883
    %v1885 = vsel %vm1874, nan, %v1884
    %v1886 = vand.u32 2147483647, %v1781
    %vm1887 = vcmp.le.f32.partialorder %v1886, 0.7853982
    %vm1888 = vcmp.lt.s32.totalorder %v1781, 0
    %v1889 = vand.u32 %v1781, 2139095040
    %v1890 = vshrl.u32 %v1889, 23
    %v1891 = vsub.s32 %v1890, 127
    %v1892 = vand.u32 2147483647, %v1781
    %v1893 = vand.u32 %v1892, 8388607
    %v1894 = vor.u32 %v1893, 8388608
    %v1895 = vsub.s32 0, %v1894
    %v1896 = vadd.s32 %v1891, 1
    %vm1897 = vcmp.gt.s32.totalorder %v1896, 0
    %v1898 = vsel %vm1897, %v1896, 0
    %v1899 = vshrl.u32 %v1898, 5
    %v1900 = vand.u32 %v1898, 31
    %v1901 = vsub.s32 32, %v1900
    %v1902 = vshrl.u32 683565275, %v1901
    %v1903 = vshll.u32 683565275, %v1900
    %v1904 = vshrl.u32 2475754826, %v1901
    %v1905 = vor.u32 %v1903, %v1904
    %v1906 = vshll.u32 2475754826, %v1900
    %v1907 = vshrl.u32 2131351028, %v1901
    %v1908 = vor.u32 %v1906, %v1907
    %v1909 = vshll.u32 2131351028, %v1900
    %v1910 = vshrl.u32 2102212464, %v1901
    %v1911 = vor.u32 %v1909, %v1910
    %v1912 = vshll.u32 2102212464, %v1900
    %v1913 = vshrl.u32 920167782, %v1901
    %v1914 = vor.u32 %v1912, %v1913
    %v1915 = vshll.u32 920167782, %v1900
    %v1916 = vshrl.u32 1326507024, %v1901
    %v1917 = vor.u32 %v1915, %v1916
    %vm1918 = vcmp.lt.s32.totalorder %v1899, 1
    %vm1919 = vcmp.lt.s32.totalorder %v1899, 2
    %vm1920 = vcmp.lt.s32.totalorder %v1899, 3
    %vm1921 = vcmp.lt.s32.totalorder %v1899, 4
    %v1922 = vsel %vm1918, %v1902, %v1905
    %v1923 = vsel %vm1921, %v1911, 2102212464
    %v1924 = vsel %vm1920, %v1908, %v1923
    %v1925 = vsel %vm1919, %v1922, %v1924
    %v1926 = vsel %vm1918, %v1905, %v1908
    %v1927 = vsel %vm1921, %v1914, 920167782
    %v1928 = vsel %vm1920, %v1911, %v1927
    %v1929 = vsel %vm1919, %v1926, %v1928
    %v1930 = vsel %vm1918, %v1908, %v1911
    %v1931 = vsel %vm1921, %v1917, 1326507024
    %v1932 = vsel %vm1920, %v1914, %v1931
    %v1933 = vsel %vm1919, %v1930, %v1932
    %v1934 = vshll.u32 %v1894, 8
    %v1935 = vmul.u32.u64.compose %v1934, %v1933
    %v1936 = vextract.low.u32 %v1935
    %v1937 = vextract.high.u32 %v1935
    %v1938 = vmul.u32.u64.compose %v1934, %v1929
    %v1939 = vextract.low.u32 %v1938
    %v1940 = vextract.high.u32 %v1938
    %v1941 = vmul.u32 %v1934, %v1925
    %v1942 = vadd.s32 %v1937, %v1939
    %vm1943 = vc.u32 %v1937, %v1939
    %v1944 = vadd.s32 %v1940, 1
    %v1945 = vsel %vm1943, %v1944, %v1940
    %v1946 = vadd.s32 %v1941, %v1945
    %v1947 = vadd.s32 %v1946, 536870912
    %v1948 = vshrl.u32 %v1947, 30
    %v1949 = vshll.u32 %v1948, 30
    %v1950 = vsub.s32 %v1946, %v1949
    %vm1951 = vcmp.lt.s32.totalorder %v1950, 0
    %v1952 = vsub.s32 0, %v1950
    %v1953 = vsel %vm1951, %v1952, %v1950
    %v1954 = vclz %v1953
    %v1955 = vsub.s32 %v1954, 2
    %vm1956 = vcmp.gt.s32.totalorder 0, %v1955
    %v1957 = vsel %vm1956, 0, %v1955
    %v1958 = vsub.s32 32, %v1957
    %v1959 = vshll.u32 %v1950, %v1957
    %v1960 = vshrl.u32 %v1942, %v1958
    %v1961 = vor.u32 %v1959, %v1960
    %v1962 = vsub.s32 4294967266, %v1957
    %v1963 = vadd.s32 %v1962, 127
    %v1964 = vshll.u32 %v1963, 23
    %v1965 = vor.u32 4788187, %v1964
    %v1966 = vand.u32 2147483647, %v1965
    %v1968 = vcvt.s32.f32 %v1961
    %v1969 = vmul.f32 %v1968, %v1966
    %v1970 = vxor.u32 %v1969, 2147483648
    %v1971 = vsel %vm1888, %v1970, %v1969
    %v1972 = vsub.s32 4, %v1948
    %v1973 = vsel %vm1888, %v1972, %v1948
    %v1974 = vsel %vm1887, %v1781, %v1971
    %v1975 = vsel %vm1887, 0, %v1973
    %v1976 = vcosq.f32.pop %v1974
    %v1977 = vsinq.f32.pop %v1974
    %vm1978 = vweird.f32 %v1781
    %v1979 = vand.u32 %v1975, 3
    %vm1980 = vcmp.lt.s32.totalorder %v1979, 2
    %vm1981 = vcmp.eq.s32.totalorder %v1979, 0
    %v1982 = vxor.u32 %v1977, 2147483648
    %v1983 = vsel %vm1981, %v1976, %v1982
    %vm1984 = vcmp.eq.s32.totalorder %v1979, 2
    %v1985 = vxor.u32 %v1976, 2147483648
    %v1986 = vsel %vm1984, %v1985, %v1977
    %v1987 = vsel %vm1980, %v1983, %v1986
    %v1988 = vsel %vm1978, nan, %v1987
    %v1989 = vsub.f32 1.0, %v1988
    %v1990 = vmul.f32 %v1769, %v1780
    %v1991 = vmul.f32 %v1771, %v1780
    %v1992 = vmul.f32 %v1773, %v1780
    %v1993 = vmul.f32 %v1990, %v1990
    %v1994 = vmul.f32 %v1993, %v1989
    %v1995 = vadd.f32 %v1988, %v1994
    %v1996 = vmul.f32 %v1990, %v1991
    %v1997 = vmul.f32 %v1996, %v1989
    %v1998 = vmul.f32 %v1992, %v1885
    %v1999 = vsub.f32 %v1997, %v1998
    %v2000 = vmul.f32 %v1990, %v1992
    %v2001 = vmul.f32 %v2000, %v1989
    %v2002 = vmul.f32 %v1991, %v1885
    %v2003 = vadd.f32 %v2001, %v2002
    %v2004 = vadd.f32 %v1997, %v1998
    %v2005 = vmul.f32 %v1991, %v1991
    %v2006 = vmul.f32 %v2005, %v1989
    %v2007 = vadd.f32 %v1988, %v2006
    %v2008 = vmul.f32 %v1991, %v1992
    %v2009 = vmul.f32 %v2008, %v1989
    %v2010 = vmul.f32 %v1990, %v1885
    %v2011 = vsub.f32 %v2009, %v2010
    %v2012 = vsub.f32 %v2001, %v2002
    %v2013 = vadd.f32 %v2009, %v2010
    %v2014 = vmul.f32 %v1992, %v1992
    %v2015 = vmul.f32 %v2014, %v1989
    %v2016 = vadd.f32 %v1988, %v2015
    %s2017 = scalar_lea.vmem [#allocation7], 32
    %v2018 = vld [vmem:[%s2017] sm:$0xff]
    %s2019 = sld [smem:[#allocation6 + $0xf]]
    %v2020 = vstv %s2019
    %v2021 = vmul.f32 %v2020, %v2018
    %s2022 = sld [smem:[#allocation6 + $0x10]]
    %v2023 = vstv %s2022
    %v2024 = vmul.f32 %v2023, %v2018
    %s2025 = sld [smem:[#allocation6 + $0x11]]
    %v2026 = vstv %s2025
    %v2027 = vmul.f32 %v2026, %v2018
    %v2028 = vld [vmem:[%s1678] sm:$0xff]
    %v2029 = vld [vmem:[%s1685] sm:$0xff]
    %v2030 = vld [vmem:[%s1692] sm:$0xff]
    %v2031 = vld [vmem:[%s1700] sm:$0xff]
    %v2032 = vmul.f32 %v2028, %v1995
    %v2033 = vmul.f32 %v2029, %v2004
    %v2034 = vadd.f32 %v2032, %v2033
    %v2035 = vmul.f32 %v2030, %v2012
    %v2036 = vadd.f32 %v2034, %v2035
    %s2037 = scalar_lea.vmem [#allocation9], 480
    %2038 = vst [vmem:[%s2037] sm:$0xff] %v2036
    %v2039 = vmul.f32 %v2028, %v1999
    %v2040 = vmul.f32 %v2029, %v2007
    %v2041 = vadd.f32 %v2039, %v2040
    %v2042 = vmul.f32 %v2030, %v2013
    %v2043 = vadd.f32 %v2041, %v2042
    %s2044 = scalar_lea.vmem [#allocation9], 488
    %2045 = vst [vmem:[%s2044] sm:$0xff] %v2043
    %v2046 = vmul.f32 %v2028, %v2003
    %v2047 = vmul.f32 %v2029, %v2011
    %v2048 = vadd.f32 %v2046, %v2047
    %v2049 = vmul.f32 %v2030, %v2016
    %v2050 = vadd.f32 %v2048, %v2049
    %s2051 = scalar_lea.vmem [#allocation9], 496
    %2052 = vst [vmem:[%s2051] sm:$0xff] %v2050
    %v2053 = vmul.f32 %v2028, %v2021
    %v2054 = vmul.f32 %v2029, %v2024
    %v2055 = vadd.f32 %v2053, %v2054
    %v2056 = vmul.f32 %v2030, %v2027
    %v2057 = vadd.f32 %v2055, %v2056
    %v2058 = vadd.f32 %v2057, %v2031
    %s2059 = scalar_lea.vmem [#allocation9], 504
    %2060 = vst [vmem:[%s2059] sm:$0xff] %v2058
    %v2061 = vld [vmem:[%s1711] sm:$0xff]
    %v2062 = vld [vmem:[%s1718] sm:$0xff]
    %v2063 = vld [vmem:[%s1725] sm:$0xff]
    %v2064 = vld [vmem:[%s1733] sm:$0xff]
    %v2065 = vmul.f32 %v2061, %v1995
    %v2066 = vmul.f32 %v2062, %v2004
    %v2067 = vadd.f32 %v2065, %v2066
    %v2068 = vmul.f32 %v2063, %v2012
    %v2069 = vadd.f32 %v2067, %v2068
    %s2070 = scalar_lea.vmem [#allocation9], 512
    %2071 = vst [vmem:[%s2070] sm:$0xff] %v2069
    %v2072 = vmul.f32 %v2061, %v1999
    %v2073 = vmul.f32 %v2062, %v2007
    %v2074 = vadd.f32 %v2072, %v2073
    %v2075 = vmul.f32 %v2063, %v2013
    %v2076 = vadd.f32 %v2074, %v2075
    %s2077 = scalar_lea.vmem [#allocation9], 520
    %2078 = vst [vmem:[%s2077] sm:$0xff] %v2076
    %v2079 = vmul.f32 %v2061, %v2003
    %v2080 = vmul.f32 %v2062, %v2011
    %v2081 = vadd.f32 %v2079, %v2080
    %v2082 = vmul.f32 %v2063, %v2016
    %v2083 = vadd.f32 %v2081, %v2082
    %s2084 = scalar_lea.vmem [#allocation9], 528
    %2085 = vst [vmem:[%s2084] sm:$0xff] %v2083
    %v2086 = vmul.f32 %v2061, %v2021
    %v2087 = vmul.f32 %v2062, %v2024
    %v2088 = vadd.f32 %v2086, %v2087
    %v2089 = vmul.f32 %v2063, %v2027
    %v2090 = vadd.f32 %v2088, %v2089
    %v2091 = vadd.f32 %v2090, %v2064
    %s2092 = scalar_lea.vmem [#allocation9], 536
    %2093 = vst [vmem:[%s2092] sm:$0xff] %v2091
    %v2094 = vld [vmem:[%s1744] sm:$0xff]
    %v2095 = vld [vmem:[%s1751] sm:$0xff]
    %v2096 = vld [vmem:[%s1758] sm:$0xff]
    %v2097 = vld [vmem:[%s1766] sm:$0xff]
    %v2098 = vmul.f32 %v2094, %v1995
    %v2099 = vmul.f32 %v2095, %v2004
    %v2100 = vadd.f32 %v2098, %v2099
    %v2101 = vmul.f32 %v2096, %v2012
    %v2102 = vadd.f32 %v2100, %v2101
    %s2103 = scalar_lea.vmem [#allocation9], 544
    %2104 = vst [vmem:[%s2103] sm:$0xff] %v2102
    %v2105 = vmul.f32 %v2094, %v1999
    %v2106 = vmul.f32 %v2095, %v2007
    %v2107 = vadd.f32 %v2105, %v2106
    %v2108 = vmul.f32 %v2096, %v2013
    %v2109 = vadd.f32 %v2107, %v2108
    %s2110 = scalar_lea.vmem [#allocation9], 552
    %2111 = vst [vmem:[%s2110] sm:$0xff] %v2109
    %v2112 = vmul.f32 %v2094, %v2003
    %v2113 = vmul.f32 %v2095, %v2011
    %v2114 = vadd.f32 %v2112, %v2113
    %v2115 = vmul.f32 %v2096, %v2016
    %v2116 = vadd.f32 %v2114, %v2115
    %s2117 = scalar_lea.vmem [#allocation9], 560
    %2118 = vst [vmem:[%s2117] sm:$0xff] %v2116
    %v2119 = vmul.f32 %v2094, %v2021
    %v2120 = vmul.f32 %v2095, %v2024
    %v2121 = vadd.f32 %v2119, %v2120
    %v2122 = vmul.f32 %v2096, %v2027
    %v2123 = vadd.f32 %v2121, %v2122
    %v2124 = vadd.f32 %v2123, %v2097
    %s2125 = scalar_lea.vmem [#allocation9], 568
    %2126 = vst [vmem:[%s2125] sm:$0xff] %v2124
    %s2127 = scalar_lea.vmem [#allocation2], 144
    %v2128 = vld [vmem:[%s2127] sm:$0xff]
    %s2129 = scalar_lea.vmem [#allocation2], 152
    %v2130 = vld [vmem:[%s2129] sm:$0xff]
    %s2131 = scalar_lea.vmem [#allocation2], 160
    %v2132 = vld [vmem:[%s2131] sm:$0xff]
    %v2133 = vmul.f32 %v2128, %v2128
    %v2134 = vmul.f32 %v2130, %v2130
    %v2135 = vadd.f32 %v2133, %v2134
    %v2136 = vmul.f32 %v2132, %v2132
    %v2137 = vadd.f32 %v2135, %v2136
    %v2138 = vadd.f32 %v2137, 1e-12
    %v2139 = vrsqrt.pop %v2138
    %v2140 = vmul.f32 %v2138, %v2139
    %v2141 = vand.u32 2147483647, %v2140
    %vm2142 = vcmp.le.f32.partialorder %v2141, 0.7853982
    %vm2143 = vcmp.lt.s32.totalorder %v2140, 0
    %v2144 = vand.u32 %v2140, 2139095040
    %v2145 = vshrl.u32 %v2144, 23
    %v2146 = vsub.s32 %v2145, 127
    %v2147 = vand.u32 2147483647, %v2140
    %v2148 = vand.u32 %v2147, 8388607
    %v2149 = vor.u32 %v2148, 8388608
    %v2150 = vsub.s32 0, %v2149
    %v2151 = vadd.s32 %v2146, 1
    %vm2152 = vcmp.gt.s32.totalorder %v2151, 0
    %v2153 = vsel %vm2152, %v2151, 0
    %v2154 = vshrl.u32 %v2153, 5
    %v2155 = vand.u32 %v2153, 31
    %v2156 = vsub.s32 32, %v2155
    %v2157 = vshrl.u32 683565275, %v2156
    %v2158 = vshll.u32 683565275, %v2155
    %v2159 = vshrl.u32 2475754826, %v2156
    %v2160 = vor.u32 %v2158, %v2159
    %v2161 = vshll.u32 2475754826, %v2155
    %v2162 = vshrl.u32 2131351028, %v2156
    %v2163 = vor.u32 %v2161, %v2162
    %v2164 = vshll.u32 2131351028, %v2155
    %v2165 = vshrl.u32 2102212464, %v2156
    %v2166 = vor.u32 %v2164, %v2165
    %v2167 = vshll.u32 2102212464, %v2155
    %v2168 = vshrl.u32 920167782, %v2156
    %v2169 = vor.u32 %v2167, %v2168
    %v2170 = vshll.u32 920167782, %v2155
    %v2171 = vshrl.u32 1326507024, %v2156
    %v2172 = vor.u32 %v2170, %v2171
    %vm2173 = vcmp.lt.s32.totalorder %v2154, 1
    %vm2174 = vcmp.lt.s32.totalorder %v2154, 2
    %vm2175 = vcmp.lt.s32.totalorder %v2154, 3
    %vm2176 = vcmp.lt.s32.totalorder %v2154, 4
    %v2177 = vsel %vm2173, %v2157, %v2160
    %v2178 = vsel %vm2176, %v2166, 2102212464
    %v2179 = vsel %vm2175, %v2163, %v2178
    %v2180 = vsel %vm2174, %v2177, %v2179
    %v2181 = vsel %vm2173, %v2160, %v2163
    %v2182 = vsel %vm2176, %v2169, 920167782
    %v2183 = vsel %vm2175, %v2166, %v2182
    %v2184 = vsel %vm2174, %v2181, %v2183
    %v2185 = vsel %vm2173, %v2163, %v2166
    %v2186 = vsel %vm2176, %v2172, 1326507024
    %v2187 = vsel %vm2175, %v2169, %v2186
    %v2188 = vsel %vm2174, %v2185, %v2187
    %v2189 = vshll.u32 %v2149, 8
    %v2190 = vmul.u32.u64.compose %v2189, %v2188
    %v2191 = vextract.low.u32 %v2190
    %v2192 = vextract.high.u32 %v2190
    %v2193 = vmul.u32.u64.compose %v2189, %v2184
    %v2194 = vextract.low.u32 %v2193
    %v2195 = vextract.high.u32 %v2193
    %v2196 = vmul.u32 %v2189, %v2180
    %v2197 = vadd.s32 %v2192, %v2194
    %vm2198 = vc.u32 %v2192, %v2194
    %v2199 = vadd.s32 %v2195, 1
    %v2200 = vsel %vm2198, %v2199, %v2195
    %v2201 = vadd.s32 %v2196, %v2200
    %v2202 = vadd.s32 %v2201, 536870912
    %v2203 = vshrl.u32 %v2202, 30
    %v2204 = vshll.u32 %v2203, 30
    %v2205 = vsub.s32 %v2201, %v2204
    %vm2206 = vcmp.lt.s32.totalorder %v2205, 0
    %v2207 = vsub.s32 0, %v2205
    %v2208 = vsel %vm2206, %v2207, %v2205
    %v2209 = vclz %v2208
    %v2210 = vsub.s32 %v2209, 2
    %vm2211 = vcmp.gt.s32.totalorder 0, %v2210
    %v2212 = vsel %vm2211, 0, %v2210
    %v2213 = vsub.s32 32, %v2212
    %v2214 = vshll.u32 %v2205, %v2212
    %v2215 = vshrl.u32 %v2197, %v2213
    %v2216 = vor.u32 %v2214, %v2215
    %v2217 = vsub.s32 4294967266, %v2212
    %v2218 = vadd.s32 %v2217, 127
    %v2219 = vshll.u32 %v2218, 23
    %v2220 = vor.u32 4788187, %v2219
    %v2221 = vand.u32 2147483647, %v2220
    %v2223 = vcvt.s32.f32 %v2216
    %v2224 = vmul.f32 %v2223, %v2221
    %v2225 = vxor.u32 %v2224, 2147483648
    %v2226 = vsel %vm2143, %v2225, %v2224
    %v2227 = vsub.s32 4, %v2203
    %v2228 = vsel %vm2143, %v2227, %v2203
    %v2229 = vsel %vm2142, %v2140, %v2226
    %v2230 = vsel %vm2142, 0, %v2228
    %v2231 = vcosq.f32.pop %v2229
    %v2232 = vsinq.f32.pop %v2229
    %vm2233 = vweird.f32 %v2140
    %v2234 = vadd.s32 %v2230, 3
    %v2235 = vand.u32 %v2234, 3
    %vm2236 = vcmp.lt.s32.totalorder %v2235, 2
    %vm2237 = vcmp.eq.s32.totalorder %v2235, 0
    %v2238 = vxor.u32 %v2232, 2147483648
    %v2239 = vsel %vm2237, %v2231, %v2238
    %vm2240 = vcmp.eq.s32.totalorder %v2235, 2
    %v2241 = vxor.u32 %v2231, 2147483648
    %v2242 = vsel %vm2240, %v2241, %v2232
    %v2243 = vsel %vm2236, %v2239, %v2242
    %v2244 = vsel %vm2233, nan, %v2243
    %v2245 = vand.u32 2147483647, %v2140
    %vm2246 = vcmp.le.f32.partialorder %v2245, 0.7853982
    %vm2247 = vcmp.lt.s32.totalorder %v2140, 0
    %v2248 = vand.u32 %v2140, 2139095040
    %v2249 = vshrl.u32 %v2248, 23
    %v2250 = vsub.s32 %v2249, 127
    %v2251 = vand.u32 2147483647, %v2140
    %v2252 = vand.u32 %v2251, 8388607
    %v2253 = vor.u32 %v2252, 8388608
    %v2254 = vsub.s32 0, %v2253
    %v2255 = vadd.s32 %v2250, 1
    %vm2256 = vcmp.gt.s32.totalorder %v2255, 0
    %v2257 = vsel %vm2256, %v2255, 0
    %v2258 = vshrl.u32 %v2257, 5
    %v2259 = vand.u32 %v2257, 31
    %v2260 = vsub.s32 32, %v2259
    %v2261 = vshrl.u32 683565275, %v2260
    %v2262 = vshll.u32 683565275, %v2259
    %v2263 = vshrl.u32 2475754826, %v2260
    %v2264 = vor.u32 %v2262, %v2263
    %v2265 = vshll.u32 2475754826, %v2259
    %v2266 = vshrl.u32 2131351028, %v2260
    %v2267 = vor.u32 %v2265, %v2266
    %v2268 = vshll.u32 2131351028, %v2259
    %v2269 = vshrl.u32 2102212464, %v2260
    %v2270 = vor.u32 %v2268, %v2269
    %v2271 = vshll.u32 2102212464, %v2259
    %v2272 = vshrl.u32 920167782, %v2260
    %v2273 = vor.u32 %v2271, %v2272
    %v2274 = vshll.u32 920167782, %v2259
    %v2275 = vshrl.u32 1326507024, %v2260
    %v2276 = vor.u32 %v2274, %v2275
    %vm2277 = vcmp.lt.s32.totalorder %v2258, 1
    %vm2278 = vcmp.lt.s32.totalorder %v2258, 2
    %vm2279 = vcmp.lt.s32.totalorder %v2258, 3
    %vm2280 = vcmp.lt.s32.totalorder %v2258, 4
    %v2281 = vsel %vm2277, %v2261, %v2264
    %v2282 = vsel %vm2280, %v2270, 2102212464
    %v2283 = vsel %vm2279, %v2267, %v2282
    %v2284 = vsel %vm2278, %v2281, %v2283
    %v2285 = vsel %vm2277, %v2264, %v2267
    %v2286 = vsel %vm2280, %v2273, 920167782
    %v2287 = vsel %vm2279, %v2270, %v2286
    %v2288 = vsel %vm2278, %v2285, %v2287
    %v2289 = vsel %vm2277, %v2267, %v2270
    %v2290 = vsel %vm2280, %v2276, 1326507024
    %v2291 = vsel %vm2279, %v2273, %v2290
    %v2292 = vsel %vm2278, %v2289, %v2291
    %v2293 = vshll.u32 %v2253, 8
    %v2294 = vmul.u32.u64.compose %v2293, %v2292
    %v2295 = vextract.low.u32 %v2294
    %v2296 = vextract.high.u32 %v2294
    %v2297 = vmul.u32.u64.compose %v2293, %v2288
    %v2298 = vextract.low.u32 %v2297
    %v2299 = vextract.high.u32 %v2297
    %v2300 = vmul.u32 %v2293, %v2284
    %v2301 = vadd.s32 %v2296, %v2298
    %vm2302 = vc.u32 %v2296, %v2298
    %v2303 = vadd.s32 %v2299, 1
    %v2304 = vsel %vm2302, %v2303, %v2299
    %v2305 = vadd.s32 %v2300, %v2304
    %v2306 = vadd.s32 %v2305, 536870912
    %v2307 = vshrl.u32 %v2306, 30
    %v2308 = vshll.u32 %v2307, 30
    %v2309 = vsub.s32 %v2305, %v2308
    %vm2310 = vcmp.lt.s32.totalorder %v2309, 0
    %v2311 = vsub.s32 0, %v2309
    %v2312 = vsel %vm2310, %v2311, %v2309
    %v2313 = vclz %v2312
    %v2314 = vsub.s32 %v2313, 2
    %vm2315 = vcmp.gt.s32.totalorder 0, %v2314
    %v2316 = vsel %vm2315, 0, %v2314
    %v2317 = vsub.s32 32, %v2316
    %v2318 = vshll.u32 %v2309, %v2316
    %v2319 = vshrl.u32 %v2301, %v2317
    %v2320 = vor.u32 %v2318, %v2319
    %v2321 = vsub.s32 4294967266, %v2316
    %v2322 = vadd.s32 %v2321, 127
    %v2323 = vshll.u32 %v2322, 23
    %v2324 = vor.u32 4788187, %v2323
    %v2325 = vand.u32 2147483647, %v2324
    %v2327 = vcvt.s32.f32 %v2320
    %v2328 = vmul.f32 %v2327, %v2325
    %v2329 = vxor.u32 %v2328, 2147483648
    %v2330 = vsel %vm2247, %v2329, %v2328
    %v2331 = vsub.s32 4, %v2307
    %v2332 = vsel %vm2247, %v2331, %v2307
    %v2333 = vsel %vm2246, %v2140, %v2330
    %v2334 = vsel %vm2246, 0, %v2332
    %v2335 = vcosq.f32.pop %v2333
    %v2336 = vsinq.f32.pop %v2333
    %vm2337 = vweird.f32 %v2140
    %v2338 = vand.u32 %v2334, 3
    %vm2339 = vcmp.lt.s32.totalorder %v2338, 2
    %vm2340 = vcmp.eq.s32.totalorder %v2338, 0
    %v2341 = vxor.u32 %v2336, 2147483648
    %v2342 = vsel %vm2340, %v2335, %v2341
    %vm2343 = vcmp.eq.s32.totalorder %v2338, 2
    %v2344 = vxor.u32 %v2335, 2147483648
    %v2345 = vsel %vm2343, %v2344, %v2336
    %v2346 = vsel %vm2339, %v2342, %v2345
    %v2347 = vsel %vm2337, nan, %v2346
    %v2348 = vsub.f32 1.0, %v2347
    %v2349 = vmul.f32 %v2128, %v2139
    %v2350 = vmul.f32 %v2130, %v2139
    %v2351 = vmul.f32 %v2132, %v2139
    %v2352 = vmul.f32 %v2349, %v2349
    %v2353 = vmul.f32 %v2352, %v2348
    %v2354 = vadd.f32 %v2347, %v2353
    %v2355 = vmul.f32 %v2349, %v2350
    %v2356 = vmul.f32 %v2355, %v2348
    %v2357 = vmul.f32 %v2351, %v2244
    %v2358 = vsub.f32 %v2356, %v2357
    %v2359 = vmul.f32 %v2349, %v2351
    %v2360 = vmul.f32 %v2359, %v2348
    %v2361 = vmul.f32 %v2350, %v2244
    %v2362 = vadd.f32 %v2360, %v2361
    %v2363 = vadd.f32 %v2356, %v2357
    %v2364 = vmul.f32 %v2350, %v2350
    %v2365 = vmul.f32 %v2364, %v2348
    %v2366 = vadd.f32 %v2347, %v2365
    %v2367 = vmul.f32 %v2350, %v2351
    %v2368 = vmul.f32 %v2367, %v2348
    %v2369 = vmul.f32 %v2349, %v2244
    %v2370 = vsub.f32 %v2368, %v2369
    %v2371 = vsub.f32 %v2360, %v2361
    %v2372 = vadd.f32 %v2368, %v2369
    %v2373 = vmul.f32 %v2351, %v2351
    %v2374 = vmul.f32 %v2373, %v2348
    %v2375 = vadd.f32 %v2347, %v2374
    %s2376 = scalar_lea.vmem [#allocation7], 40
    %v2377 = vld [vmem:[%s2376] sm:$0xff]
    %s2378 = sld [smem:[#allocation6 + $0x12]]
    %v2379 = vstv %s2378
    %v2380 = vmul.f32 %v2379, %v2377
    %s2381 = sld [smem:[#allocation6 + $0x13]]
    %v2382 = vstv %s2381
    %v2383 = vmul.f32 %v2382, %v2377
    %s2384 = sld [smem:[#allocation6 + $0x14]]
    %v2385 = vstv %s2384
    %v2386 = vmul.f32 %v2385, %v2377
    %v2387 = vld [vmem:[%s2037] sm:$0xff]
    %v2388 = vld [vmem:[%s2044] sm:$0xff]
    %v2389 = vld [vmem:[%s2051] sm:$0xff]
    %v2390 = vld [vmem:[%s2059] sm:$0xff]
    %v2391 = vmul.f32 %v2387, %v2354
    %v2392 = vmul.f32 %v2388, %v2363
    %v2393 = vadd.f32 %v2391, %v2392
    %v2394 = vmul.f32 %v2389, %v2371
    %v2395 = vadd.f32 %v2393, %v2394
    %s2396 = scalar_lea.vmem [#allocation9], 576
    %2397 = vst [vmem:[%s2396] sm:$0xff] %v2395
    %v2398 = vmul.f32 %v2387, %v2358
    %v2399 = vmul.f32 %v2388, %v2366
    %v2400 = vadd.f32 %v2398, %v2399
    %v2401 = vmul.f32 %v2389, %v2372
    %v2402 = vadd.f32 %v2400, %v2401
    %s2403 = scalar_lea.vmem [#allocation9], 584
    %2404 = vst [vmem:[%s2403] sm:$0xff] %v2402
    %v2405 = vmul.f32 %v2387, %v2362
    %v2406 = vmul.f32 %v2388, %v2370
    %v2407 = vadd.f32 %v2405, %v2406
    %v2408 = vmul.f32 %v2389, %v2375
    %v2409 = vadd.f32 %v2407, %v2408
    %s2410 = scalar_lea.vmem [#allocation9], 592
    %2411 = vst [vmem:[%s2410] sm:$0xff] %v2409
    %v2412 = vmul.f32 %v2387, %v2380
    %v2413 = vmul.f32 %v2388, %v2383
    %v2414 = vadd.f32 %v2412, %v2413
    %v2415 = vmul.f32 %v2389, %v2386
    %v2416 = vadd.f32 %v2414, %v2415
    %v2417 = vadd.f32 %v2416, %v2390
    %s2418 = scalar_lea.vmem [#allocation9], 600
    %2419 = vst [vmem:[%s2418] sm:$0xff] %v2417
    %v2420 = vld [vmem:[%s2070] sm:$0xff]
    %v2421 = vld [vmem:[%s2077] sm:$0xff]
    %v2422 = vld [vmem:[%s2084] sm:$0xff]
    %v2423 = vld [vmem:[%s2092] sm:$0xff]
    %v2424 = vmul.f32 %v2420, %v2354
    %v2425 = vmul.f32 %v2421, %v2363
    %v2426 = vadd.f32 %v2424, %v2425
    %v2427 = vmul.f32 %v2422, %v2371
    %v2428 = vadd.f32 %v2426, %v2427
    %s2429 = scalar_lea.vmem [#allocation9], 608
    %2430 = vst [vmem:[%s2429] sm:$0xff] %v2428
    %v2431 = vmul.f32 %v2420, %v2358
    %v2432 = vmul.f32 %v2421, %v2366
    %v2433 = vadd.f32 %v2431, %v2432
    %v2434 = vmul.f32 %v2422, %v2372
    %v2435 = vadd.f32 %v2433, %v2434
    %s2436 = scalar_lea.vmem [#allocation9], 616
    %2437 = vst [vmem:[%s2436] sm:$0xff] %v2435
    %v2438 = vmul.f32 %v2420, %v2362
    %v2439 = vmul.f32 %v2421, %v2370
    %v2440 = vadd.f32 %v2438, %v2439
    %v2441 = vmul.f32 %v2422, %v2375
    %v2442 = vadd.f32 %v2440, %v2441
    %s2443 = scalar_lea.vmem [#allocation9], 624
    %2444 = vst [vmem:[%s2443] sm:$0xff] %v2442
    %v2445 = vmul.f32 %v2420, %v2380
    %v2446 = vmul.f32 %v2421, %v2383
    %v2447 = vadd.f32 %v2445, %v2446
    %v2448 = vmul.f32 %v2422, %v2386
    %v2449 = vadd.f32 %v2447, %v2448
    %v2450 = vadd.f32 %v2449, %v2423
    %s2451 = scalar_lea.vmem [#allocation9], 632
    %2452 = vst [vmem:[%s2451] sm:$0xff] %v2450
    %v2453 = vld [vmem:[%s2103] sm:$0xff]
    %v2454 = vld [vmem:[%s2110] sm:$0xff]
    %v2455 = vld [vmem:[%s2117] sm:$0xff]
    %v2456 = vld [vmem:[%s2125] sm:$0xff]
    %v2457 = vmul.f32 %v2453, %v2354
    %v2458 = vmul.f32 %v2454, %v2363
    %v2459 = vadd.f32 %v2457, %v2458
    %v2460 = vmul.f32 %v2455, %v2371
    %v2461 = vadd.f32 %v2459, %v2460
    %s2462 = scalar_lea.vmem [#allocation9], 640
    %2463 = vst [vmem:[%s2462] sm:$0xff] %v2461
    %v2464 = vmul.f32 %v2453, %v2358
    %v2465 = vmul.f32 %v2454, %v2366
    %v2466 = vadd.f32 %v2464, %v2465
    %v2467 = vmul.f32 %v2455, %v2372
    %v2468 = vadd.f32 %v2466, %v2467
    %s2469 = scalar_lea.vmem [#allocation9], 648
    %2470 = vst [vmem:[%s2469] sm:$0xff] %v2468
    %v2471 = vmul.f32 %v2453, %v2362
    %v2472 = vmul.f32 %v2454, %v2370
    %v2473 = vadd.f32 %v2471, %v2472
    %v2474 = vmul.f32 %v2455, %v2375
    %v2475 = vadd.f32 %v2473, %v2474
    %s2476 = scalar_lea.vmem [#allocation9], 656
    %2477 = vst [vmem:[%s2476] sm:$0xff] %v2475
    %v2478 = vmul.f32 %v2453, %v2380
    %v2479 = vmul.f32 %v2454, %v2383
    %v2480 = vadd.f32 %v2478, %v2479
    %v2481 = vmul.f32 %v2455, %v2386
    %v2482 = vadd.f32 %v2480, %v2481
    %v2483 = vadd.f32 %v2482, %v2456
    %s2484 = scalar_lea.vmem [#allocation9], 664
    %2485 = vst [vmem:[%s2484] sm:$0xff] %v2483
    %s2486 = scalar_lea.vmem [#allocation2], 168
    %v2487 = vld [vmem:[%s2486] sm:$0xff]
    %s2488 = scalar_lea.vmem [#allocation2], 176
    %v2489 = vld [vmem:[%s2488] sm:$0xff]
    %s2490 = scalar_lea.vmem [#allocation2], 184
    %v2491 = vld [vmem:[%s2490] sm:$0xff]
    %v2492 = vmul.f32 %v2487, %v2487
    %v2493 = vmul.f32 %v2489, %v2489
    %v2494 = vadd.f32 %v2492, %v2493
    %v2495 = vmul.f32 %v2491, %v2491
    %v2496 = vadd.f32 %v2494, %v2495
    %v2497 = vadd.f32 %v2496, 1e-12
    %v2498 = vrsqrt.pop %v2497
    %v2499 = vmul.f32 %v2497, %v2498
    %v2500 = vand.u32 2147483647, %v2499
    %vm2501 = vcmp.le.f32.partialorder %v2500, 0.7853982
    %vm2502 = vcmp.lt.s32.totalorder %v2499, 0
    %v2503 = vand.u32 %v2499, 2139095040
    %v2504 = vshrl.u32 %v2503, 23
    %v2505 = vsub.s32 %v2504, 127
    %v2506 = vand.u32 2147483647, %v2499
    %v2507 = vand.u32 %v2506, 8388607
    %v2508 = vor.u32 %v2507, 8388608
    %v2509 = vsub.s32 0, %v2508
    %v2510 = vadd.s32 %v2505, 1
    %vm2511 = vcmp.gt.s32.totalorder %v2510, 0
    %v2512 = vsel %vm2511, %v2510, 0
    %v2513 = vshrl.u32 %v2512, 5
    %v2514 = vand.u32 %v2512, 31
    %v2515 = vsub.s32 32, %v2514
    %v2516 = vshrl.u32 683565275, %v2515
    %v2517 = vshll.u32 683565275, %v2514
    %v2518 = vshrl.u32 2475754826, %v2515
    %v2519 = vor.u32 %v2517, %v2518
    %v2520 = vshll.u32 2475754826, %v2514
    %v2521 = vshrl.u32 2131351028, %v2515
    %v2522 = vor.u32 %v2520, %v2521
    %v2523 = vshll.u32 2131351028, %v2514
    %v2524 = vshrl.u32 2102212464, %v2515
    %v2525 = vor.u32 %v2523, %v2524
    %v2526 = vshll.u32 2102212464, %v2514
    %v2527 = vshrl.u32 920167782, %v2515
    %v2528 = vor.u32 %v2526, %v2527
    %v2529 = vshll.u32 920167782, %v2514
    %v2530 = vshrl.u32 1326507024, %v2515
    %v2531 = vor.u32 %v2529, %v2530
    %vm2532 = vcmp.lt.s32.totalorder %v2513, 1
    %vm2533 = vcmp.lt.s32.totalorder %v2513, 2
    %vm2534 = vcmp.lt.s32.totalorder %v2513, 3
    %vm2535 = vcmp.lt.s32.totalorder %v2513, 4
    %v2536 = vsel %vm2532, %v2516, %v2519
    %v2537 = vsel %vm2535, %v2525, 2102212464
    %v2538 = vsel %vm2534, %v2522, %v2537
    %v2539 = vsel %vm2533, %v2536, %v2538
    %v2540 = vsel %vm2532, %v2519, %v2522
    %v2541 = vsel %vm2535, %v2528, 920167782
    %v2542 = vsel %vm2534, %v2525, %v2541
    %v2543 = vsel %vm2533, %v2540, %v2542
    %v2544 = vsel %vm2532, %v2522, %v2525
    %v2545 = vsel %vm2535, %v2531, 1326507024
    %v2546 = vsel %vm2534, %v2528, %v2545
    %v2547 = vsel %vm2533, %v2544, %v2546
    %v2548 = vshll.u32 %v2508, 8
    %v2549 = vmul.u32.u64.compose %v2548, %v2547
    %v2550 = vextract.low.u32 %v2549
    %v2551 = vextract.high.u32 %v2549
    %v2552 = vmul.u32.u64.compose %v2548, %v2543
    %v2553 = vextract.low.u32 %v2552
    %v2554 = vextract.high.u32 %v2552
    %v2555 = vmul.u32 %v2548, %v2539
    %v2556 = vadd.s32 %v2551, %v2553
    %vm2557 = vc.u32 %v2551, %v2553
    %v2558 = vadd.s32 %v2554, 1
    %v2559 = vsel %vm2557, %v2558, %v2554
    %v2560 = vadd.s32 %v2555, %v2559
    %v2561 = vadd.s32 %v2560, 536870912
    %v2562 = vshrl.u32 %v2561, 30
    %v2563 = vshll.u32 %v2562, 30
    %v2564 = vsub.s32 %v2560, %v2563
    %vm2565 = vcmp.lt.s32.totalorder %v2564, 0
    %v2566 = vsub.s32 0, %v2564
    %v2567 = vsel %vm2565, %v2566, %v2564
    %v2568 = vclz %v2567
    %v2569 = vsub.s32 %v2568, 2
    %vm2570 = vcmp.gt.s32.totalorder 0, %v2569
    %v2571 = vsel %vm2570, 0, %v2569
    %v2572 = vsub.s32 32, %v2571
    %v2573 = vshll.u32 %v2564, %v2571
    %v2574 = vshrl.u32 %v2556, %v2572
    %v2575 = vor.u32 %v2573, %v2574
    %v2576 = vsub.s32 4294967266, %v2571
    %v2577 = vadd.s32 %v2576, 127
    %v2578 = vshll.u32 %v2577, 23
    %v2579 = vor.u32 4788187, %v2578
    %v2580 = vand.u32 2147483647, %v2579
    %v2582 = vcvt.s32.f32 %v2575
    %v2583 = vmul.f32 %v2582, %v2580
    %v2584 = vxor.u32 %v2583, 2147483648
    %v2585 = vsel %vm2502, %v2584, %v2583
    %v2586 = vsub.s32 4, %v2562
    %v2587 = vsel %vm2502, %v2586, %v2562
    %v2588 = vsel %vm2501, %v2499, %v2585
    %v2589 = vsel %vm2501, 0, %v2587
    %v2590 = vcosq.f32.pop %v2588
    %v2591 = vsinq.f32.pop %v2588
    %vm2592 = vweird.f32 %v2499
    %v2593 = vadd.s32 %v2589, 3
    %v2594 = vand.u32 %v2593, 3
    %vm2595 = vcmp.lt.s32.totalorder %v2594, 2
    %vm2596 = vcmp.eq.s32.totalorder %v2594, 0
    %v2597 = vxor.u32 %v2591, 2147483648
    %v2598 = vsel %vm2596, %v2590, %v2597
    %vm2599 = vcmp.eq.s32.totalorder %v2594, 2
    %v2600 = vxor.u32 %v2590, 2147483648
    %v2601 = vsel %vm2599, %v2600, %v2591
    %v2602 = vsel %vm2595, %v2598, %v2601
    %v2603 = vsel %vm2592, nan, %v2602
    %v2604 = vand.u32 2147483647, %v2499
    %vm2605 = vcmp.le.f32.partialorder %v2604, 0.7853982
    %vm2606 = vcmp.lt.s32.totalorder %v2499, 0
    %v2607 = vand.u32 %v2499, 2139095040
    %v2608 = vshrl.u32 %v2607, 23
    %v2609 = vsub.s32 %v2608, 127
    %v2610 = vand.u32 2147483647, %v2499
    %v2611 = vand.u32 %v2610, 8388607
    %v2612 = vor.u32 %v2611, 8388608
    %v2613 = vsub.s32 0, %v2612
    %v2614 = vadd.s32 %v2609, 1
    %vm2615 = vcmp.gt.s32.totalorder %v2614, 0
    %v2616 = vsel %vm2615, %v2614, 0
    %v2617 = vshrl.u32 %v2616, 5
    %v2618 = vand.u32 %v2616, 31
    %v2619 = vsub.s32 32, %v2618
    %v2620 = vshrl.u32 683565275, %v2619
    %v2621 = vshll.u32 683565275, %v2618
    %v2622 = vshrl.u32 2475754826, %v2619
    %v2623 = vor.u32 %v2621, %v2622
    %v2624 = vshll.u32 2475754826, %v2618
    %v2625 = vshrl.u32 2131351028, %v2619
    %v2626 = vor.u32 %v2624, %v2625
    %v2627 = vshll.u32 2131351028, %v2618
    %v2628 = vshrl.u32 2102212464, %v2619
    %v2629 = vor.u32 %v2627, %v2628
    %v2630 = vshll.u32 2102212464, %v2618
    %v2631 = vshrl.u32 920167782, %v2619
    %v2632 = vor.u32 %v2630, %v2631
    %v2633 = vshll.u32 920167782, %v2618
    %v2634 = vshrl.u32 1326507024, %v2619
    %v2635 = vor.u32 %v2633, %v2634
    %vm2636 = vcmp.lt.s32.totalorder %v2617, 1
    %vm2637 = vcmp.lt.s32.totalorder %v2617, 2
    %vm2638 = vcmp.lt.s32.totalorder %v2617, 3
    %vm2639 = vcmp.lt.s32.totalorder %v2617, 4
    %v2640 = vsel %vm2636, %v2620, %v2623
    %v2641 = vsel %vm2639, %v2629, 2102212464
    %v2642 = vsel %vm2638, %v2626, %v2641
    %v2643 = vsel %vm2637, %v2640, %v2642
    %v2644 = vsel %vm2636, %v2623, %v2626
    %v2645 = vsel %vm2639, %v2632, 920167782
    %v2646 = vsel %vm2638, %v2629, %v2645
    %v2647 = vsel %vm2637, %v2644, %v2646
    %v2648 = vsel %vm2636, %v2626, %v2629
    %v2649 = vsel %vm2639, %v2635, 1326507024
    %v2650 = vsel %vm2638, %v2632, %v2649
    %v2651 = vsel %vm2637, %v2648, %v2650
    %v2652 = vshll.u32 %v2612, 8
    %v2653 = vmul.u32.u64.compose %v2652, %v2651
    %v2654 = vextract.low.u32 %v2653
    %v2655 = vextract.high.u32 %v2653
    %v2656 = vmul.u32.u64.compose %v2652, %v2647
    %v2657 = vextract.low.u32 %v2656
    %v2658 = vextract.high.u32 %v2656
    %v2659 = vmul.u32 %v2652, %v2643
    %v2660 = vadd.s32 %v2655, %v2657
    %vm2661 = vc.u32 %v2655, %v2657
    %v2662 = vadd.s32 %v2658, 1
    %v2663 = vsel %vm2661, %v2662, %v2658
    %v2664 = vadd.s32 %v2659, %v2663
    %v2665 = vadd.s32 %v2664, 536870912
    %v2666 = vshrl.u32 %v2665, 30
    %v2667 = vshll.u32 %v2666, 30
    %v2668 = vsub.s32 %v2664, %v2667
    %vm2669 = vcmp.lt.s32.totalorder %v2668, 0
    %v2670 = vsub.s32 0, %v2668
    %v2671 = vsel %vm2669, %v2670, %v2668
    %v2672 = vclz %v2671
    %v2673 = vsub.s32 %v2672, 2
    %vm2674 = vcmp.gt.s32.totalorder 0, %v2673
    %v2675 = vsel %vm2674, 0, %v2673
    %v2676 = vsub.s32 32, %v2675
    %v2677 = vshll.u32 %v2668, %v2675
    %v2678 = vshrl.u32 %v2660, %v2676
    %v2679 = vor.u32 %v2677, %v2678
    %v2680 = vsub.s32 4294967266, %v2675
    %v2681 = vadd.s32 %v2680, 127
    %v2682 = vshll.u32 %v2681, 23
    %v2683 = vor.u32 4788187, %v2682
    %v2684 = vand.u32 2147483647, %v2683
    %v2686 = vcvt.s32.f32 %v2679
    %v2687 = vmul.f32 %v2686, %v2684
    %v2688 = vxor.u32 %v2687, 2147483648
    %v2689 = vsel %vm2606, %v2688, %v2687
    %v2690 = vsub.s32 4, %v2666
    %v2691 = vsel %vm2606, %v2690, %v2666
    %v2692 = vsel %vm2605, %v2499, %v2689
    %v2693 = vsel %vm2605, 0, %v2691
    %v2694 = vcosq.f32.pop %v2692
    %v2695 = vsinq.f32.pop %v2692
    %vm2696 = vweird.f32 %v2499
    %v2697 = vand.u32 %v2693, 3
    %vm2698 = vcmp.lt.s32.totalorder %v2697, 2
    %vm2699 = vcmp.eq.s32.totalorder %v2697, 0
    %v2700 = vxor.u32 %v2695, 2147483648
    %v2701 = vsel %vm2699, %v2694, %v2700
    %vm2702 = vcmp.eq.s32.totalorder %v2697, 2
    %v2703 = vxor.u32 %v2694, 2147483648
    %v2704 = vsel %vm2702, %v2703, %v2695
    %v2705 = vsel %vm2698, %v2701, %v2704
    %v2706 = vsel %vm2696, nan, %v2705
    %v2707 = vsub.f32 1.0, %v2706
    %v2708 = vmul.f32 %v2487, %v2498
    %v2709 = vmul.f32 %v2489, %v2498
    %v2710 = vmul.f32 %v2491, %v2498
    %v2711 = vmul.f32 %v2708, %v2708
    %v2712 = vmul.f32 %v2711, %v2707
    %v2713 = vadd.f32 %v2706, %v2712
    %v2714 = vmul.f32 %v2708, %v2709
    %v2715 = vmul.f32 %v2714, %v2707
    %v2716 = vmul.f32 %v2710, %v2603
    %v2717 = vsub.f32 %v2715, %v2716
    %v2718 = vmul.f32 %v2708, %v2710
    %v2719 = vmul.f32 %v2718, %v2707
    %v2720 = vmul.f32 %v2709, %v2603
    %v2721 = vadd.f32 %v2719, %v2720
    %v2722 = vadd.f32 %v2715, %v2716
    %v2723 = vmul.f32 %v2709, %v2709
    %v2724 = vmul.f32 %v2723, %v2707
    %v2725 = vadd.f32 %v2706, %v2724
    %v2726 = vmul.f32 %v2709, %v2710
    %v2727 = vmul.f32 %v2726, %v2707
    %v2728 = vmul.f32 %v2708, %v2603
    %v2729 = vsub.f32 %v2727, %v2728
    %v2730 = vsub.f32 %v2719, %v2720
    %v2731 = vadd.f32 %v2727, %v2728
    %v2732 = vmul.f32 %v2710, %v2710
    %v2733 = vmul.f32 %v2732, %v2707
    %v2734 = vadd.f32 %v2706, %v2733
    %s2735 = scalar_lea.vmem [#allocation7], 48
    %v2736 = vld [vmem:[%s2735] sm:$0xff]
    %s2737 = sld [smem:[#allocation6 + $0x15]]
    %v2738 = vstv %s2737
    %v2739 = vmul.f32 %v2738, %v2736
    %s2740 = sld [smem:[#allocation6 + $0x16]]
    %v2741 = vstv %s2740
    %v2742 = vmul.f32 %v2741, %v2736
    %s2743 = sld [smem:[#allocation6 + $0x17]]
    %v2744 = vstv %s2743
    %v2745 = vmul.f32 %v2744, %v2736
    %v2746 = vld [vmem:[#allocation9] sm:$0xff]
    %v2747 = vld [vmem:[%s305] sm:$0xff]
    %v2748 = vld [vmem:[%s307] sm:$0xff]
    %v2749 = vld [vmem:[%s311] sm:$0xff]
    %v2750 = vmul.f32 %v2746, %v2713
    %v2751 = vmul.f32 %v2747, %v2722
    %v2752 = vadd.f32 %v2750, %v2751
    %v2753 = vmul.f32 %v2748, %v2730
    %v2754 = vadd.f32 %v2752, %v2753
    %s2755 = scalar_lea.vmem [#allocation9], 672
    %2756 = vst [vmem:[%s2755] sm:$0xff] %v2754
    %v2757 = vmul.f32 %v2746, %v2717
    %v2758 = vmul.f32 %v2747, %v2725
    %v2759 = vadd.f32 %v2757, %v2758
    %v2760 = vmul.f32 %v2748, %v2731
    %v2761 = vadd.f32 %v2759, %v2760
    %s2762 = scalar_lea.vmem [#allocation9], 680
    %2763 = vst [vmem:[%s2762] sm:$0xff] %v2761
    %v2764 = vmul.f32 %v2746, %v2721
    %v2765 = vmul.f32 %v2747, %v2729
    %v2766 = vadd.f32 %v2764, %v2765
    %v2767 = vmul.f32 %v2748, %v2734
    %v2768 = vadd.f32 %v2766, %v2767
    %s2769 = scalar_lea.vmem [#allocation9], 688
    %2770 = vst [vmem:[%s2769] sm:$0xff] %v2768
    %v2771 = vmul.f32 %v2746, %v2739
    %v2772 = vmul.f32 %v2747, %v2742
    %v2773 = vadd.f32 %v2771, %v2772
    %v2774 = vmul.f32 %v2748, %v2745
    %v2775 = vadd.f32 %v2773, %v2774
    %v2776 = vadd.f32 %v2775, %v2749
    %s2777 = scalar_lea.vmem [#allocation9], 696
    %2778 = vst [vmem:[%s2777] sm:$0xff] %v2776
    %v2779 = vld [vmem:[%s313] sm:$0xff]
    %v2780 = vld [vmem:[%s315] sm:$0xff]
    %v2781 = vld [vmem:[%s317] sm:$0xff]
    %v2782 = vld [vmem:[%s321] sm:$0xff]
    %v2783 = vmul.f32 %v2779, %v2713
    %v2784 = vmul.f32 %v2780, %v2722
    %v2785 = vadd.f32 %v2783, %v2784
    %v2786 = vmul.f32 %v2781, %v2730
    %v2787 = vadd.f32 %v2785, %v2786
    %s2788 = scalar_lea.vmem [#allocation9], 704
    %2789 = vst [vmem:[%s2788] sm:$0xff] %v2787
    %v2790 = vmul.f32 %v2779, %v2717
    %v2791 = vmul.f32 %v2780, %v2725
    %v2792 = vadd.f32 %v2790, %v2791
    %v2793 = vmul.f32 %v2781, %v2731
    %v2794 = vadd.f32 %v2792, %v2793
    %s2795 = scalar_lea.vmem [#allocation9], 712
    %2796 = vst [vmem:[%s2795] sm:$0xff] %v2794
    %v2797 = vmul.f32 %v2779, %v2721
    %v2798 = vmul.f32 %v2780, %v2729
    %v2799 = vadd.f32 %v2797, %v2798
    %v2800 = vmul.f32 %v2781, %v2734
    %v2801 = vadd.f32 %v2799, %v2800
    %s2802 = scalar_lea.vmem [#allocation9], 720
    %2803 = vst [vmem:[%s2802] sm:$0xff] %v2801
    %v2804 = vmul.f32 %v2779, %v2739
    %v2805 = vmul.f32 %v2780, %v2742
    %v2806 = vadd.f32 %v2804, %v2805
    %v2807 = vmul.f32 %v2781, %v2745
    %v2808 = vadd.f32 %v2806, %v2807
    %v2809 = vadd.f32 %v2808, %v2782
    %s2810 = scalar_lea.vmem [#allocation9], 728
    %2811 = vst [vmem:[%s2810] sm:$0xff] %v2809
    %v2812 = vld [vmem:[%s323] sm:$0xff]
    %v2813 = vld [vmem:[%s325] sm:$0xff]
    %v2814 = vld [vmem:[%s327] sm:$0xff]
    %v2815 = vld [vmem:[%s331] sm:$0xff]
    %v2816 = vmul.f32 %v2812, %v2713
    %v2817 = vmul.f32 %v2813, %v2722
    %v2818 = vadd.f32 %v2816, %v2817
    %v2819 = vmul.f32 %v2814, %v2730
    %v2820 = vadd.f32 %v2818, %v2819
    %s2821 = scalar_lea.vmem [#allocation9], 736
    %2822 = vst [vmem:[%s2821] sm:$0xff] %v2820
    %v2823 = vmul.f32 %v2812, %v2717
    %v2824 = vmul.f32 %v2813, %v2725
    %v2825 = vadd.f32 %v2823, %v2824
    %v2826 = vmul.f32 %v2814, %v2731
    %v2827 = vadd.f32 %v2825, %v2826
    %s2828 = scalar_lea.vmem [#allocation9], 744
    %2829 = vst [vmem:[%s2828] sm:$0xff] %v2827
    %v2830 = vmul.f32 %v2812, %v2721
    %v2831 = vmul.f32 %v2813, %v2729
    %v2832 = vadd.f32 %v2830, %v2831
    %v2833 = vmul.f32 %v2814, %v2734
    %v2834 = vadd.f32 %v2832, %v2833
    %s2835 = scalar_lea.vmem [#allocation9], 752
    %2836 = vst [vmem:[%s2835] sm:$0xff] %v2834
    %v2837 = vmul.f32 %v2812, %v2739
    %v2838 = vmul.f32 %v2813, %v2742
    %v2839 = vadd.f32 %v2837, %v2838
    %v2840 = vmul.f32 %v2814, %v2745
    %v2841 = vadd.f32 %v2839, %v2840
    %v2842 = vadd.f32 %v2841, %v2815
    %s2843 = scalar_lea.vmem [#allocation9], 760
    %2844 = vst [vmem:[%s2843] sm:$0xff] %v2842
    // Predicated region
    $region26: #{tpu_custom_call.1} parent=1 // pred_check
      _
    $region27: #{tpu_custom_call.1} parent=1 // pred_check_branch
      %2846 = sbr.rel (0) target = $region29
    $region28: #{tpu_custom_call.1} parent=1 // pred_region
      %s2848 = ssub.s32 12288, 12288
      %2849 = vsyncadd [#allocation4], %s2848
      %s2850 = sshll.u32 [#allocation9], 4
      %s2851 = int_to_ptr.vmem [resolvable:$true] %s2850
      %2856 = dma.vmem_to_hbm [thread:$0]  %s2851, 12288, %s3, [#allocation4], 128, 128, 8
    $region29: #{tpu_custom_call.1} parent=1 // pred_fallthru
      _
    // Predicated region
    $region30: #{tpu_custom_call.1} parent=1 // pred_check
      _
    $region31: #{tpu_custom_call.1} parent=1 // pred_check_branch
      %2858 = sbr.rel (0) target = $region33
    $region32: #{tpu_custom_call.1} parent=1 // pred_region
      %2859 = dma.done [#allocation4], 12288
    $region33: #{tpu_custom_call.1} parent=1 // pred_fallthru
      _
    %2860 = vsyncpa [#allocation3], 1
    %2861 = vsyncpa [#allocation8], 1
    %2862 = vsyncpa [#allocation4], 1
    %2863 = vsyncpa [#allocation5], 1

</llo_original>
